<compile_context>
chip_gen: v5e
topology: v5e:2x2
jax: 0.10.0
libtpu: 0.0.40
codegen_flags: <defaults>
</compile_context>

<pallas_src>
import numpy as np
import jax
import jax.numpy as jnp
from jax import lax
from jax.experimental import pallas as pl
from jax.experimental.pallas import tpu as pltpu


# ----------------------------------------------------------------------------
# parameter-setup glue (plain numpy / JAX)
# ----------------------------------------------------------------------------
def gaussian_kernel_np(size: int, sigma: float) -> np.ndarray:
    """Matches torch gaussian_kernel(size, sigma) exactly.

    torch uses `-size // 2 + 1.0` which is `(-size) // 2 + 1.0`, so for size=3
    the coords are [-1, 0, 1] and the kernel is 3x3.
    """
    start = (-size) // 2 + 1.0
    stop = size // 2 + 1.0
    coords = np.arange(start, stop, dtype=np.float64)
    xx, yy = np.meshgrid(coords, coords, indexing="ij")
    k = np.exp(-(xx ** 2 + yy ** 2) / (2.0 * sigma ** 2))
    k = (k / k.sum()).astype(np.float32)
    assert k.shape == (size, size), k.shape
    return k


def blur_matrix(gk: np.ndarray, H: int, W: int) -> np.ndarray:
    """(N, N) matrix s.t. (Bmat @ f)[h*W+w] == conv2d(f, gk, pad=ks//2)[h, w]."""
    ks = gk.shape[0]
    pad = ks // 2
    N = H * W
    Bmat = np.zeros((N, N), np.float32)
    for h in range(H):
        for w in range(W):
            for i in range(ks):
                for j in range(ks):
                    hh, ww = h + i - pad, w + j - pad
                    if 0 <= hh < H and 0 <= ww < W:
                        Bmat[h * W + w, hh * W + ww] += gk[i, j]
    return Bmat


# ----------------------------------------------------------------------------
# Pallas kernel: ALL layers of TransformerPMS for a tile of `bt` batch rows
# ----------------------------------------------------------------------------
def make_transformer_kernel(bt: int, N: int, dim: int, heads: int,
                            dim_head: int, depth: int, scale: float,
                            tau: float):
    inner = heads * dim_head
    M = bt * N

    def kernel(x_ref, gamma_ref, beta_ref, wqkv_ref, wo_ref, wff_ref,
               bff_ref, blur_ref, out_ref):
        f32 = jnp.float32
        x3 = x_ref[...].astype(f32)                        # (bt, N, dim)

        # ---- loop-invariants, hoisted out of the depth loop ---------------
        blur_b = jnp.broadcast_to(blur_ref[...], (bt, N, N))
        lane = lax.broadcasted_iota(jnp.int32, (1, 1, inner), 2)
        head_masks = [
            jnp.logical_and(lane >= h * dim_head,
                            lane < (h + 1) * dim_head).astype(f32)
            for h in range(heads)]

        def pms(x_cur, g3):
            # conv(grad) == blur(channel-sum) broadcast over channels, since
            # every (out_ch, in_ch) filter of the PyTorch conv is the same
            # Gaussian.  ONE batched blur einsum (no per-batch loop/concat).
            rowsum = jnp.sum(g3, axis=-1, keepdims=True)            # (bt,N,1)
            s = jnp.einsum('bnm,bmk->bnk', blur_b, rowsum,
                           preferred_element_type=f32)              # (bt,N,1)
            return tau * jnp.exp(-(s * s)) * g3 + x_cur

        for l in range(depth):                    # static unroll over layers
            # ---- Attention: LayerNorm (eps=1e-5, affine) ------------------
            mu = jnp.mean(x3, axis=-1, keepdims=True)
            xc = x3 - mu
            var = jnp.mean(xc * xc, axis=-1, keepdims=True)
            xn = xc * lax.rsqrt(var + 1e-5) * gamma_ref[l] + beta_ref[l]

            # ---- fused q|k|v projection: ONE (M,dim)@(dim,3*inner) matmul --
            qkv = jnp.dot(xn.reshape(M, dim), wqkv_ref[l],
                          preferred_element_type=f32)       # (M, 3*inner)
            qkv3 = qkv.reshape(bt, N, 3 * inner)
            q3 = qkv3[:, :, 0:inner]
            k3 = qkv3[:, :, inner:2 * inner]
            v3 = qkv3[:, :, 2 * inner:3 * inner]

            # ---- multi-head attention via lane masks (no slices/concats) --
            out3 = jnp.zeros((bt, N, inner), f32)
            for h in range(heads):
                mh = head_masks[h]
                sh = jnp.einsum('bni,bmi->bnm', q3 * mh, k3,
                                preferred_element_type=f32) * scale
                sh = sh - jnp.max(sh, axis=-1, keepdims=True)
                e = jnp.exp(sh)
                denom = jnp.sum(e, axis=-1, keepdims=True)
                attn = e * pl.reciprocal(denom, approx=True)  # EUP, not VALU
                out3 = out3 + mh * jnp.einsum('bnm,bmi->bni', attn, v3,
                                              preferred_element_type=f32)

            # ---- hoisted output projection: ONE (M,inner)@(inner,dim) ------
            grad = jnp.dot(out3.reshape(M, inner), wo_ref[l],
                           preferred_element_type=f32).reshape(bt, N, dim)
            x3 = pms(x3, grad)

            # ---- feed-forward Linear(dim, dim) + bias, then PMS update 2 ---
            g2 = (jnp.dot(x3.reshape(M, dim), wff_ref[l],
                          preferred_element_type=f32)
                  + bff_ref[l]).reshape(bt, N, dim)
            x3 = pms(x3, g2)

        out_ref[...] = x3

    return kernel


def transformer_pms_forward(x, layers, blur, *, heads, dim_head, tau,
                            batch_tile=None):
    """x: (B, N, dim); layers: list of per-layer param tuples; blur: (N, N)."""
    B, N, dim = x.shape
    depth = len(layers)
    inner = heads * dim_head

    # Stack per-layer weights along a leading depth axis so ALL layers run in
    # one pallas_call (weights stay resident in VMEM across the whole call).
    gammas = jnp.stack([lp[0] for lp in layers]).reshape(depth, 1, dim)
    betas = jnp.stack([lp[1] for lp in layers]).reshape(depth, 1, dim)
    wqkv = jnp.stack([jnp.concatenate([lp[2], lp[3], lp[4]], axis=1)
                      for lp in layers])                  # (depth, dim, 3*inner)
    wo = jnp.stack([lp[5] for lp in layers])              # (depth, inner, dim)
    wff = jnp.stack([lp[6] for lp in layers])             # (depth, dim, dim)
    bff = jnp.stack([lp[7] for lp in layers]).reshape(depth, 1, dim)

    # Fold the whole (small) batch into one block by default; on v7x pass
    # batch_tile=B//2 so both TensorCores get a grid step.
    bt = B if batch_tile is None else batch_tile
    assert B % bt == 0, (B, bt)

    scale = float(dim_head) ** -0.5
    kernel = make_transformer_kernel(bt, N, dim, heads, dim_head, depth,
                                     scale, tau)

    def full(shape):
        # grid-invariant, fully-resident operand
        return pl.BlockSpec(shape, lambda i, _s=shape: tuple(0 for _ in _s))

    grid_spec = pltpu.PrefetchScalarGridSpec(
        num_scalar_prefetch=0,
        grid=(B // bt,),
        in_specs=[
            pl.BlockSpec((bt, N, dim), lambda i: (i, 0, 0)),      # x
            full((depth, 1, dim)), full((depth, 1, dim)),         # gamma, beta
            full((depth, dim, 3 * inner)),                        # Wqkv^T
            full((depth, inner, dim)),                            # Wo^T
            full((depth, dim, dim)), full((depth, 1, dim)),       # Wff^T, bff
            full((N, N)),                                         # blur matrix
        ],
        out_specs=pl.BlockSpec((bt, N, dim), lambda i: (i, 0, 0)),
    )
    return pl.pallas_call(
        kernel,
        out_shape=jax.ShapeDtypeStruct((B, N, dim), jnp.float32),
        grid_spec=grid_spec,
        compiler_params=pltpu.CompilerParams(
            dimension_semantics=("parallel",),
            vmem_limit_bytes=32 * 1024 * 1024),
    )(x, gammas, betas, wqkv, wo, wff, bff, blur)


# ----------------------------------------------------------------------------
# pure-JAX reference (uses the literal dense (C,C,3,3) conv like PyTorch)
# ----------------------------------------------------------------------------
def ref_forward(x, layers, gk, H, W, *, heads, dim_head, tau):
    hp = lax.Precision.HIGHEST
    b, N, dim = x.shape
    inner = heads * dim_head
    scale = float(dim_head) ** -0.5
    conv_k = jnp.broadcast_to(jnp.asarray(gk), (inner, dim, 3, 3))

    def pms_update(x, grad):
        inp = grad.reshape(b, H, W, dim).transpose(0, 3, 1, 2)       # NCHW
        s = lax.conv_general_dilated(inp, conv_k, (1, 1), ((1, 1), (1, 1)),
                                     dimension_numbers=("NCHW", "OIHW", "NCHW"),
                                     precision=hp)
        sgrad = s.transpose(0, 2, 3, 1).reshape(b, N, dim)
        return tau * jnp.exp(-sgrad ** 2) * grad + x

    for (gamma, beta, wqT, wkT, wvT, woT, wffT, bff) in layers:
        mu = x.mean(-1, keepdims=True)
        var = ((x - mu) ** 2).mean(-1, keepdims=True)
        xn = (x - mu) * lax.rsqrt(var + 1e-5) * gamma + beta
        q = jnp.dot(xn, wqT, precision=hp)
        k = jnp.dot(xn, wkT, precision=hp)
        v = jnp.dot(xn, wvT, precision=hp)
        split = lambda t: t.reshape(b, N, heads, dim_head).transpose(0, 2, 1, 3)
        qh, kh, vh = split(q), split(k), split(v)
        dots = jnp.einsum("bhnd,bhmd->bhnm", qh, kh, precision=hp) * scale
        dots = dots - dots.max(-1, keepdims=True)
        e = jnp.exp(dots)
        attn = e / e.sum(-1, keepdims=True)
        out = jnp.einsum("bhnm,bhmd->bhnd", attn, vh, precision=hp)
        out = out.transpose(0, 2, 1, 3).reshape(b, N, inner)
        x = pms_update(x, jnp.dot(out, woT, precision=hp))
        x = pms_update(x, jnp.dot(x, wffT, precision=hp) + bff)
    return x


# ----------------------------------------------------------------------------
if __name__ == "__main__":
    B, H, W = 2, 4, 4
    N = H * W
    heads, dim_head = 4, 8
    dim = heads * dim_head   # conv kernel shape requires dim == heads * dim_head
    depth = 2
    tau = 0.5

    key = jax.random.PRNGKey(0)
    key, xk = jax.random.split(key)
    x = jax.random.normal(xk, (B, N, dim), jnp.float32)

    layers = []
    for _ in range(depth):
        key, *ks = jax.random.split(key, 7)
        gamma = jnp.ones((dim,), jnp.float32)
        beta = jnp.zeros((dim,), jnp.float32)
        wqT = 0.05 * jax.random.normal(ks[0], (dim, heads * dim_head), jnp.float32)
        wkT = 0.05 * jax.random.normal(ks[1], (dim, heads * dim_head), jnp.float32)
        wvT = 0.05 * jax.random.normal(ks[2], (dim, heads * dim_head), jnp.float32)
        woT = 0.05 * jax.random.normal(ks[3], (heads * dim_head, dim), jnp.float32)
        wffT = 0.05 * jax.random.normal(ks[4], (dim, dim), jnp.float32)
        bff = 0.05 * jax.random.normal(ks[5], (dim,), jnp.float32)
        layers.append((gamma, beta, wqT, wkT, wvT, woT, wffT, bff))

    # sigma=0.1 is the module's default (blur ~= identity); sigma=1.0 gives the
    # blur/PMS path real coverage (per the review's correctness concern).
    for sigma in (0.1, 1.0):
        gk = gaussian_kernel_np(3, sigma)
        blur = jnp.asarray(blur_matrix(gk, H, W))

        out = jax.block_until_ready(
            transformer_pms_forward(x, layers, blur,
                                    heads=heads, dim_head=dim_head, tau=tau))
        ref = jax.block_until_ready(
            ref_forward(x, layers, gk, H, W,
                        heads=heads, dim_head=dim_head, tau=tau))

        assert out.shape == (B, N, dim)
        err = float(jnp.max(jnp.abs(out - ref)))
        if not np.isfinite(err) or err > 1e-3:
            raise AssertionError(
                f"sigma={sigma}: mismatch vs reference, max abs err {err}")

    print("KERNEL_OK")
</pallas_src>

<mosaic_0001>
module attributes {stable_mosaic.version = 11 : i64} {
  func.func @kernel(%arg0: i32, %arg1: memref<2x16x32xf32, #tpu.memory_space<vmem>>, %arg2: memref<2x1x32xf32, #tpu.memory_space<vmem>>, %arg3: memref<2x1x32xf32, #tpu.memory_space<vmem>>, %arg4: memref<2x32x96xf32, #tpu.memory_space<vmem>>, %arg5: memref<2x32x32xf32, #tpu.memory_space<vmem>>, %arg6: memref<2x32x32xf32, #tpu.memory_space<vmem>>, %arg7: memref<2x1x32xf32, #tpu.memory_space<vmem>>, %arg8: memref<16x16xf32, #tpu.memory_space<vmem>>, %arg9: memref<2x16x32xf32, #tpu.memory_space<vmem>>) attributes {dimension_semantics = [#tpu.dimension_semantics<parallel>], iteration_bounds = array<i64: 1>, scalar_prefetch = 0 : i64, scratch_operands = 0 : i64, tpu.core_type = #tpu.core_type<tc>, window_params = [{transform_indices = @transform_0, window_bounds = array<i64: 2, 16, 32>}, {pipeline_mode = #tpu.pipeline_mode<synchronous>, transform_indices = @transform_1, window_bounds = array<i64: 2, 1, 32>}, {pipeline_mode = #tpu.pipeline_mode<synchronous>, transform_indices = @transform_2, window_bounds = array<i64: 2, 1, 32>}, {pipeline_mode = #tpu.pipeline_mode<synchronous>, transform_indices = @transform_3, window_bounds = array<i64: 2, 32, 96>}, {pipeline_mode = #tpu.pipeline_mode<synchronous>, transform_indices = @transform_4, window_bounds = array<i64: 2, 32, 32>}, {pipeline_mode = #tpu.pipeline_mode<synchronous>, transform_indices = @transform_5, window_bounds = array<i64: 2, 32, 32>}, {pipeline_mode = #tpu.pipeline_mode<synchronous>, transform_indices = @transform_6, window_bounds = array<i64: 2, 1, 32>}, {pipeline_mode = #tpu.pipeline_mode<synchronous>, transform_indices = @transform_7, window_bounds = array<i64: 16, 16>}, {transform_indices = @transform_8, window_bounds = array<i64: 2, 16, 32>}]} {
    %c0 = arith.constant 0 : index
    %c0_0 = arith.constant 0 : index
    %c0_1 = arith.constant 0 : index
    %0 = vector.load %arg1[%c0, %c0_0, %c0_1] : memref<2x16x32xf32, #tpu.memory_space<vmem>>, vector<2x16x32xf32>
    %c0_2 = arith.constant 0 : index
    %c0_3 = arith.constant 0 : index
    %1 = vector.load %arg8[%c0_2, %c0_3] : memref<16x16xf32, #tpu.memory_space<vmem>>, vector<16x16xf32>
    %2 = vector.shape_cast %1 : vector<16x16xf32> to vector<1x16x16xf32>
    %3 = vector.broadcast %2 : vector<1x16x16xf32> to vector<2x16x16xf32>
    %4 = tpu.iota {dimensions = array<i32: 2>} : vector<1x1x32xi32>
    %c0_i32 = arith.constant 0 : i32
    %5 = vector.broadcast %c0_i32 : i32 to vector<1x1x32xi32>
    %6 = arith.cmpi sge, %4, %5 : vector<1x1x32xi32>
    %c8_i32 = arith.constant 8 : i32
    %7 = vector.broadcast %c8_i32 : i32 to vector<1x1x32xi32>
    %8 = arith.cmpi slt, %4, %7 : vector<1x1x32xi32>
    %9 = arith.andi %6, %8 : vector<1x1x32xi1>
    %10 = arith.extui %9 : vector<1x1x32xi1> to vector<1x1x32xi32>
    %11 = arith.sitofp %10 : vector<1x1x32xi32> to vector<1x1x32xf32>
    %c8_i32_4 = arith.constant 8 : i32
    %12 = vector.broadcast %c8_i32_4 : i32 to vector<1x1x32xi32>
    %13 = arith.cmpi sge, %4, %12 : vector<1x1x32xi32>
    %c16_i32 = arith.constant 16 : i32
    %14 = vector.broadcast %c16_i32 : i32 to vector<1x1x32xi32>
    %15 = arith.cmpi slt, %4, %14 : vector<1x1x32xi32>
    %16 = arith.andi %13, %15 : vector<1x1x32xi1>
    %17 = arith.extui %16 : vector<1x1x32xi1> to vector<1x1x32xi32>
    %18 = arith.sitofp %17 : vector<1x1x32xi32> to vector<1x1x32xf32>
    %c16_i32_5 = arith.constant 16 : i32
    %19 = vector.broadcast %c16_i32_5 : i32 to vector<1x1x32xi32>
    %20 = arith.cmpi sge, %4, %19 : vector<1x1x32xi32>
    %c24_i32 = arith.constant 24 : i32
    %21 = vector.broadcast %c24_i32 : i32 to vector<1x1x32xi32>
    %22 = arith.cmpi slt, %4, %21 : vector<1x1x32xi32>
    %23 = arith.andi %20, %22 : vector<1x1x32xi1>
    %24 = arith.extui %23 : vector<1x1x32xi1> to vector<1x1x32xi32>
    %25 = arith.sitofp %24 : vector<1x1x32xi32> to vector<1x1x32xf32>
    %c24_i32_6 = arith.constant 24 : i32
    %26 = vector.broadcast %c24_i32_6 : i32 to vector<1x1x32xi32>
    %27 = arith.cmpi sge, %4, %26 : vector<1x1x32xi32>
    %c32_i32 = arith.constant 32 : i32
    %28 = vector.broadcast %c32_i32 : i32 to vector<1x1x32xi32>
    %29 = arith.cmpi slt, %4, %28 : vector<1x1x32xi32>
    %30 = arith.andi %27, %29 : vector<1x1x32xi1>
    %31 = arith.extui %30 : vector<1x1x32xi1> to vector<1x1x32xi32>
    %32 = arith.sitofp %31 : vector<1x1x32xi32> to vector<1x1x32xf32>
    %cst = arith.constant dense<0.000000e+00> : vector<2x16xf32>
    %33 = vector.multi_reduction <add>, %0, %cst [2] : vector<2x16x32xf32> to vector<2x16xf32>
    %34 = vector.shape_cast %33 : vector<2x16xf32> to vector<2x16x1xf32>
    %cst_7 = arith.constant 3.200000e+01 : f32
    %35 = vector.broadcast %cst_7 : f32 to vector<2x16x1xf32>
    %36 = arith.divf %34, %35 : vector<2x16x1xf32>
    %37 = vector.broadcast %36 : vector<2x16x1xf32> to vector<2x16x32xf32>
    %38 = arith.subf %0, %37 : vector<2x16x32xf32>
    %39 = arith.mulf %38, %38 : vector<2x16x32xf32>
    %cst_8 = arith.constant dense<0.000000e+00> : vector<2x16xf32>
    %40 = vector.multi_reduction <add>, %39, %cst_8 [2] : vector<2x16x32xf32> to vector<2x16xf32>
    %41 = vector.shape_cast %40 : vector<2x16xf32> to vector<2x16x1xf32>
    %cst_9 = arith.constant 3.200000e+01 : f32
    %42 = vector.broadcast %cst_9 : f32 to vector<2x16x1xf32>
    %43 = arith.divf %41, %42 : vector<2x16x1xf32>
    %cst_10 = arith.constant 9.99999974E-6 : f32
    %44 = vector.broadcast %cst_10 : f32 to vector<2x16x1xf32>
    %45 = arith.addf %43, %44 : vector<2x16x1xf32>
    %46 = math.rsqrt %45 : vector<2x16x1xf32>
    %47 = vector.broadcast %46 : vector<2x16x1xf32> to vector<2x16x32xf32>
    %48 = arith.mulf %38, %47 : vector<2x16x32xf32>
    %c0_11 = arith.constant 0 : index
    %c0_12 = arith.constant 0 : index
    %c0_13 = arith.constant 0 : index
    %49 = vector.load %arg2[%c0_11, %c0_12, %c0_13] : memref<2x1x32xf32, #tpu.memory_space<vmem>>, vector<1x1x32xf32>
    %50 = vector.shape_cast %49 : vector<1x1x32xf32> to vector<1x32xf32>
    %51 = vector.shape_cast %50 : vector<1x32xf32> to vector<1x1x32xf32>
    %52 = vector.broadcast %51 : vector<1x1x32xf32> to vector<2x16x32xf32>
    %53 = arith.mulf %48, %52 : vector<2x16x32xf32>
    %c0_14 = arith.constant 0 : index
    %c0_15 = arith.constant 0 : index
    %c0_16 = arith.constant 0 : index
    %54 = vector.load %arg3[%c0_14, %c0_15, %c0_16] : memref<2x1x32xf32, #tpu.memory_space<vmem>>, vector<1x1x32xf32>
    %55 = vector.shape_cast %54 : vector<1x1x32xf32> to vector<1x32xf32>
    %56 = vector.shape_cast %55 : vector<1x32xf32> to vector<1x1x32xf32>
    %57 = vector.broadcast %56 : vector<1x1x32xf32> to vector<2x16x32xf32>
    %58 = arith.addf %53, %57 : vector<2x16x32xf32>
    %59 = vector.shape_cast %58 : vector<2x16x32xf32> to vector<32x32xf32>
    %c0_17 = arith.constant 0 : index
    %c0_18 = arith.constant 0 : index
    %c0_19 = arith.constant 0 : index
    %60 = vector.load %arg4[%c0_17, %c0_18, %c0_19] : memref<2x32x96xf32, #tpu.memory_space<vmem>>, vector<1x32x96xf32>
    %61 = vector.shape_cast %60 : vector<1x32x96xf32> to vector<32x96xf32>
    %cst_20 = arith.constant dense<0.000000e+00> : vector<32x96xf32>
    %62 = tpu.matmul %59, %61, %cst_20 {dimension_numbers = #tpu.dot_dimension_numbers<[1], [0], [0], [1], [0, 0, 1, 1], [], []>} : vector<32x32xf32>, vector<32x96xf32>, vector<32x96xf32> -> vector<32x96xf32>
    %63 = vector.shape_cast %62 : vector<32x96xf32> to vector<2x16x96xf32>
    %64 = vector.extract_strided_slice %63 {offsets = [0, 0, 0], sizes = [2, 16, 32], strides = [1, 1, 1]} : vector<2x16x96xf32> to vector<2x16x32xf32>
    %65 = vector.extract_strided_slice %63 {offsets = [0, 0, 32], sizes = [2, 16, 32], strides = [1, 1, 1]} : vector<2x16x96xf32> to vector<2x16x32xf32>
    %66 = vector.extract_strided_slice %63 {offsets = [0, 0, 64], sizes = [2, 16, 32], strides = [1, 1, 1]} : vector<2x16x96xf32> to vector<2x16x32xf32>
    %cst_21 = arith.constant 0.000000e+00 : f32
    %67 = vector.broadcast %cst_21 : f32 to vector<2x16x32xf32>
    %68 = vector.broadcast %11 : vector<1x1x32xf32> to vector<2x16x32xf32>
    %69 = arith.mulf %64, %68 : vector<2x16x32xf32>
    "tpu.trace_start"() <{level = 10 : i32, message = "bni,bmi->bnm"}> : () -> ()
    %cst_22 = arith.constant dense<0.000000e+00> : vector<2x16x16xf32>
    %70 = tpu.matmul %69, %65, %cst_22 {dimension_numbers = #tpu.dot_dimension_numbers<[2], [2], [1], [1], [0, 0, 0, 1, 1, 1], [0], [0]>} : vector<2x16x32xf32>, vector<2x16x32xf32>, vector<2x16x16xf32> -> vector<2x16x16xf32>
    "tpu.trace_stop"() : () -> ()
    %cst_23 = arith.constant 0.353553385 : f32
    %71 = vector.broadcast %cst_23 : f32 to vector<2x16x16xf32>
    %72 = arith.mulf %70, %71 : vector<2x16x16xf32>
    %cst_24 = arith.constant dense<0xFF800000> : vector<2x16xf32>
    %73 = vector.multi_reduction <maximumf>, %72, %cst_24 [2] : vector<2x16x16xf32> to vector<2x16xf32>
    %74 = vector.shape_cast %73 : vector<2x16xf32> to vector<2x16x1xf32>
    %75 = vector.broadcast %74 : vector<2x16x1xf32> to vector<2x16x16xf32>
    %76 = arith.subf %72, %75 : vector<2x16x16xf32>
    %77 = math.exp %76 : vector<2x16x16xf32>
    %cst_25 = arith.constant dense<0.000000e+00> : vector<2x16xf32>
    %78 = vector.multi_reduction <add>, %77, %cst_25 [2] : vector<2x16x16xf32> to vector<2x16xf32>
    %79 = vector.shape_cast %78 : vector<2x16xf32> to vector<2x16x1xf32>
    %80 = tpu.reciprocal %79 {approx = true} : vector<2x16x1xf32> -> vector<2x16x1xf32>
    %81 = vector.broadcast %80 : vector<2x16x1xf32> to vector<2x16x16xf32>
    %82 = arith.mulf %77, %81 : vector<2x16x16xf32>
    "tpu.trace_start"() <{level = 10 : i32, message = "bnm,bmi->bni"}> : () -> ()
    %cst_26 = arith.constant dense<0.000000e+00> : vector<2x16x32xf32>
    %83 = tpu.matmul %82, %66, %cst_26 {dimension_numbers = #tpu.dot_dimension_numbers<[2], [1], [1], [2], [0, 0, 0, 1, 1, 2], [0], [0]>} : vector<2x16x16xf32>, vector<2x16x32xf32>, vector<2x16x32xf32> -> vector<2x16x32xf32>
    "tpu.trace_stop"() : () -> ()
    %84 = vector.broadcast %11 : vector<1x1x32xf32> to vector<2x16x32xf32>
    %85 = arith.mulf %84, %83 : vector<2x16x32xf32>
    %86 = arith.addf %67, %85 : vector<2x16x32xf32>
    %87 = vector.broadcast %18 : vector<1x1x32xf32> to vector<2x16x32xf32>
    %88 = arith.mulf %64, %87 : vector<2x16x32xf32>
    "tpu.trace_start"() <{level = 10 : i32, message = "bni,bmi->bnm"}> : () -> ()
    %cst_27 = arith.constant dense<0.000000e+00> : vector<2x16x16xf32>
    %89 = tpu.matmul %88, %65, %cst_27 {dimension_numbers = #tpu.dot_dimension_numbers<[2], [2], [1], [1], [0, 0, 0, 1, 1, 1], [0], [0]>} : vector<2x16x32xf32>, vector<2x16x32xf32>, vector<2x16x16xf32> -> vector<2x16x16xf32>
    "tpu.trace_stop"() : () -> ()
    %cst_28 = arith.constant 0.353553385 : f32
    %90 = vector.broadcast %cst_28 : f32 to vector<2x16x16xf32>
    %91 = arith.mulf %89, %90 : vector<2x16x16xf32>
    %cst_29 = arith.constant dense<0xFF800000> : vector<2x16xf32>
    %92 = vector.multi_reduction <maximumf>, %91, %cst_29 [2] : vector<2x16x16xf32> to vector<2x16xf32>
    %93 = vector.shape_cast %92 : vector<2x16xf32> to vector<2x16x1xf32>
    %94 = vector.broadcast %93 : vector<2x16x1xf32> to vector<2x16x16xf32>
    %95 = arith.subf %91, %94 : vector<2x16x16xf32>
    %96 = math.exp %95 : vector<2x16x16xf32>
    %cst_30 = arith.constant dense<0.000000e+00> : vector<2x16xf32>
    %97 = vector.multi_reduction <add>, %96, %cst_30 [2] : vector<2x16x16xf32> to vector<2x16xf32>
    %98 = vector.shape_cast %97 : vector<2x16xf32> to vector<2x16x1xf32>
    %99 = tpu.reciprocal %98 {approx = true} : vector<2x16x1xf32> -> vector<2x16x1xf32>
    %100 = vector.broadcast %99 : vector<2x16x1xf32> to vector<2x16x16xf32>
    %101 = arith.mulf %96, %100 : vector<2x16x16xf32>
    "tpu.trace_start"() <{level = 10 : i32, message = "bnm,bmi->bni"}> : () -> ()
    %cst_31 = arith.constant dense<0.000000e+00> : vector<2x16x32xf32>
    %102 = tpu.matmul %101, %66, %cst_31 {dimension_numbers = #tpu.dot_dimension_numbers<[2], [1], [1], [2], [0, 0, 0, 1, 1, 2], [0], [0]>} : vector<2x16x16xf32>, vector<2x16x32xf32>, vector<2x16x32xf32> -> vector<2x16x32xf32>
    "tpu.trace_stop"() : () -> ()
    %103 = vector.broadcast %18 : vector<1x1x32xf32> to vector<2x16x32xf32>
    %104 = arith.mulf %103, %102 : vector<2x16x32xf32>
    %105 = arith.addf %86, %104 : vector<2x16x32xf32>
    %106 = vector.broadcast %25 : vector<1x1x32xf32> to vector<2x16x32xf32>
    %107 = arith.mulf %64, %106 : vector<2x16x32xf32>
    "tpu.trace_start"() <{level = 10 : i32, message = "bni,bmi->bnm"}> : () -> ()
    %cst_32 = arith.constant dense<0.000000e+00> : vector<2x16x16xf32>
    %108 = tpu.matmul %107, %65, %cst_32 {dimension_numbers = #tpu.dot_dimension_numbers<[2], [2], [1], [1], [0, 0, 0, 1, 1, 1], [0], [0]>} : vector<2x16x32xf32>, vector<2x16x32xf32>, vector<2x16x16xf32> -> vector<2x16x16xf32>
    "tpu.trace_stop"() : () -> ()
    %cst_33 = arith.constant 0.353553385 : f32
    %109 = vector.broadcast %cst_33 : f32 to vector<2x16x16xf32>
    %110 = arith.mulf %108, %109 : vector<2x16x16xf32>
    %cst_34 = arith.constant dense<0xFF800000> : vector<2x16xf32>
    %111 = vector.multi_reduction <maximumf>, %110, %cst_34 [2] : vector<2x16x16xf32> to vector<2x16xf32>
    %112 = vector.shape_cast %111 : vector<2x16xf32> to vector<2x16x1xf32>
    %113 = vector.broadcast %112 : vector<2x16x1xf32> to vector<2x16x16xf32>
    %114 = arith.subf %110, %113 : vector<2x16x16xf32>
    %115 = math.exp %114 : vector<2x16x16xf32>
    %cst_35 = arith.constant dense<0.000000e+00> : vector<2x16xf32>
    %116 = vector.multi_reduction <add>, %115, %cst_35 [2] : vector<2x16x16xf32> to vector<2x16xf32>
    %117 = vector.shape_cast %116 : vector<2x16xf32> to vector<2x16x1xf32>
    %118 = tpu.reciprocal %117 {approx = true} : vector<2x16x1xf32> -> vector<2x16x1xf32>
    %119 = vector.broadcast %118 : vector<2x16x1xf32> to vector<2x16x16xf32>
    %120 = arith.mulf %115, %119 : vector<2x16x16xf32>
    "tpu.trace_start"() <{level = 10 : i32, message = "bnm,bmi->bni"}> : () -> ()
    %cst_36 = arith.constant dense<0.000000e+00> : vector<2x16x32xf32>
    %121 = tpu.matmul %120, %66, %cst_36 {dimension_numbers = #tpu.dot_dimension_numbers<[2], [1], [1], [2], [0, 0, 0, 1, 1, 2], [0], [0]>} : vector<2x16x16xf32>, vector<2x16x32xf32>, vector<2x16x32xf32> -> vector<2x16x32xf32>
    "tpu.trace_stop"() : () -> ()
    %122 = vector.broadcast %25 : vector<1x1x32xf32> to vector<2x16x32xf32>
    %123 = arith.mulf %122, %121 : vector<2x16x32xf32>
    %124 = arith.addf %105, %123 : vector<2x16x32xf32>
    %125 = vector.broadcast %32 : vector<1x1x32xf32> to vector<2x16x32xf32>
    %126 = arith.mulf %64, %125 : vector<2x16x32xf32>
    "tpu.trace_start"() <{level = 10 : i32, message = "bni,bmi->bnm"}> : () -> ()
    %cst_37 = arith.constant dense<0.000000e+00> : vector<2x16x16xf32>
    %127 = tpu.matmul %126, %65, %cst_37 {dimension_numbers = #tpu.dot_dimension_numbers<[2], [2], [1], [1], [0, 0, 0, 1, 1, 1], [0], [0]>} : vector<2x16x32xf32>, vector<2x16x32xf32>, vector<2x16x16xf32> -> vector<2x16x16xf32>
    "tpu.trace_stop"() : () -> ()
    %cst_38 = arith.constant 0.353553385 : f32
    %128 = vector.broadcast %cst_38 : f32 to vector<2x16x16xf32>
    %129 = arith.mulf %127, %128 : vector<2x16x16xf32>
    %cst_39 = arith.constant dense<0xFF800000> : vector<2x16xf32>
    %130 = vector.multi_reduction <maximumf>, %129, %cst_39 [2] : vector<2x16x16xf32> to vector<2x16xf32>
    %131 = vector.shape_cast %130 : vector<2x16xf32> to vector<2x16x1xf32>
    %132 = vector.broadcast %131 : vector<2x16x1xf32> to vector<2x16x16xf32>
    %133 = arith.subf %129, %132 : vector<2x16x16xf32>
    %134 = math.exp %133 : vector<2x16x16xf32>
    %cst_40 = arith.constant dense<0.000000e+00> : vector<2x16xf32>
    %135 = vector.multi_reduction <add>, %134, %cst_40 [2] : vector<2x16x16xf32> to vector<2x16xf32>
    %136 = vector.shape_cast %135 : vector<2x16xf32> to vector<2x16x1xf32>
    %137 = tpu.reciprocal %136 {approx = true} : vector<2x16x1xf32> -> vector<2x16x1xf32>
    %138 = vector.broadcast %137 : vector<2x16x1xf32> to vector<2x16x16xf32>
    %139 = arith.mulf %134, %138 : vector<2x16x16xf32>
    "tpu.trace_start"() <{level = 10 : i32, message = "bnm,bmi->bni"}> : () -> ()
    %cst_41 = arith.constant dense<0.000000e+00> : vector<2x16x32xf32>
    %140 = tpu.matmul %139, %66, %cst_41 {dimension_numbers = #tpu.dot_dimension_numbers<[2], [1], [1], [2], [0, 0, 0, 1, 1, 2], [0], [0]>} : vector<2x16x16xf32>, vector<2x16x32xf32>, vector<2x16x32xf32> -> vector<2x16x32xf32>
    "tpu.trace_stop"() : () -> ()
    %141 = vector.broadcast %32 : vector<1x1x32xf32> to vector<2x16x32xf32>
    %142 = arith.mulf %141, %140 : vector<2x16x32xf32>
    %143 = arith.addf %124, %142 : vector<2x16x32xf32>
    %144 = vector.shape_cast %143 : vector<2x16x32xf32> to vector<32x32xf32>
    %c0_42 = arith.constant 0 : index
    %c0_43 = arith.constant 0 : index
    %c0_44 = arith.constant 0 : index
    %145 = vector.load %arg5[%c0_42, %c0_43, %c0_44] : memref<2x32x32xf32, #tpu.memory_space<vmem>>, vector<1x32x32xf32>
    %146 = vector.shape_cast %145 : vector<1x32x32xf32> to vector<32x32xf32>
    %cst_45 = arith.constant dense<0.000000e+00> : vector<32x32xf32>
    %147 = tpu.matmul %144, %146, %cst_45 {dimension_numbers = #tpu.dot_dimension_numbers<[1], [0], [0], [1], [0, 0, 1, 1], [], []>} : vector<32x32xf32>, vector<32x32xf32>, vector<32x32xf32> -> vector<32x32xf32>
    %148 = vector.shape_cast %147 : vector<32x32xf32> to vector<2x16x32xf32>
    %cst_46 = arith.constant dense<0.000000e+00> : vector<2x16xf32>
    %149 = vector.multi_reduction <add>, %148, %cst_46 [2] : vector<2x16x32xf32> to vector<2x16xf32>
    %150 = vector.shape_cast %149 : vector<2x16xf32> to vector<2x16x1xf32>
    "tpu.trace_start"() <{level = 10 : i32, message = "bnm,bmk->bnk"}> : () -> ()
    %cst_47 = arith.constant dense<0.000000e+00> : vector<2x16x1xf32>
    %151 = tpu.matmul %3, %150, %cst_47 {dimension_numbers = #tpu.dot_dimension_numbers<[2], [1], [1], [2], [0, 0, 0, 1, 1, 2], [0], [0]>} : vector<2x16x16xf32>, vector<2x16x1xf32>, vector<2x16x1xf32> -> vector<2x16x1xf32>
    "tpu.trace_stop"() : () -> ()
    %152 = arith.mulf %151, %151 : vector<2x16x1xf32>
    %cst_48 = arith.constant 0.000000e+00 : f32
    %153 = vector.broadcast %cst_48 : f32 to vector<2x16x1xf32>
    %154 = arith.subf %153, %152 : vector<2x16x1xf32>
    %155 = math.exp %154 : vector<2x16x1xf32>
    %cst_49 = arith.constant 5.000000e-01 : f32
    %156 = vector.broadcast %cst_49 : f32 to vector<2x16x1xf32>
    %157 = arith.mulf %156, %155 : vector<2x16x1xf32>
    %158 = vector.broadcast %157 : vector<2x16x1xf32> to vector<2x16x32xf32>
    %159 = arith.mulf %158, %148 : vector<2x16x32xf32>
    %160 = arith.addf %159, %0 : vector<2x16x32xf32>
    %161 = vector.shape_cast %160 : vector<2x16x32xf32> to vector<32x32xf32>
    %c0_50 = arith.constant 0 : index
    %c0_51 = arith.constant 0 : index
    %c0_52 = arith.constant 0 : index
    %162 = vector.load %arg6[%c0_50, %c0_51, %c0_52] : memref<2x32x32xf32, #tpu.memory_space<vmem>>, vector<1x32x32xf32>
    %163 = vector.shape_cast %162 : vector<1x32x32xf32> to vector<32x32xf32>
    %cst_53 = arith.constant dense<0.000000e+00> : vector<32x32xf32>
    %164 = tpu.matmul %161, %163, %cst_53 {dimension_numbers = #tpu.dot_dimension_numbers<[1], [0], [0], [1], [0, 0, 1, 1], [], []>} : vector<32x32xf32>, vector<32x32xf32>, vector<32x32xf32> -> vector<32x32xf32>
    %c0_54 = arith.constant 0 : index
    %c0_55 = arith.constant 0 : index
    %c0_56 = arith.constant 0 : index
    %165 = vector.load %arg7[%c0_54, %c0_55, %c0_56] : memref<2x1x32xf32, #tpu.memory_space<vmem>>, vector<1x1x32xf32>
    %166 = vector.shape_cast %165 : vector<1x1x32xf32> to vector<1x32xf32>
    %167 = vector.broadcast %166 : vector<1x32xf32> to vector<32x32xf32>
    %168 = arith.addf %164, %167 : vector<32x32xf32>
    %169 = vector.shape_cast %168 : vector<32x32xf32> to vector<2x16x32xf32>
    %cst_57 = arith.constant dense<0.000000e+00> : vector<2x16xf32>
    %170 = vector.multi_reduction <add>, %169, %cst_57 [2] : vector<2x16x32xf32> to vector<2x16xf32>
    %171 = vector.shape_cast %170 : vector<2x16xf32> to vector<2x16x1xf32>
    "tpu.trace_start"() <{level = 10 : i32, message = "bnm,bmk->bnk"}> : () -> ()
    %cst_58 = arith.constant dense<0.000000e+00> : vector<2x16x1xf32>
    %172 = tpu.matmul %3, %171, %cst_58 {dimension_numbers = #tpu.dot_dimension_numbers<[2], [1], [1], [2], [0, 0, 0, 1, 1, 2], [0], [0]>} : vector<2x16x16xf32>, vector<2x16x1xf32>, vector<2x16x1xf32> -> vector<2x16x1xf32>
    "tpu.trace_stop"() : () -> ()
    %173 = arith.mulf %172, %172 : vector<2x16x1xf32>
    %cst_59 = arith.constant 0.000000e+00 : f32
    %174 = vector.broadcast %cst_59 : f32 to vector<2x16x1xf32>
    %175 = arith.subf %174, %173 : vector<2x16x1xf32>
    %176 = math.exp %175 : vector<2x16x1xf32>
    %cst_60 = arith.constant 5.000000e-01 : f32
    %177 = vector.broadcast %cst_60 : f32 to vector<2x16x1xf32>
    %178 = arith.mulf %177, %176 : vector<2x16x1xf32>
    %179 = vector.broadcast %178 : vector<2x16x1xf32> to vector<2x16x32xf32>
    %180 = arith.mulf %179, %169 : vector<2x16x32xf32>
    %181 = arith.addf %180, %160 : vector<2x16x32xf32>
    %cst_61 = arith.constant dense<0.000000e+00> : vector<2x16xf32>
    %182 = vector.multi_reduction <add>, %181, %cst_61 [2] : vector<2x16x32xf32> to vector<2x16xf32>
    %183 = vector.shape_cast %182 : vector<2x16xf32> to vector<2x16x1xf32>
    %cst_62 = arith.constant 3.200000e+01 : f32
    %184 = vector.broadcast %cst_62 : f32 to vector<2x16x1xf32>
    %185 = arith.divf %183, %184 : vector<2x16x1xf32>
    %186 = vector.broadcast %185 : vector<2x16x1xf32> to vector<2x16x32xf32>
    %187 = arith.subf %181, %186 : vector<2x16x32xf32>
    %188 = arith.mulf %187, %187 : vector<2x16x32xf32>
    %cst_63 = arith.constant dense<0.000000e+00> : vector<2x16xf32>
    %189 = vector.multi_reduction <add>, %188, %cst_63 [2] : vector<2x16x32xf32> to vector<2x16xf32>
    %190 = vector.shape_cast %189 : vector<2x16xf32> to vector<2x16x1xf32>
    %cst_64 = arith.constant 3.200000e+01 : f32
    %191 = vector.broadcast %cst_64 : f32 to vector<2x16x1xf32>
    %192 = arith.divf %190, %191 : vector<2x16x1xf32>
    %cst_65 = arith.constant 9.99999974E-6 : f32
    %193 = vector.broadcast %cst_65 : f32 to vector<2x16x1xf32>
    %194 = arith.addf %192, %193 : vector<2x16x1xf32>
    %195 = math.rsqrt %194 : vector<2x16x1xf32>
    %196 = vector.broadcast %195 : vector<2x16x1xf32> to vector<2x16x32xf32>
    %197 = arith.mulf %187, %196 : vector<2x16x32xf32>
    %c1 = arith.constant 1 : index
    %c0_66 = arith.constant 0 : index
    %c0_67 = arith.constant 0 : index
    %198 = vector.load %arg2[%c1, %c0_66, %c0_67] : memref<2x1x32xf32, #tpu.memory_space<vmem>>, vector<1x1x32xf32>
    %199 = vector.shape_cast %198 : vector<1x1x32xf32> to vector<1x32xf32>
    %200 = vector.shape_cast %199 : vector<1x32xf32> to vector<1x1x32xf32>
    %201 = vector.broadcast %200 : vector<1x1x32xf32> to vector<2x16x32xf32>
    %202 = arith.mulf %197, %201 : vector<2x16x32xf32>
    %c1_68 = arith.constant 1 : index
    %c0_69 = arith.constant 0 : index
    %c0_70 = arith.constant 0 : index
    %203 = vector.load %arg3[%c1_68, %c0_69, %c0_70] : memref<2x1x32xf32, #tpu.memory_space<vmem>>, vector<1x1x32xf32>
    %204 = vector.shape_cast %203 : vector<1x1x32xf32> to vector<1x32xf32>
    %205 = vector.shape_cast %204 : vector<1x32xf32> to vector<1x1x32xf32>
    %206 = vector.broadcast %205 : vector<1x1x32xf32> to vector<2x16x32xf32>
    %207 = arith.addf %202, %206 : vector<2x16x32xf32>
    %208 = vector.shape_cast %207 : vector<2x16x32xf32> to vector<32x32xf32>
    %c1_71 = arith.constant 1 : index
    %c0_72 = arith.constant 0 : index
    %c0_73 = arith.constant 0 : index
    %209 = vector.load %arg4[%c1_71, %c0_72, %c0_73] : memref<2x32x96xf32, #tpu.memory_space<vmem>>, vector<1x32x96xf32>
    %210 = vector.shape_cast %209 : vector<1x32x96xf32> to vector<32x96xf32>
    %cst_74 = arith.constant dense<0.000000e+00> : vector<32x96xf32>
    %211 = tpu.matmul %208, %210, %cst_74 {dimension_numbers = #tpu.dot_dimension_numbers<[1], [0], [0], [1], [0, 0, 1, 1], [], []>} : vector<32x32xf32>, vector<32x96xf32>, vector<32x96xf32> -> vector<32x96xf32>
    %212 = vector.shape_cast %211 : vector<32x96xf32> to vector<2x16x96xf32>
    %213 = vector.extract_strided_slice %212 {offsets = [0, 0, 0], sizes = [2, 16, 32], strides = [1, 1, 1]} : vector<2x16x96xf32> to vector<2x16x32xf32>
    %214 = vector.extract_strided_slice %212 {offsets = [0, 0, 32], sizes = [2, 16, 32], strides = [1, 1, 1]} : vector<2x16x96xf32> to vector<2x16x32xf32>
    %215 = vector.extract_strided_slice %212 {offsets = [0, 0, 64], sizes = [2, 16, 32], strides = [1, 1, 1]} : vector<2x16x96xf32> to vector<2x16x32xf32>
    %cst_75 = arith.constant 0.000000e+00 : f32
    %216 = vector.broadcast %cst_75 : f32 to vector<2x16x32xf32>
    %217 = vector.broadcast %11 : vector<1x1x32xf32> to vector<2x16x32xf32>
    %218 = arith.mulf %213, %217 : vector<2x16x32xf32>
    "tpu.trace_start"() <{level = 10 : i32, message = "bni,bmi->bnm"}> : () -> ()
    %cst_76 = arith.constant dense<0.000000e+00> : vector<2x16x16xf32>
    %219 = tpu.matmul %218, %214, %cst_76 {dimension_numbers = #tpu.dot_dimension_numbers<[2], [2], [1], [1], [0, 0, 0, 1, 1, 1], [0], [0]>} : vector<2x16x32xf32>, vector<2x16x32xf32>, vector<2x16x16xf32> -> vector<2x16x16xf32>
    "tpu.trace_stop"() : () -> ()
    %cst_77 = arith.constant 0.353553385 : f32
    %220 = vector.broadcast %cst_77 : f32 to vector<2x16x16xf32>
    %221 = arith.mulf %219, %220 : vector<2x16x16xf32>
    %cst_78 = arith.constant dense<0xFF800000> : vector<2x16xf32>
    %222 = vector.multi_reduction <maximumf>, %221, %cst_78 [2] : vector<2x16x16xf32> to vector<2x16xf32>
    %223 = vector.shape_cast %222 : vector<2x16xf32> to vector<2x16x1xf32>
    %224 = vector.broadcast %223 : vector<2x16x1xf32> to vector<2x16x16xf32>
    %225 = arith.subf %221, %224 : vector<2x16x16xf32>
    %226 = math.exp %225 : vector<2x16x16xf32>
    %cst_79 = arith.constant dense<0.000000e+00> : vector<2x16xf32>
    %227 = vector.multi_reduction <add>, %226, %cst_79 [2] : vector<2x16x16xf32> to vector<2x16xf32>
    %228 = vector.shape_cast %227 : vector<2x16xf32> to vector<2x16x1xf32>
    %229 = tpu.reciprocal %228 {approx = true} : vector<2x16x1xf32> -> vector<2x16x1xf32>
    %230 = vector.broadcast %229 : vector<2x16x1xf32> to vector<2x16x16xf32>
    %231 = arith.mulf %226, %230 : vector<2x16x16xf32>
    "tpu.trace_start"() <{level = 10 : i32, message = "bnm,bmi->bni"}> : () -> ()
    %cst_80 = arith.constant dense<0.000000e+00> : vector<2x16x32xf32>
    %232 = tpu.matmul %231, %215, %cst_80 {dimension_numbers = #tpu.dot_dimension_numbers<[2], [1], [1], [2], [0, 0, 0, 1, 1, 2], [0], [0]>} : vector<2x16x16xf32>, vector<2x16x32xf32>, vector<2x16x32xf32> -> vector<2x16x32xf32>
    "tpu.trace_stop"() : () -> ()
    %233 = vector.broadcast %11 : vector<1x1x32xf32> to vector<2x16x32xf32>
    %234 = arith.mulf %233, %232 : vector<2x16x32xf32>
    %235 = arith.addf %216, %234 : vector<2x16x32xf32>
    %236 = vector.broadcast %18 : vector<1x1x32xf32> to vector<2x16x32xf32>
    %237 = arith.mulf %213, %236 : vector<2x16x32xf32>
    "tpu.trace_start"() <{level = 10 : i32, message = "bni,bmi->bnm"}> : () -> ()
    %cst_81 = arith.constant dense<0.000000e+00> : vector<2x16x16xf32>
    %238 = tpu.matmul %237, %214, %cst_81 {dimension_numbers = #tpu.dot_dimension_numbers<[2], [2], [1], [1], [0, 0, 0, 1, 1, 1], [0], [0]>} : vector<2x16x32xf32>, vector<2x16x32xf32>, vector<2x16x16xf32> -> vector<2x16x16xf32>
    "tpu.trace_stop"() : () -> ()
    %cst_82 = arith.constant 0.353553385 : f32
    %239 = vector.broadcast %cst_82 : f32 to vector<2x16x16xf32>
    %240 = arith.mulf %238, %239 : vector<2x16x16xf32>
    %cst_83 = arith.constant dense<0xFF800000> : vector<2x16xf32>
    %241 = vector.multi_reduction <maximumf>, %240, %cst_83 [2] : vector<2x16x16xf32> to vector<2x16xf32>
    %242 = vector.shape_cast %241 : vector<2x16xf32> to vector<2x16x1xf32>
    %243 = vector.broadcast %242 : vector<2x16x1xf32> to vector<2x16x16xf32>
    %244 = arith.subf %240, %243 : vector<2x16x16xf32>
    %245 = math.exp %244 : vector<2x16x16xf32>
    %cst_84 = arith.constant dense<0.000000e+00> : vector<2x16xf32>
    %246 = vector.multi_reduction <add>, %245, %cst_84 [2] : vector<2x16x16xf32> to vector<2x16xf32>
    %247 = vector.shape_cast %246 : vector<2x16xf32> to vector<2x16x1xf32>
    %248 = tpu.reciprocal %247 {approx = true} : vector<2x16x1xf32> -> vector<2x16x1xf32>
    %249 = vector.broadcast %248 : vector<2x16x1xf32> to vector<2x16x16xf32>
    %250 = arith.mulf %245, %249 : vector<2x16x16xf32>
    "tpu.trace_start"() <{level = 10 : i32, message = "bnm,bmi->bni"}> : () -> ()
    %cst_85 = arith.constant dense<0.000000e+00> : vector<2x16x32xf32>
    %251 = tpu.matmul %250, %215, %cst_85 {dimension_numbers = #tpu.dot_dimension_numbers<[2], [1], [1], [2], [0, 0, 0, 1, 1, 2], [0], [0]>} : vector<2x16x16xf32>, vector<2x16x32xf32>, vector<2x16x32xf32> -> vector<2x16x32xf32>
    "tpu.trace_stop"() : () -> ()
    %252 = vector.broadcast %18 : vector<1x1x32xf32> to vector<2x16x32xf32>
    %253 = arith.mulf %252, %251 : vector<2x16x32xf32>
    %254 = arith.addf %235, %253 : vector<2x16x32xf32>
    %255 = vector.broadcast %25 : vector<1x1x32xf32> to vector<2x16x32xf32>
    %256 = arith.mulf %213, %255 : vector<2x16x32xf32>
    "tpu.trace_start"() <{level = 10 : i32, message = "bni,bmi->bnm"}> : () -> ()
    %cst_86 = arith.constant dense<0.000000e+00> : vector<2x16x16xf32>
    %257 = tpu.matmul %256, %214, %cst_86 {dimension_numbers = #tpu.dot_dimension_numbers<[2], [2], [1], [1], [0, 0, 0, 1, 1, 1], [0], [0]>} : vector<2x16x32xf32>, vector<2x16x32xf32>, vector<2x16x16xf32> -> vector<2x16x16xf32>
    "tpu.trace_stop"() : () -> ()
    %cst_87 = arith.constant 0.353553385 : f32
    %258 = vector.broadcast %cst_87 : f32 to vector<2x16x16xf32>
    %259 = arith.mulf %257, %258 : vector<2x16x16xf32>
    %cst_88 = arith.constant dense<0xFF800000> : vector<2x16xf32>
    %260 = vector.multi_reduction <maximumf>, %259, %cst_88 [2] : vector<2x16x16xf32> to vector<2x16xf32>
    %261 = vector.shape_cast %260 : vector<2x16xf32> to vector<2x16x1xf32>
    %262 = vector.broadcast %261 : vector<2x16x1xf32> to vector<2x16x16xf32>
    %263 = arith.subf %259, %262 : vector<2x16x16xf32>
    %264 = math.exp %263 : vector<2x16x16xf32>
    %cst_89 = arith.constant dense<0.000000e+00> : vector<2x16xf32>
    %265 = vector.multi_reduction <add>, %264, %cst_89 [2] : vector<2x16x16xf32> to vector<2x16xf32>
    %266 = vector.shape_cast %265 : vector<2x16xf32> to vector<2x16x1xf32>
    %267 = tpu.reciprocal %266 {approx = true} : vector<2x16x1xf32> -> vector<2x16x1xf32>
    %268 = vector.broadcast %267 : vector<2x16x1xf32> to vector<2x16x16xf32>
    %269 = arith.mulf %264, %268 : vector<2x16x16xf32>
    "tpu.trace_start"() <{level = 10 : i32, message = "bnm,bmi->bni"}> : () -> ()
    %cst_90 = arith.constant dense<0.000000e+00> : vector<2x16x32xf32>
    %270 = tpu.matmul %269, %215, %cst_90 {dimension_numbers = #tpu.dot_dimension_numbers<[2], [1], [1], [2], [0, 0, 0, 1, 1, 2], [0], [0]>} : vector<2x16x16xf32>, vector<2x16x32xf32>, vector<2x16x32xf32> -> vector<2x16x32xf32>
    "tpu.trace_stop"() : () -> ()
    %271 = vector.broadcast %25 : vector<1x1x32xf32> to vector<2x16x32xf32>
    %272 = arith.mulf %271, %270 : vector<2x16x32xf32>
    %273 = arith.addf %254, %272 : vector<2x16x32xf32>
    %274 = vector.broadcast %32 : vector<1x1x32xf32> to vector<2x16x32xf32>
    %275 = arith.mulf %213, %274 : vector<2x16x32xf32>
    "tpu.trace_start"() <{level = 10 : i32, message = "bni,bmi->bnm"}> : () -> ()
    %cst_91 = arith.constant dense<0.000000e+00> : vector<2x16x16xf32>
    %276 = tpu.matmul %275, %214, %cst_91 {dimension_numbers = #tpu.dot_dimension_numbers<[2], [2], [1], [1], [0, 0, 0, 1, 1, 1], [0], [0]>} : vector<2x16x32xf32>, vector<2x16x32xf32>, vector<2x16x16xf32> -> vector<2x16x16xf32>
    "tpu.trace_stop"() : () -> ()
    %cst_92 = arith.constant 0.353553385 : f32
    %277 = vector.broadcast %cst_92 : f32 to vector<2x16x16xf32>
    %278 = arith.mulf %276, %277 : vector<2x16x16xf32>
    %cst_93 = arith.constant dense<0xFF800000> : vector<2x16xf32>
    %279 = vector.multi_reduction <maximumf>, %278, %cst_93 [2] : vector<2x16x16xf32> to vector<2x16xf32>
    %280 = vector.shape_cast %279 : vector<2x16xf32> to vector<2x16x1xf32>
    %281 = vector.broadcast %280 : vector<2x16x1xf32> to vector<2x16x16xf32>
    %282 = arith.subf %278, %281 : vector<2x16x16xf32>
    %283 = math.exp %282 : vector<2x16x16xf32>
    %cst_94 = arith.constant dense<0.000000e+00> : vector<2x16xf32>
    %284 = vector.multi_reduction <add>, %283, %cst_94 [2] : vector<2x16x16xf32> to vector<2x16xf32>
    %285 = vector.shape_cast %284 : vector<2x16xf32> to vector<2x16x1xf32>
    %286 = tpu.reciprocal %285 {approx = true} : vector<2x16x1xf32> -> vector<2x16x1xf32>
    %287 = vector.broadcast %286 : vector<2x16x1xf32> to vector<2x16x16xf32>
    %288 = arith.mulf %283, %287 : vector<2x16x16xf32>
    "tpu.trace_start"() <{level = 10 : i32, message = "bnm,bmi->bni"}> : () -> ()
    %cst_95 = arith.constant dense<0.000000e+00> : vector<2x16x32xf32>
    %289 = tpu.matmul %288, %215, %cst_95 {dimension_numbers = #tpu.dot_dimension_numbers<[2], [1], [1], [2], [0, 0, 0, 1, 1, 2], [0], [0]>} : vector<2x16x16xf32>, vector<2x16x32xf32>, vector<2x16x32xf32> -> vector<2x16x32xf32>
    "tpu.trace_stop"() : () -> ()
    %290 = vector.broadcast %32 : vector<1x1x32xf32> to vector<2x16x32xf32>
    %291 = arith.mulf %290, %289 : vector<2x16x32xf32>
    %292 = arith.addf %273, %291 : vector<2x16x32xf32>
    %293 = vector.shape_cast %292 : vector<2x16x32xf32> to vector<32x32xf32>
    %c1_96 = arith.constant 1 : index
    %c0_97 = arith.constant 0 : index
    %c0_98 = arith.constant 0 : index
    %294 = vector.load %arg5[%c1_96, %c0_97, %c0_98] : memref<2x32x32xf32, #tpu.memory_space<vmem>>, vector<1x32x32xf32>
    %295 = vector.shape_cast %294 : vector<1x32x32xf32> to vector<32x32xf32>
    %cst_99 = arith.constant dense<0.000000e+00> : vector<32x32xf32>
    %296 = tpu.matmul %293, %295, %cst_99 {dimension_numbers = #tpu.dot_dimension_numbers<[1], [0], [0], [1], [0, 0, 1, 1], [], []>} : vector<32x32xf32>, vector<32x32xf32>, vector<32x32xf32> -> vector<32x32xf32>
    %297 = vector.shape_cast %296 : vector<32x32xf32> to vector<2x16x32xf32>
    %cst_100 = arith.constant dense<0.000000e+00> : vector<2x16xf32>
    %298 = vector.multi_reduction <add>, %297, %cst_100 [2] : vector<2x16x32xf32> to vector<2x16xf32>
    %299 = vector.shape_cast %298 : vector<2x16xf32> to vector<2x16x1xf32>
    "tpu.trace_start"() <{level = 10 : i32, message = "bnm,bmk->bnk"}> : () -> ()
    %cst_101 = arith.constant dense<0.000000e+00> : vector<2x16x1xf32>
    %300 = tpu.matmul %3, %299, %cst_101 {dimension_numbers = #tpu.dot_dimension_numbers<[2], [1], [1], [2], [0, 0, 0, 1, 1, 2], [0], [0]>} : vector<2x16x16xf32>, vector<2x16x1xf32>, vector<2x16x1xf32> -> vector<2x16x1xf32>
    "tpu.trace_stop"() : () -> ()
    %301 = arith.mulf %300, %300 : vector<2x16x1xf32>
    %cst_102 = arith.constant 0.000000e+00 : f32
    %302 = vector.broadcast %cst_102 : f32 to vector<2x16x1xf32>
    %303 = arith.subf %302, %301 : vector<2x16x1xf32>
    %304 = math.exp %303 : vector<2x16x1xf32>
    %cst_103 = arith.constant 5.000000e-01 : f32
    %305 = vector.broadcast %cst_103 : f32 to vector<2x16x1xf32>
    %306 = arith.mulf %305, %304 : vector<2x16x1xf32>
    %307 = vector.broadcast %306 : vector<2x16x1xf32> to vector<2x16x32xf32>
    %308 = arith.mulf %307, %297 : vector<2x16x32xf32>
    %309 = arith.addf %308, %181 : vector<2x16x32xf32>
    %310 = vector.shape_cast %309 : vector<2x16x32xf32> to vector<32x32xf32>
    %c1_104 = arith.constant 1 : index
    %c0_105 = arith.constant 0 : index
    %c0_106 = arith.constant 0 : index
    %311 = vector.load %arg6[%c1_104, %c0_105, %c0_106] : memref<2x32x32xf32, #tpu.memory_space<vmem>>, vector<1x32x32xf32>
    %312 = vector.shape_cast %311 : vector<1x32x32xf32> to vector<32x32xf32>
    %cst_107 = arith.constant dense<0.000000e+00> : vector<32x32xf32>
    %313 = tpu.matmul %310, %312, %cst_107 {dimension_numbers = #tpu.dot_dimension_numbers<[1], [0], [0], [1], [0, 0, 1, 1], [], []>} : vector<32x32xf32>, vector<32x32xf32>, vector<32x32xf32> -> vector<32x32xf32>
    %c1_108 = arith.constant 1 : index
    %c0_109 = arith.constant 0 : index
    %c0_110 = arith.constant 0 : index
    %314 = vector.load %arg7[%c1_108, %c0_109, %c0_110] : memref<2x1x32xf32, #tpu.memory_space<vmem>>, vector<1x1x32xf32>
    %315 = vector.shape_cast %314 : vector<1x1x32xf32> to vector<1x32xf32>
    %316 = vector.broadcast %315 : vector<1x32xf32> to vector<32x32xf32>
    %317 = arith.addf %313, %316 : vector<32x32xf32>
    %318 = vector.shape_cast %317 : vector<32x32xf32> to vector<2x16x32xf32>
    %cst_111 = arith.constant dense<0.000000e+00> : vector<2x16xf32>
    %319 = vector.multi_reduction <add>, %318, %cst_111 [2] : vector<2x16x32xf32> to vector<2x16xf32>
    %320 = vector.shape_cast %319 : vector<2x16xf32> to vector<2x16x1xf32>
    "tpu.trace_start"() <{level = 10 : i32, message = "bnm,bmk->bnk"}> : () -> ()
    %cst_112 = arith.constant dense<0.000000e+00> : vector<2x16x1xf32>
    %321 = tpu.matmul %3, %320, %cst_112 {dimension_numbers = #tpu.dot_dimension_numbers<[2], [1], [1], [2], [0, 0, 0, 1, 1, 2], [0], [0]>} : vector<2x16x16xf32>, vector<2x16x1xf32>, vector<2x16x1xf32> -> vector<2x16x1xf32>
    "tpu.trace_stop"() : () -> ()
    %322 = arith.mulf %321, %321 : vector<2x16x1xf32>
    %cst_113 = arith.constant 0.000000e+00 : f32
    %323 = vector.broadcast %cst_113 : f32 to vector<2x16x1xf32>
    %324 = arith.subf %323, %322 : vector<2x16x1xf32>
    %325 = math.exp %324 : vector<2x16x1xf32>
    %cst_114 = arith.constant 5.000000e-01 : f32
    %326 = vector.broadcast %cst_114 : f32 to vector<2x16x1xf32>
    %327 = arith.mulf %326, %325 : vector<2x16x1xf32>
    %328 = vector.broadcast %327 : vector<2x16x1xf32> to vector<2x16x32xf32>
    %329 = arith.mulf %328, %318 : vector<2x16x32xf32>
    %330 = arith.addf %329, %309 : vector<2x16x32xf32>
    %c0_115 = arith.constant 0 : index
    %c0_116 = arith.constant 0 : index
    %c0_117 = arith.constant 0 : index
    %331 = vector.load %arg9[%c0_115, %c0_116, %c0_117] : memref<2x16x32xf32, #tpu.memory_space<vmem>>, vector<2x16x32xf32>
    tpu.vector_store %arg9[%c0_115, %c0_116, %c0_117], %330 {strides = array<i32>} : memref<2x16x32xf32, #tpu.memory_space<vmem>>, vector<2x16x32xf32>,
    return
  }
  func.func @transform_0(%arg0: i32) -> (i32, i32, i32) {
    %c0_i32 = arith.constant 0 : i32
    %c0_i32_0 = arith.constant 0 : i32
    %c0_i32_1 = arith.constant 0 : i32
    return %arg0, %c0_i32, %c0_i32_0 : i32, i32, i32
  }
  func.func @transform_1(%arg0: i32) -> (i32, i32, i32) {
    %c0_i32 = arith.constant 0 : i32
    %c0_i32_0 = arith.constant 0 : i32
    %c0_i32_1 = arith.constant 0 : i32
    %c0_i32_2 = arith.constant 0 : i32
    return %c0_i32, %c0_i32_0, %c0_i32_1 : i32, i32, i32
  }
  func.func @transform_2(%arg0: i32) -> (i32, i32, i32) {
    %c0_i32 = arith.constant 0 : i32
    %c0_i32_0 = arith.constant 0 : i32
    %c0_i32_1 = arith.constant 0 : i32
    %c0_i32_2 = arith.constant 0 : i32
    return %c0_i32, %c0_i32_0, %c0_i32_1 : i32, i32, i32
  }
  func.func @transform_3(%arg0: i32) -> (i32, i32, i32) {
    %c0_i32 = arith.constant 0 : i32
    %c0_i32_0 = arith.constant 0 : i32
    %c0_i32_1 = arith.constant 0 : i32
    %c0_i32_2 = arith.constant 0 : i32
    return %c0_i32, %c0_i32_0, %c0_i32_1 : i32, i32, i32
  }
  func.func @transform_4(%arg0: i32) -> (i32, i32, i32) {
    %c0_i32 = arith.constant 0 : i32
    %c0_i32_0 = arith.constant 0 : i32
    %c0_i32_1 = arith.constant 0 : i32
    %c0_i32_2 = arith.constant 0 : i32
    return %c0_i32, %c0_i32_0, %c0_i32_1 : i32, i32, i32
  }
  func.func @transform_5(%arg0: i32) -> (i32, i32, i32) {
    %c0_i32 = arith.constant 0 : i32
    %c0_i32_0 = arith.constant 0 : i32
    %c0_i32_1 = arith.constant 0 : i32
    %c0_i32_2 = arith.constant 0 : i32
    return %c0_i32, %c0_i32_0, %c0_i32_1 : i32, i32, i32
  }
  func.func @transform_6(%arg0: i32) -> (i32, i32, i32) {
    %c0_i32 = arith.constant 0 : i32
    %c0_i32_0 = arith.constant 0 : i32
    %c0_i32_1 = arith.constant 0 : i32
    %c0_i32_2 = arith.constant 0 : i32
    return %c0_i32, %c0_i32_0, %c0_i32_1 : i32, i32, i32
  }
  func.func @transform_7(%arg0: i32) -> (i32, i32) {
    %c0_i32 = arith.constant 0 : i32
    %c0_i32_0 = arith.constant 0 : i32
    %c0_i32_1 = arith.constant 0 : i32
    return %c0_i32, %c0_i32_0 : i32, i32
  }
  func.func @transform_8(%arg0: i32) -> (i32, i32, i32) {
    %c0_i32 = arith.constant 0 : i32
    %c0_i32_0 = arith.constant 0 : i32
    %c0_i32_1 = arith.constant 0 : i32
    return %arg0, %c0_i32, %c0_i32_0 : i32, i32, i32
  }
}

</mosaic_0001>

<llo_original>
// kernel: tpu_custom_call.1
$region0: #{tpu_custom_call.1}
  #allocation0 [shape = 'u32[]', space=smem, size = 0x4, offset = 0x4, fixed_abs, tag = 'smem constant byte address 0x4 - core index']
  #allocation1 [shape = 'u32[72,128]{1,0:T(1,128)}', space=vmem, size = 0x9000, scoped, tag = 'internal scratch']
  %s0 = inlined_call_operand.hbm [shape: f32[2,16,32], index: 0, kind: input, shape index: {}]
  %s1 = inlined_call_operand.hbm [shape: f32[2,1,32], index: 1, kind: input, shape index: {}]
  %s2 = inlined_call_operand.hbm [shape: f32[2,1,32], index: 2, kind: input, shape index: {}]
  %s3 = inlined_call_operand.hbm [shape: f32[2,32,96], index: 3, kind: input, shape index: {}]
  %s4 = inlined_call_operand.hbm [shape: f32[2,32,32], index: 4, kind: input, shape index: {}]
  %s5 = inlined_call_operand.hbm [shape: f32[2,32,32], index: 5, kind: input, shape index: {}]
  %s6 = inlined_call_operand.vmem [shape: f32[2,1,32], index: 6, kind: input, shape index: {}]
  %s7 = inlined_call_operand.hbm [shape: f32[16,16], index: 7, kind: input, shape index: {}]
  %s8 = inlined_call_operand.hbm [shape: f32[2,16,32], index: 8, kind: output, shape index: {}]
  %s9 = sld [smem:[#allocation0]]
  $region70: #{tpu_custom_call.1} parent=0
    _
  %s11 = ssub.s32 1, %s9
  %s12 = scalar_select 0, %s11, %s9
  $region1: #{tpu_custom_call.1} parent=0
    #allocation2 [shape = 'u8[16384]{0}', space=vmem, size = 0x4000, scoped, tag = 'input window, operand 0, single buffered']
    #allocation3 [shape = 's32[1]{0}', space=sflag, size = 0x4, scoped, tag = 'scoped memory for tpu_custom_call.1']
    #allocation4 [shape = 's32[1]{0}', space=sflag, size = 0x4, scoped, tag = 'scoped memory for tpu_custom_call.1']
    #allocation5 [shape = 'u8[1024]{0}', space=vmem, size = 0x400, scoped, tag = 'input window, operand 1, single buffered']
    #allocation6 [shape = 's32[1]{0}', space=sflag, size = 0x4, scoped, tag = 'scoped memory for tpu_custom_call.1']
    #allocation7 [shape = 'u8[1024]{0}', space=vmem, size = 0x400, scoped, tag = 'input window, operand 2, single buffered']
    #allocation8 [shape = 'u8[32768]{0}', space=vmem, size = 0x8000, scoped, tag = 'input window, operand 3, single buffered']
    #allocation9 [shape = 's32[1]{0}', space=sflag, size = 0x4, scoped, tag = 'scoped memory for tpu_custom_call.1']
    #allocation10 [shape = 'u8[32768]{0}', space=vmem, size = 0x8000, scoped, tag = 'input window, operand 4, single buffered']
    #allocation11 [shape = 'u8[32768]{0}', space=vmem, size = 0x8000, scoped, tag = 'input window, operand 5, single buffered']
    #allocation12 [shape = 's32[1]{0}', space=sflag, size = 0x4, scoped, tag = 'scoped memory for tpu_custom_call.1']
    #allocation13 [shape = 'u8[8192]{0}', space=vmem, size = 0x2000, scoped, tag = 'input window, operand 7, single buffered']
    #allocation14 [shape = 'u8[16384]{0}', space=vmem, size = 0x4000, scoped, tag = 'output window, operand 0, single buffered']
    %13 = vsyncpa [#allocation3], 0
    %14 = vsyncpa [#allocation6], 0
    %15 = vsyncpa [#allocation9], 0
    %16 = vsyncpa [#allocation12], 0
    %17 = vsyncpa [#allocation4], 0
    // Predicated region
    $region2: #{tpu_custom_call.1} parent=1 // pred_check
      _
    $region3: #{tpu_custom_call.1} parent=1 // pred_check_branch
      %19 = sbr.rel (0) target = $region5
    $region4: #{tpu_custom_call.1} parent=1 // pred_region
      %21 = vsyncadd [#allocation3], 0
      %s22 = sshll.u32 %s0, 4
      %s23 = int_to_ptr.hbm [resolvable:$true] %s22
      %s24 = sshll.u32 [#allocation2], 4
      %s25 = int_to_ptr.vmem [resolvable:$true] %s24
      %30 = dma.hbm_to_vmem [thread:$0]  %s23, 512, %s25, [#allocation3], 128, 128, 8
    $region5: #{tpu_custom_call.1} parent=1 // pred_fallthru
      _
    // Predicated region
    $region6: #{tpu_custom_call.1} parent=1 // pred_check
      _
    $region7: #{tpu_custom_call.1} parent=1 // pred_check_branch
      %32 = sbr.rel (0) target = $region9
    $region8: #{tpu_custom_call.1} parent=1 // pred_region
      %34 = vsyncadd [#allocation6], 0
      %s35 = sshll.u32 %s1, 4
      %s36 = int_to_ptr.hbm [resolvable:$true] %s35
      %s37 = sshll.u32 [#allocation5], 4
      %s38 = int_to_ptr.vmem [resolvable:$true] %s37
      %43 = dma.hbm_to_vmem [thread:$0]  %s36, 32, %s38, [#allocation6], 16, 16, 1
    $region9: #{tpu_custom_call.1} parent=1 // pred_fallthru
      _
    // Predicated region
    $region10: #{tpu_custom_call.1} parent=1 // pred_check
      _
    $region11: #{tpu_custom_call.1} parent=1 // pred_check_branch
      %45 = sbr.rel (0) target = $region13
    $region12: #{tpu_custom_call.1} parent=1 // pred_region
      %47 = vsyncadd [#allocation6], 0
      %s48 = sshll.u32 %s2, 4
      %s49 = int_to_ptr.hbm [resolvable:$true] %s48
      %s50 = sshll.u32 [#allocation7], 4
      %s51 = int_to_ptr.vmem [resolvable:$true] %s50
      %56 = dma.hbm_to_vmem [thread:$0]  %s49, 32, %s51, [#allocation6], 16, 16, 1
    $region13: #{tpu_custom_call.1} parent=1 // pred_fallthru
      _
    // Predicated region
    $region14: #{tpu_custom_call.1} parent=1 // pred_check
      _
    $region15: #{tpu_custom_call.1} parent=1 // pred_check_branch
      %58 = sbr.rel (0) target = $region17
    $region16: #{tpu_custom_call.1} parent=1 // pred_region
      %60 = vsyncadd [#allocation9], 0
      %s61 = sshll.u32 %s3, 4
      %s62 = int_to_ptr.hbm [resolvable:$true] %s61
      %s63 = sshll.u32 [#allocation8], 4
      %s64 = int_to_ptr.vmem [resolvable:$true] %s63
      %69 = dma.hbm_to_vmem [thread:$0]  %s62, 1024, %s64, [#allocation9], 128, 128, 8
    $region17: #{tpu_custom_call.1} parent=1 // pred_fallthru
      _
    // Predicated region
    $region18: #{tpu_custom_call.1} parent=1 // pred_check
      _
    $region19: #{tpu_custom_call.1} parent=1 // pred_check_branch
      %71 = sbr.rel (0) target = $region21
    $region20: #{tpu_custom_call.1} parent=1 // pred_region
      %73 = vsyncadd [#allocation9], 0
      %s74 = sshll.u32 %s4, 4
      %s75 = int_to_ptr.hbm [resolvable:$true] %s74
      %s76 = sshll.u32 [#allocation10], 4
      %s77 = int_to_ptr.vmem [resolvable:$true] %s76
      %82 = dma.hbm_to_vmem [thread:$0]  %s75, 1024, %s77, [#allocation9], 128, 128, 8
    $region21: #{tpu_custom_call.1} parent=1 // pred_fallthru
      _
    // Predicated region
    $region22: #{tpu_custom_call.1} parent=1 // pred_check
      _
    $region23: #{tpu_custom_call.1} parent=1 // pred_check_branch
      %84 = sbr.rel (0) target = $region25
    $region24: #{tpu_custom_call.1} parent=1 // pred_region
      %86 = vsyncadd [#allocation12], 0
      %s87 = sshll.u32 %s5, 4
      %s88 = int_to_ptr.hbm [resolvable:$true] %s87
      %s89 = sshll.u32 [#allocation11], 4
      %s90 = int_to_ptr.vmem [resolvable:$true] %s89
      %95 = dma.hbm_to_vmem [thread:$0]  %s88, 1024, %s90, [#allocation12], 128, 128, 8
    $region25: #{tpu_custom_call.1} parent=1 // pred_fallthru
      _
    // Predicated region
    $region26: #{tpu_custom_call.1} parent=1 // pred_check
      _
    $region27: #{tpu_custom_call.1} parent=1 // pred_check_branch
      %97 = sbr.rel (0) target = $region29
    $region28: #{tpu_custom_call.1} parent=1 // pred_region
      _
    $region29: #{tpu_custom_call.1} parent=1 // pred_fallthru
      _
    // Predicated region
    $region30: #{tpu_custom_call.1} parent=1 // pred_check
      _
    $region31: #{tpu_custom_call.1} parent=1 // pred_check_branch
      %99 = sbr.rel (0) target = $region33
    $region32: #{tpu_custom_call.1} parent=1 // pred_region
      %101 = vsyncadd [#allocation12], 0
      %s102 = sshll.u32 %s7, 4
      %s103 = int_to_ptr.hbm [resolvable:$true] %s102
      %s104 = sshll.u32 [#allocation13], 4
      %s105 = int_to_ptr.vmem [resolvable:$true] %s104
      %110 = dma.hbm_to_vmem [thread:$0]  %s103, 256, %s105, [#allocation12], 128, 128, 8
    $region33: #{tpu_custom_call.1} parent=1 // pred_fallthru
      _
    // Predicated region
    $region34: #{tpu_custom_call.1} parent=1 // pred_check
      _
    $region35: #{tpu_custom_call.1} parent=1 // pred_check_branch
      %112 = sbr.rel (0) target = $region37
    $region36: #{tpu_custom_call.1} parent=1 // pred_region
      %114 = dma.done [#allocation3], 512
    $region37: #{tpu_custom_call.1} parent=1 // pred_fallthru
      _
    // Predicated region
    $region38: #{tpu_custom_call.1} parent=1 // pred_check
      _
    $region39: #{tpu_custom_call.1} parent=1 // pred_check_branch
      %116 = sbr.rel (0) target = $region41
    $region40: #{tpu_custom_call.1} parent=1 // pred_region
      %118 = dma.done [#allocation6], 32
    $region41: #{tpu_custom_call.1} parent=1 // pred_fallthru
      _
    // Predicated region
    $region42: #{tpu_custom_call.1} parent=1 // pred_check
      _
    $region43: #{tpu_custom_call.1} parent=1 // pred_check_branch
      %120 = sbr.rel (0) target = $region45
    $region44: #{tpu_custom_call.1} parent=1 // pred_region
      %122 = dma.done [#allocation6], 32
    $region45: #{tpu_custom_call.1} parent=1 // pred_fallthru
      _
    // Predicated region
    $region46: #{tpu_custom_call.1} parent=1 // pred_check
      _
    $region47: #{tpu_custom_call.1} parent=1 // pred_check_branch
      %124 = sbr.rel (0) target = $region49
    $region48: #{tpu_custom_call.1} parent=1 // pred_region
      %126 = dma.done [#allocation9], 1024
    $region49: #{tpu_custom_call.1} parent=1 // pred_fallthru
      _
    // Predicated region
    $region50: #{tpu_custom_call.1} parent=1 // pred_check
      _
    $region51: #{tpu_custom_call.1} parent=1 // pred_check_branch
      %128 = sbr.rel (0) target = $region53
    $region52: #{tpu_custom_call.1} parent=1 // pred_region
      %130 = dma.done [#allocation9], 1024
    $region53: #{tpu_custom_call.1} parent=1 // pred_fallthru
      _
    // Predicated region
    $region54: #{tpu_custom_call.1} parent=1 // pred_check
      _
    $region55: #{tpu_custom_call.1} parent=1 // pred_check_branch
      %132 = sbr.rel (0) target = $region57
    $region56: #{tpu_custom_call.1} parent=1 // pred_region
      %134 = dma.done [#allocation12], 1024
    $region57: #{tpu_custom_call.1} parent=1 // pred_fallthru
      _
    // Predicated region
    $region58: #{tpu_custom_call.1} parent=1 // pred_check
      _
    $region59: #{tpu_custom_call.1} parent=1 // pred_check_branch
      %136 = sbr.rel (0) target = $region61
    $region60: #{tpu_custom_call.1} parent=1 // pred_region
      %138 = dma.done [#allocation12], 256
    $region61: #{tpu_custom_call.1} parent=1 // pred_fallthru
      _
    %v139 = vld [vmem:[#allocation2] sm:$0xff]
    %v140 = vld [vmem:[#allocation2 + $0x8] sm:$0xff]
    %v141 = vld [vmem:[#allocation2 + $0x10] sm:$0xff]
    %v142 = vld [vmem:[#allocation2 + $0x18] sm:$0xff]
    %v143 = vld [vmem:[#allocation13] sm:$0xff]
    %v144 = vld [vmem:[#allocation13 + $0x8] sm:$0xff]
    %v145 = vlaneseq
    %v146 = vand.u32 %v145, 127
    %vm147 = vcmp.ge.s32.totalorder %v146, 0
    %vm148 = vcmp.lt.s32.totalorder %v146, 8
    %vm149 = vmand %vm147, %vm148
    %v150 = vsel %vm149, 1, 0
    %v151 = vcvt.s32.f32 %v150
    %vm152 = vcmp.ge.s32.totalorder %v146, 8
    %vm153 = vcmp.lt.s32.totalorder %v146, 16
    %vm154 = vmand %vm152, %vm153
    %v155 = vsel %vm154, 1, 0
    %v156 = vcvt.s32.f32 %v155
    %vm157 = vcmp.ge.s32.totalorder %v146, 16
    %vm158 = vcmp.lt.s32.totalorder %v146, 24
    %vm159 = vmand %vm157, %vm158
    %v160 = vsel %vm159, 1, 0
    %v161 = vcvt.s32.f32 %v160
    %vm162 = vcmp.ge.s32.totalorder %v146, 24
    %vm163 = vcmp.lt.s32.totalorder %v146, 32
    %vm164 = vmand %vm162, %vm163
    %v165 = vsel %vm164, 1, 0
    %v166 = vcvt.s32.f32 %v165
    %vm167 = vcmask 261120
    %v168 = vsel %vm167, %v139, 0.0
    %169 = vadd.xlane.f32.xlu0 %v168
    %v170 = vpop.xlane.xlu0 %169
    %v171 = vsel %vm167, %v140, 0.0
    %172 = vadd.xlane.f32.xlu0 %v171
    %v173 = vpop.xlane.xlu0 %172
    %v174 = vsel %vm167, %v141, 0.0
    %175 = vadd.xlane.f32.xlu0 %v174
    %v176 = vpop.xlane.xlu0 %175
    %v177 = vsel %vm167, %v142, 0.0
    %178 = vadd.xlane.f32.xlu0 %v177
    %v179 = vpop.xlane.xlu0 %178
    %v180 = vrcp.pop 32.0
    %v181 = vmul.f32 32.0, %v180
    %v182 = vsub.f32 1.0, %v181
    %v183 = vmul.f32 %v180, %v182
    %v184 = vadd.f32 %v180, %v183
    %vm185 = vweird.f32 %v180
    %v186 = vsel %vm185, %v180, %v184
    %v187 = vmul.f32 %v170, %v186
    %v188 = vmul.f32 %v173, %v186
    %v189 = vmul.f32 %v176, %v186
    %v190 = vmul.f32 %v179, %v186
    %v191 = vsub.f32 %v139, %v187
    %v192 = vsub.f32 %v140, %v188
    %v193 = vsub.f32 %v141, %v189
    %v194 = vsub.f32 %v142, %v190
    %v195 = vmul.f32 %v191, %v191
    %v196 = vmul.f32 %v192, %v192
    %v197 = vmul.f32 %v193, %v193
    %v198 = vmul.f32 %v194, %v194
    %v199 = vsel %vm167, %v195, 0.0
    %200 = vadd.xlane.f32.xlu0 %v199
    %v201 = vpop.xlane.xlu0 %200
    %v202 = vsel %vm167, %v196, 0.0
    %203 = vadd.xlane.f32.xlu0 %v202
    %v204 = vpop.xlane.xlu0 %203
    %v205 = vsel %vm167, %v197, 0.0
    %206 = vadd.xlane.f32.xlu0 %v205
    %v207 = vpop.xlane.xlu0 %206
    %v208 = vsel %vm167, %v198, 0.0
    %209 = vadd.xlane.f32.xlu0 %v208
    %v210 = vpop.xlane.xlu0 %209
    %v211 = vmul.f32 %v201, %v186
    %v212 = vmul.f32 %v204, %v186
    %v213 = vmul.f32 %v207, %v186
    %v214 = vmul.f32 %v210, %v186
    %v215 = vadd.f32 %v211, 1e-05
    %v216 = vadd.f32 %v212, 1e-05
    %v217 = vadd.f32 %v213, 1e-05
    %v218 = vadd.f32 %v214, 1e-05
    %v219 = vrsqrt.pop %v215
    %v220 = vmul.f32 %v219, %v215
    %v221 = vmul.f32 %v220, %v219
    %v222 = vmul.f32 0.5, %v221
    %v223 = vsub.f32 1.5, %v222
    %v224 = vmul.f32 %v219, %v223
    %vm225 = vweird.f32 %v215
    %vm226 = vweird.f32 %v219
    %vm227 = vmor %vm225, %vm226
    %v228 = vsel %vm227, %v219, %v224
    %v229 = vrsqrt.pop %v216
    %v230 = vmul.f32 %v229, %v216
    %v231 = vmul.f32 %v230, %v229
    %v232 = vmul.f32 0.5, %v231
    %v233 = vsub.f32 1.5, %v232
    %v234 = vmul.f32 %v229, %v233
    %vm235 = vweird.f32 %v216
    %vm236 = vweird.f32 %v229
    %vm237 = vmor %vm235, %vm236
    %v238 = vsel %vm237, %v229, %v234
    %v239 = vrsqrt.pop %v217
    %v240 = vmul.f32 %v239, %v217
    %v241 = vmul.f32 %v240, %v239
    %v242 = vmul.f32 0.5, %v241
    %v243 = vsub.f32 1.5, %v242
    %v244 = vmul.f32 %v239, %v243
    %vm245 = vweird.f32 %v217
    %vm246 = vweird.f32 %v239
    %vm247 = vmor %vm245, %vm246
    %v248 = vsel %vm247, %v239, %v244
    %v249 = vrsqrt.pop %v218
    %v250 = vmul.f32 %v249, %v218
    %v251 = vmul.f32 %v250, %v249
    %v252 = vmul.f32 0.5, %v251
    %v253 = vsub.f32 1.5, %v252
    %v254 = vmul.f32 %v249, %v253
    %vm255 = vweird.f32 %v218
    %vm256 = vweird.f32 %v249
    %vm257 = vmor %vm255, %vm256
    %v258 = vsel %vm257, %v249, %v254
    %v259 = vmul.f32 %v191, %v228
    %v260 = vmul.f32 %v192, %v238
    %v261 = vmul.f32 %v193, %v248
    %v262 = vmul.f32 %v194, %v258
    %v263 = vld [vmem:[#allocation5] sm:$0x1]
    %v265 = vperm.slane %v263, 0
    %v267 = vmul.f32 %v259, %v265
    %v268 = vmul.f32 %v260, %v265
    %v269 = vmul.f32 %v261, %v265
    %v270 = vmul.f32 %v262, %v265
    %v271 = vld [vmem:[#allocation7] sm:$0x1]
    %v273 = vperm.slane %v271, 0
    %v275 = vadd.f32 %v267, %v273
    %v276 = vadd.f32 %v268, %v273
    %v277 = vadd.f32 %v269, %v273
    %v278 = vadd.f32 %v270, %v273
    %v279 = vld [vmem:[#allocation8] sm:$0xff]
    %v280 = vld [vmem:[#allocation8 + $0x8] sm:$0xff]
    %v281 = vld [vmem:[#allocation8 + $0x10] sm:$0xff]
    %v282 = vld [vmem:[#allocation8 + $0x18] sm:$0xff]
    %v284 = vsel %vm167, %v275, 0
    %v287 = vsel %vm167, %v276, 0
    %v290 = vsel %vm167, %v277, 0
    %v293 = vsel %vm167, %v278, 0
    %295 = vmatpush.msra.mxu0 0.0
    %296 = vmatpush.msra.mxu0 0.0
    %297 = vmatpush.msra.mxu0 0.0
    %298 = vmatpush.msra.mxu0 0.0
    %299 = vmatpush.msra.mxu0 0.0
    %300 = vmatpush.msra.mxu0 0.0
    %301 = vmatpush.msra.mxu0 0.0
    %302 = vmatpush.msra.mxu0 0.0
    %303 = vmatpush.msra.mxu0 0.0
    %304 = vmatpush.msra.mxu0 0.0
    %305 = vmatpush.msra.mxu0 0.0
    %306 = vmatpush.msra.mxu0 0.0
    %307 = vmatpush.msra.mxu0 %v282
    %308 = vmatpush.msra.mxu0 %v281
    %309 = vmatpush.msra.mxu0 %v280
    %310 = vmatpush.msra.mxu0 %v279
    %311 = vmatmul.f32.gmra.mxu0 %v284
    %v312 = vpop.f32.mrf.mxu0
    %v313 = vadd.f32 0.0, %v312
    %314 = vmatmul.f32.gmra.mxu0 %v287
    %v315 = vpop.f32.mrf.mxu0
    %v316 = vadd.f32 0.0, %v315
    %317 = vmatmul.f32.gmra.mxu0 %v290
    %v318 = vpop.f32.mrf.mxu0
    %v319 = vadd.f32 0.0, %v318
    %320 = vmatmul.f32.gmra.mxu0 %v293
    %v321 = vpop.f32.mrf.mxu0
    %v322 = vadd.f32 0.0, %v321
    %323 = vdwg.mxu0
    %v324 = vmul.f32 %v313, %v151
    %v325 = vmul.f32 %v316, %v151
    %v326 = vmul.f32 %v319, %v151
    %v327 = vmul.f32 %v322, %v151
    %330 = vrot.lane.b32.xlu0 %v313, 96
    %v331 = vpop.permute.xlu0 %330
    %332 = vrot.lane.b32.xlu0 %v316, 96
    %v333 = vpop.permute.xlu0 %332
    %v335 = vsel %vm167, %v324, 0
    %v338 = vsel %vm167, %v325, 0
    %v340 = vsel %vm167, %v331, 0
    %v342 = vsel %vm167, %v333, 0
    %344 = vmatpush.xpose.msra.mxu0 0.0
    %345 = vmatpush.xpose.msra.mxu0 0.0
    %346 = vmatpush.xpose.msra.mxu0 0.0
    %347 = vmatpush.xpose.msra.mxu0 0.0
    %348 = vmatpush.xpose.msra.mxu0 0.0
    %349 = vmatpush.xpose.msra.mxu0 0.0
    %350 = vmatpush.xpose.msra.mxu0 0.0
    %351 = vmatpush.xpose.msra.mxu0 0.0
    %352 = vmatpush.xpose.msra.mxu0 0.0
    %353 = vmatpush.xpose.msra.mxu0 0.0
    %354 = vmatpush.xpose.msra.mxu0 0.0
    %355 = vmatpush.xpose.msra.mxu0 0.0
    %356 = vmatpush.xpose.msra.mxu0 0.0
    %357 = vmatpush.xpose.msra.mxu0 0.0
    %358 = vmatpush.xpose.msra.mxu0 %v342
    %359 = vmatpush.xpose.msra.mxu0 %v340
    %360 = vmatmul.f32.gmra.mxu0 %v335
    %v361 = vpop.f32.mrf.mxu0
    %v362 = vadd.f32 0.0, %v361
    %363 = vmatmul.f32.gmra.mxu0 %v338
    %v364 = vpop.f32.mrf.mxu0
    %v365 = vadd.f32 0.0, %v364
    %366 = vdwg.mxu0
    %369 = vrot.lane.b32.xlu0 %v319, 96
    %v370 = vpop.permute.xlu0 %369
    %371 = vrot.lane.b32.xlu0 %v322, 96
    %v372 = vpop.permute.xlu0 %371
    %v374 = vsel %vm167, %v326, 0
    %v377 = vsel %vm167, %v327, 0
    %v379 = vsel %vm167, %v370, 0
    %v381 = vsel %vm167, %v372, 0
    %383 = vmatpush.xpose.msra.mxu0 0.0
    %384 = vmatpush.xpose.msra.mxu0 0.0
    %385 = vmatpush.xpose.msra.mxu0 0.0
    %386 = vmatpush.xpose.msra.mxu0 0.0
    %387 = vmatpush.xpose.msra.mxu0 0.0
    %388 = vmatpush.xpose.msra.mxu0 0.0
    %389 = vmatpush.xpose.msra.mxu0 0.0
    %390 = vmatpush.xpose.msra.mxu0 0.0
    %391 = vmatpush.xpose.msra.mxu0 0.0
    %392 = vmatpush.xpose.msra.mxu0 0.0
    %393 = vmatpush.xpose.msra.mxu0 0.0
    %394 = vmatpush.xpose.msra.mxu0 0.0
    %395 = vmatpush.xpose.msra.mxu0 0.0
    %396 = vmatpush.xpose.msra.mxu0 0.0
    %397 = vmatpush.xpose.msra.mxu0 %v381
    %398 = vmatpush.xpose.msra.mxu0 %v379
    %399 = vmatmul.f32.gmra.mxu0 %v374
    %v400 = vpop.f32.mrf.mxu0
    %v401 = vadd.f32 0.0, %v400
    %402 = vmatmul.f32.gmra.mxu0 %v377
    %v403 = vpop.f32.mrf.mxu0
    %v404 = vadd.f32 0.0, %v403
    %405 = vdwg.mxu0
    %v406 = vmul.f32 %v362, 0.35355338
    %v407 = vmul.f32 %v365, 0.35355338
    %v408 = vmul.f32 %v401, 0.35355338
    %v409 = vmul.f32 %v404, 0.35355338
    %vm410 = vcmask 130048
    %v411 = vsel %vm410, %v406, -inf
    %412 = vmax.xlane.f32.xlu0 %v411
    %v413 = vpop.xlane.xlu0 %412
    %v414 = vsel %vm410, %v407, -inf
    %415 = vmax.xlane.f32.xlu0 %v414
    %v416 = vpop.xlane.xlu0 %415
    %v417 = vsel %vm410, %v408, -inf
    %418 = vmax.xlane.f32.xlu0 %v417
    %v419 = vpop.xlane.xlu0 %418
    %v420 = vsel %vm410, %v409, -inf
    %421 = vmax.xlane.f32.xlu0 %v420
    %v422 = vpop.xlane.xlu0 %421
    %v423 = vsub.f32 %v406, %v413
    %v424 = vsub.f32 %v407, %v416
    %v425 = vsub.f32 %v408, %v419
    %v426 = vsub.f32 %v409, %v422
    %v427 = vmul.f32 %v423, 1.442695
    %v428 = vpow.pop %v427
    %v429 = vmul.f32 %v424, 1.442695
    %v430 = vpow.pop %v429
    %v431 = vmul.f32 %v425, 1.442695
    %v432 = vpow.pop %v431
    %v433 = vmul.f32 %v426, 1.442695
    %v434 = vpow.pop %v433
    %v435 = vsel %vm410, %v428, 0.0
    %436 = vadd.xlane.f32.xlu0 %v435
    %v437 = vpop.xlane.xlu0 %436
    %v438 = vsel %vm410, %v430, 0.0
    %439 = vadd.xlane.f32.xlu0 %v438
    %v440 = vpop.xlane.xlu0 %439
    %v441 = vsel %vm410, %v432, 0.0
    %442 = vadd.xlane.f32.xlu0 %v441
    %v443 = vpop.xlane.xlu0 %442
    %v444 = vsel %vm410, %v434, 0.0
    %445 = vadd.xlane.f32.xlu0 %v444
    %v446 = vpop.xlane.xlu0 %445
    %v447 = vrcp.pop %v437
    %v448 = vrcp.pop %v440
    %v449 = vrcp.pop %v443
    %v450 = vrcp.pop %v446
    %v451 = vmul.f32 %v428, %v447
    %v452 = vmul.f32 %v430, %v448
    %v453 = vmul.f32 %v432, %v449
    %v454 = vmul.f32 %v434, %v450
    %455 = vrot.lane.b32.xlu0 %v313, 64
    %v456 = vpop.permute.xlu0 %455
    %457 = vrot.lane.b32.xlu0 %v316, 64
    %v458 = vpop.permute.xlu0 %457
    %v462 = vsel %vm410, %v451, 0
    %v465 = vsel %vm410, %v452, 0
    %467 = vmatpush.msra.mxu0 0.0
    %468 = vmatpush.msra.mxu0 0.0
    %469 = vmatpush.msra.mxu0 0.0
    %470 = vmatpush.msra.mxu0 0.0
    %471 = vmatpush.msra.mxu0 0.0
    %472 = vmatpush.msra.mxu0 0.0
    %473 = vmatpush.msra.mxu0 0.0
    %474 = vmatpush.msra.mxu0 0.0
    %475 = vmatpush.msra.mxu0 0.0
    %476 = vmatpush.msra.mxu0 0.0
    %477 = vmatpush.msra.mxu0 0.0
    %478 = vmatpush.msra.mxu0 0.0
    %479 = vmatpush.msra.mxu0 0.0
    %480 = vmatpush.msra.mxu0 0.0
    %481 = vmatpush.msra.mxu0 %v458
    %482 = vmatpush.msra.mxu0 %v456
    %483 = vmatmul.f32.gmra.mxu0 %v462
    %v484 = vpop.f32.mrf.mxu0
    %v485 = vadd.f32 0.0, %v484
    %486 = vmatmul.f32.gmra.mxu0 %v465
    %v487 = vpop.f32.mrf.mxu0
    %v488 = vadd.f32 0.0, %v487
    %489 = vdwg.mxu0
    %490 = vrot.lane.b32.xlu0 %v319, 64
    %v491 = vpop.permute.xlu0 %490
    %492 = vrot.lane.b32.xlu0 %v322, 64
    %v493 = vpop.permute.xlu0 %492
    %v497 = vsel %vm410, %v453, 0
    %v500 = vsel %vm410, %v454, 0
    %502 = vmatpush.msra.mxu0 0.0
    %503 = vmatpush.msra.mxu0 0.0
    %504 = vmatpush.msra.mxu0 0.0
    %505 = vmatpush.msra.mxu0 0.0
    %506 = vmatpush.msra.mxu0 0.0
    %507 = vmatpush.msra.mxu0 0.0
    %508 = vmatpush.msra.mxu0 0.0
    %509 = vmatpush.msra.mxu0 0.0
    %510 = vmatpush.msra.mxu0 0.0
    %511 = vmatpush.msra.mxu0 0.0
    %512 = vmatpush.msra.mxu0 0.0
    %513 = vmatpush.msra.mxu0 0.0
    %514 = vmatpush.msra.mxu0 0.0
    %515 = vmatpush.msra.mxu0 0.0
    %516 = vmatpush.msra.mxu0 %v493
    %517 = vmatpush.msra.mxu0 %v491
    %518 = vmatmul.f32.gmra.mxu0 %v497
    %v519 = vpop.f32.mrf.mxu0
    %v520 = vadd.f32 0.0, %v519
    %521 = vmatmul.f32.gmra.mxu0 %v500
    %v522 = vpop.f32.mrf.mxu0
    %v523 = vadd.f32 0.0, %v522
    %524 = vdwg.mxu0
    %v525 = vmul.f32 %v151, %v485
    %v526 = vmul.f32 %v151, %v488
    %v527 = vmul.f32 %v151, %v520
    %v528 = vmul.f32 %v151, %v523
    %v529 = vadd.f32 %v525, 0.0
    %v530 = vadd.f32 %v526, 0.0
    %v531 = vadd.f32 %v527, 0.0
    %v532 = vadd.f32 %v528, 0.0
    %v533 = vmul.f32 %v313, %v156
    %v534 = vmul.f32 %v316, %v156
    %v535 = vmul.f32 %v319, %v156
    %v536 = vmul.f32 %v322, %v156
    %v538 = vsel %vm167, %v533, 0
    %v541 = vsel %vm167, %v534, 0
    %543 = vmatpush.xpose.msra.mxu0 0.0
    %544 = vmatpush.xpose.msra.mxu0 0.0
    %545 = vmatpush.xpose.msra.mxu0 0.0
    %546 = vmatpush.xpose.msra.mxu0 0.0
    %547 = vmatpush.xpose.msra.mxu0 0.0
    %548 = vmatpush.xpose.msra.mxu0 0.0
    %549 = vmatpush.xpose.msra.mxu0 0.0
    %550 = vmatpush.xpose.msra.mxu0 0.0
    %551 = vmatpush.xpose.msra.mxu0 0.0
    %552 = vmatpush.xpose.msra.mxu0 0.0
    %553 = vmatpush.xpose.msra.mxu0 0.0
    %554 = vmatpush.xpose.msra.mxu0 0.0
    %555 = vmatpush.xpose.msra.mxu0 0.0
    %556 = vmatpush.xpose.msra.mxu0 0.0
    %557 = vmatpush.xpose.msra.mxu0 %v342
    %558 = vmatpush.xpose.msra.mxu0 %v340
    %559 = vmatmul.f32.gmra.mxu0 %v538
    %v560 = vpop.f32.mrf.mxu0
    %v561 = vadd.f32 0.0, %v560
    %562 = vmatmul.f32.gmra.mxu0 %v541
    %v563 = vpop.f32.mrf.mxu0
    %v564 = vadd.f32 0.0, %v563
    %565 = vdwg.mxu0
    %v567 = vsel %vm167, %v535, 0
    %v570 = vsel %vm167, %v536, 0
    %572 = vmatpush.xpose.msra.mxu0 0.0
    %573 = vmatpush.xpose.msra.mxu0 0.0
    %574 = vmatpush.xpose.msra.mxu0 0.0
    %575 = vmatpush.xpose.msra.mxu0 0.0
    %576 = vmatpush.xpose.msra.mxu0 0.0
    %577 = vmatpush.xpose.msra.mxu0 0.0
    %578 = vmatpush.xpose.msra.mxu0 0.0
    %579 = vmatpush.xpose.msra.mxu0 0.0
    %580 = vmatpush.xpose.msra.mxu0 0.0
    %581 = vmatpush.xpose.msra.mxu0 0.0
    %582 = vmatpush.xpose.msra.mxu0 0.0
    %583 = vmatpush.xpose.msra.mxu0 0.0
    %584 = vmatpush.xpose.msra.mxu0 0.0
    %585 = vmatpush.xpose.msra.mxu0 0.0
    %586 = vmatpush.xpose.msra.mxu0 %v381
    %587 = vmatpush.xpose.msra.mxu0 %v379
    %588 = vmatmul.f32.gmra.mxu0 %v567
    %v589 = vpop.f32.mrf.mxu0
    %v590 = vadd.f32 0.0, %v589
    %591 = vmatmul.f32.gmra.mxu0 %v570
    %v592 = vpop.f32.mrf.mxu0
    %v593 = vadd.f32 0.0, %v592
    %594 = vdwg.mxu0
    %v595 = vmul.f32 %v561, 0.35355338
    %v596 = vmul.f32 %v564, 0.35355338
    %v597 = vmul.f32 %v590, 0.35355338
    %v598 = vmul.f32 %v593, 0.35355338
    %v599 = vsel %vm410, %v595, -inf
    %600 = vmax.xlane.f32.xlu0 %v599
    %v601 = vpop.xlane.xlu0 %600
    %v602 = vsel %vm410, %v596, -inf
    %603 = vmax.xlane.f32.xlu0 %v602
    %v604 = vpop.xlane.xlu0 %603
    %v605 = vsel %vm410, %v597, -inf
    %606 = vmax.xlane.f32.xlu0 %v605
    %v607 = vpop.xlane.xlu0 %606
    %v608 = vsel %vm410, %v598, -inf
    %609 = vmax.xlane.f32.xlu0 %v608
    %v610 = vpop.xlane.xlu0 %609
    %v611 = vsub.f32 %v595, %v601
    %v612 = vsub.f32 %v596, %v604
    %v613 = vsub.f32 %v597, %v607
    %v614 = vsub.f32 %v598, %v610
    %v615 = vmul.f32 %v611, 1.442695
    %v616 = vpow.pop %v615
    %v617 = vmul.f32 %v612, 1.442695
    %v618 = vpow.pop %v617
    %v619 = vmul.f32 %v613, 1.442695
    %v620 = vpow.pop %v619
    %v621 = vmul.f32 %v614, 1.442695
    %v622 = vpow.pop %v621
    %v623 = vsel %vm410, %v616, 0.0
    %624 = vadd.xlane.f32.xlu0 %v623
    %v625 = vpop.xlane.xlu0 %624
    %v626 = vsel %vm410, %v618, 0.0
    %627 = vadd.xlane.f32.xlu0 %v626
    %v628 = vpop.xlane.xlu0 %627
    %v629 = vsel %vm410, %v620, 0.0
    %630 = vadd.xlane.f32.xlu0 %v629
    %v631 = vpop.xlane.xlu0 %630
    %v632 = vsel %vm410, %v622, 0.0
    %633 = vadd.xlane.f32.xlu0 %v632
    %v634 = vpop.xlane.xlu0 %633
    %v635 = vrcp.pop %v625
    %v636 = vrcp.pop %v628
    %v637 = vrcp.pop %v631
    %v638 = vrcp.pop %v634
    %v639 = vmul.f32 %v616, %v635
    %v640 = vmul.f32 %v618, %v636
    %v641 = vmul.f32 %v620, %v637
    %v642 = vmul.f32 %v622, %v638
    %v644 = vsel %vm410, %v639, 0
    %v647 = vsel %vm410, %v640, 0
    %649 = vmatpush.msra.mxu0 0.0
    %650 = vmatpush.msra.mxu0 0.0
    %651 = vmatpush.msra.mxu0 0.0
    %652 = vmatpush.msra.mxu0 0.0
    %653 = vmatpush.msra.mxu0 0.0
    %654 = vmatpush.msra.mxu0 0.0
    %655 = vmatpush.msra.mxu0 0.0
    %656 = vmatpush.msra.mxu0 0.0
    %657 = vmatpush.msra.mxu0 0.0
    %658 = vmatpush.msra.mxu0 0.0
    %659 = vmatpush.msra.mxu0 0.0
    %660 = vmatpush.msra.mxu0 0.0
    %661 = vmatpush.msra.mxu0 0.0
    %662 = vmatpush.msra.mxu0 0.0
    %663 = vmatpush.msra.mxu0 %v458
    %664 = vmatpush.msra.mxu0 %v456
    %665 = vmatmul.f32.gmra.mxu0 %v644
    %v666 = vpop.f32.mrf.mxu0
    %v667 = vadd.f32 0.0, %v666
    %668 = vmatmul.f32.gmra.mxu0 %v647
    %v669 = vpop.f32.mrf.mxu0
    %v670 = vadd.f32 0.0, %v669
    %671 = vdwg.mxu0
    %v673 = vsel %vm410, %v641, 0
    %v676 = vsel %vm410, %v642, 0
    %678 = vmatpush.msra.mxu0 0.0
    %679 = vmatpush.msra.mxu0 0.0
    %680 = vmatpush.msra.mxu0 0.0
    %681 = vmatpush.msra.mxu0 0.0
    %682 = vmatpush.msra.mxu0 0.0
    %683 = vmatpush.msra.mxu0 0.0
    %684 = vmatpush.msra.mxu0 0.0
    %685 = vmatpush.msra.mxu0 0.0
    %686 = vmatpush.msra.mxu0 0.0
    %687 = vmatpush.msra.mxu0 0.0
    %688 = vmatpush.msra.mxu0 0.0
    %689 = vmatpush.msra.mxu0 0.0
    %690 = vmatpush.msra.mxu0 0.0
    %691 = vmatpush.msra.mxu0 0.0
    %692 = vmatpush.msra.mxu0 %v493
    %693 = vmatpush.msra.mxu0 %v491
    %694 = vmatmul.f32.gmra.mxu0 %v673
    %v695 = vpop.f32.mrf.mxu0
    %v696 = vadd.f32 0.0, %v695
    %697 = vmatmul.f32.gmra.mxu0 %v676
    %v698 = vpop.f32.mrf.mxu0
    %v699 = vadd.f32 0.0, %v698
    %700 = vdwg.mxu0
    %v701 = vmul.f32 %v156, %v667
    %v702 = vmul.f32 %v156, %v670
    %v703 = vmul.f32 %v156, %v696
    %v704 = vmul.f32 %v156, %v699
    %v705 = vadd.f32 %v529, %v701
    %v706 = vadd.f32 %v530, %v702
    %v707 = vadd.f32 %v531, %v703
    %v708 = vadd.f32 %v532, %v704
    %v709 = vmul.f32 %v313, %v161
    %v710 = vmul.f32 %v316, %v161
    %v711 = vmul.f32 %v319, %v161
    %v712 = vmul.f32 %v322, %v161
    %v714 = vsel %vm167, %v709, 0
    %v717 = vsel %vm167, %v710, 0
    %719 = vmatpush.xpose.msra.mxu0 0.0
    %720 = vmatpush.xpose.msra.mxu0 0.0
    %721 = vmatpush.xpose.msra.mxu0 0.0
    %722 = vmatpush.xpose.msra.mxu0 0.0
    %723 = vmatpush.xpose.msra.mxu0 0.0
    %724 = vmatpush.xpose.msra.mxu0 0.0
    %725 = vmatpush.xpose.msra.mxu0 0.0
    %726 = vmatpush.xpose.msra.mxu0 0.0
    %727 = vmatpush.xpose.msra.mxu0 0.0
    %728 = vmatpush.xpose.msra.mxu0 0.0
    %729 = vmatpush.xpose.msra.mxu0 0.0
    %730 = vmatpush.xpose.msra.mxu0 0.0
    %731 = vmatpush.xpose.msra.mxu0 0.0
    %732 = vmatpush.xpose.msra.mxu0 0.0
    %733 = vmatpush.xpose.msra.mxu0 %v342
    %734 = vmatpush.xpose.msra.mxu0 %v340
    %735 = vmatmul.f32.gmra.mxu0 %v714
    %v736 = vpop.f32.mrf.mxu0
    %v737 = vadd.f32 0.0, %v736
    %738 = vmatmul.f32.gmra.mxu0 %v717
    %v739 = vpop.f32.mrf.mxu0
    %v740 = vadd.f32 0.0, %v739
    %741 = vdwg.mxu0
    %v743 = vsel %vm167, %v711, 0
    %v746 = vsel %vm167, %v712, 0
    %748 = vmatpush.xpose.msra.mxu0 0.0
    %749 = vmatpush.xpose.msra.mxu0 0.0
    %750 = vmatpush.xpose.msra.mxu0 0.0
    %751 = vmatpush.xpose.msra.mxu0 0.0
    %752 = vmatpush.xpose.msra.mxu0 0.0
    %753 = vmatpush.xpose.msra.mxu0 0.0
    %754 = vmatpush.xpose.msra.mxu0 0.0
    %755 = vmatpush.xpose.msra.mxu0 0.0
    %756 = vmatpush.xpose.msra.mxu0 0.0
    %757 = vmatpush.xpose.msra.mxu0 0.0
    %758 = vmatpush.xpose.msra.mxu0 0.0
    %759 = vmatpush.xpose.msra.mxu0 0.0
    %760 = vmatpush.xpose.msra.mxu0 0.0
    %761 = vmatpush.xpose.msra.mxu0 0.0
    %762 = vmatpush.xpose.msra.mxu0 %v381
    %763 = vmatpush.xpose.msra.mxu0 %v379
    %764 = vmatmul.f32.gmra.mxu0 %v743
    %v765 = vpop.f32.mrf.mxu0
    %v766 = vadd.f32 0.0, %v765
    %767 = vmatmul.f32.gmra.mxu0 %v746
    %v768 = vpop.f32.mrf.mxu0
    %v769 = vadd.f32 0.0, %v768
    %770 = vdwg.mxu0
    %v771 = vmul.f32 %v737, 0.35355338
    %v772 = vmul.f32 %v740, 0.35355338
    %v773 = vmul.f32 %v766, 0.35355338
    %v774 = vmul.f32 %v769, 0.35355338
    %v775 = vsel %vm410, %v771, -inf
    %776 = vmax.xlane.f32.xlu0 %v775
    %v777 = vpop.xlane.xlu0 %776
    %v778 = vsel %vm410, %v772, -inf
    %779 = vmax.xlane.f32.xlu0 %v778
    %v780 = vpop.xlane.xlu0 %779
    %v781 = vsel %vm410, %v773, -inf
    %782 = vmax.xlane.f32.xlu0 %v781
    %v783 = vpop.xlane.xlu0 %782
    %v784 = vsel %vm410, %v774, -inf
    %785 = vmax.xlane.f32.xlu0 %v784
    %v786 = vpop.xlane.xlu0 %785
    %v787 = vsub.f32 %v771, %v777
    %v788 = vsub.f32 %v772, %v780
    %v789 = vsub.f32 %v773, %v783
    %v790 = vsub.f32 %v774, %v786
    %v791 = vmul.f32 %v787, 1.442695
    %v792 = vpow.pop %v791
    %v793 = vmul.f32 %v788, 1.442695
    %v794 = vpow.pop %v793
    %v795 = vmul.f32 %v789, 1.442695
    %v796 = vpow.pop %v795
    %v797 = vmul.f32 %v790, 1.442695
    %v798 = vpow.pop %v797
    %v799 = vsel %vm410, %v792, 0.0
    %800 = vadd.xlane.f32.xlu0 %v799
    %v801 = vpop.xlane.xlu0 %800
    %v802 = vsel %vm410, %v794, 0.0
    %803 = vadd.xlane.f32.xlu0 %v802
    %v804 = vpop.xlane.xlu0 %803
    %v805 = vsel %vm410, %v796, 0.0
    %806 = vadd.xlane.f32.xlu0 %v805
    %v807 = vpop.xlane.xlu0 %806
    %v808 = vsel %vm410, %v798, 0.0
    %809 = vadd.xlane.f32.xlu0 %v808
    %v810 = vpop.xlane.xlu0 %809
    %v811 = vrcp.pop %v801
    %v812 = vrcp.pop %v804
    %v813 = vrcp.pop %v807
    %v814 = vrcp.pop %v810
    %v815 = vmul.f32 %v792, %v811
    %v816 = vmul.f32 %v794, %v812
    %v817 = vmul.f32 %v796, %v813
    %v818 = vmul.f32 %v798, %v814
    %v820 = vsel %vm410, %v815, 0
    %v823 = vsel %vm410, %v816, 0
    %825 = vmatpush.msra.mxu0 0.0
    %826 = vmatpush.msra.mxu0 0.0
    %827 = vmatpush.msra.mxu0 0.0
    %828 = vmatpush.msra.mxu0 0.0
    %829 = vmatpush.msra.mxu0 0.0
    %830 = vmatpush.msra.mxu0 0.0
    %831 = vmatpush.msra.mxu0 0.0
    %832 = vmatpush.msra.mxu0 0.0
    %833 = vmatpush.msra.mxu0 0.0
    %834 = vmatpush.msra.mxu0 0.0
    %835 = vmatpush.msra.mxu0 0.0
    %836 = vmatpush.msra.mxu0 0.0
    %837 = vmatpush.msra.mxu0 0.0
    %838 = vmatpush.msra.mxu0 0.0
    %839 = vmatpush.msra.mxu0 %v458
    %840 = vmatpush.msra.mxu0 %v456
    %841 = vmatmul.f32.gmra.mxu0 %v820
    %v842 = vpop.f32.mrf.mxu0
    %v843 = vadd.f32 0.0, %v842
    %844 = vmatmul.f32.gmra.mxu0 %v823
    %v845 = vpop.f32.mrf.mxu0
    %v846 = vadd.f32 0.0, %v845
    %847 = vdwg.mxu0
    %v849 = vsel %vm410, %v817, 0
    %v852 = vsel %vm410, %v818, 0
    %854 = vmatpush.msra.mxu0 0.0
    %855 = vmatpush.msra.mxu0 0.0
    %856 = vmatpush.msra.mxu0 0.0
    %857 = vmatpush.msra.mxu0 0.0
    %858 = vmatpush.msra.mxu0 0.0
    %859 = vmatpush.msra.mxu0 0.0
    %860 = vmatpush.msra.mxu0 0.0
    %861 = vmatpush.msra.mxu0 0.0
    %862 = vmatpush.msra.mxu0 0.0
    %863 = vmatpush.msra.mxu0 0.0
    %864 = vmatpush.msra.mxu0 0.0
    %865 = vmatpush.msra.mxu0 0.0
    %866 = vmatpush.msra.mxu0 0.0
    %867 = vmatpush.msra.mxu0 0.0
    %868 = vmatpush.msra.mxu0 %v493
    %869 = vmatpush.msra.mxu0 %v491
    %870 = vmatmul.f32.gmra.mxu0 %v849
    %v871 = vpop.f32.mrf.mxu0
    %v872 = vadd.f32 0.0, %v871
    %873 = vmatmul.f32.gmra.mxu0 %v852
    %v874 = vpop.f32.mrf.mxu0
    %v875 = vadd.f32 0.0, %v874
    %876 = vdwg.mxu0
    %v877 = vmul.f32 %v161, %v843
    %v878 = vmul.f32 %v161, %v846
    %v879 = vmul.f32 %v161, %v872
    %v880 = vmul.f32 %v161, %v875
    %v881 = vadd.f32 %v705, %v877
    %v882 = vadd.f32 %v706, %v878
    %v883 = vadd.f32 %v707, %v879
    %v884 = vadd.f32 %v708, %v880
    %v885 = vmul.f32 %v313, %v166
    %v886 = vmul.f32 %v316, %v166
    %v887 = vmul.f32 %v319, %v166
    %v888 = vmul.f32 %v322, %v166
    %v890 = vsel %vm167, %v885, 0
    %v893 = vsel %vm167, %v886, 0
    %895 = vmatpush.xpose.msra.mxu0 0.0
    %896 = vmatpush.xpose.msra.mxu0 0.0
    %897 = vmatpush.xpose.msra.mxu0 0.0
    %898 = vmatpush.xpose.msra.mxu0 0.0
    %899 = vmatpush.xpose.msra.mxu0 0.0
    %900 = vmatpush.xpose.msra.mxu0 0.0
    %901 = vmatpush.xpose.msra.mxu0 0.0
    %902 = vmatpush.xpose.msra.mxu0 0.0
    %903 = vmatpush.xpose.msra.mxu0 0.0
    %904 = vmatpush.xpose.msra.mxu0 0.0
    %905 = vmatpush.xpose.msra.mxu0 0.0
    %906 = vmatpush.xpose.msra.mxu0 0.0
    %907 = vmatpush.xpose.msra.mxu0 0.0
    %908 = vmatpush.xpose.msra.mxu0 0.0
    %909 = vmatpush.xpose.msra.mxu0 %v342
    %910 = vmatpush.xpose.msra.mxu0 %v340
    %911 = vmatmul.f32.gmra.mxu0 %v890
    %v912 = vpop.f32.mrf.mxu0
    %v913 = vadd.f32 0.0, %v912
    %914 = vmatmul.f32.gmra.mxu0 %v893
    %v915 = vpop.f32.mrf.mxu0
    %v916 = vadd.f32 0.0, %v915
    %917 = vdwg.mxu0
    %v919 = vsel %vm167, %v887, 0
    %v922 = vsel %vm167, %v888, 0
    %924 = vmatpush.xpose.msra.mxu0 0.0
    %925 = vmatpush.xpose.msra.mxu0 0.0
    %926 = vmatpush.xpose.msra.mxu0 0.0
    %927 = vmatpush.xpose.msra.mxu0 0.0
    %928 = vmatpush.xpose.msra.mxu0 0.0
    %929 = vmatpush.xpose.msra.mxu0 0.0
    %930 = vmatpush.xpose.msra.mxu0 0.0
    %931 = vmatpush.xpose.msra.mxu0 0.0
    %932 = vmatpush.xpose.msra.mxu0 0.0
    %933 = vmatpush.xpose.msra.mxu0 0.0
    %934 = vmatpush.xpose.msra.mxu0 0.0
    %935 = vmatpush.xpose.msra.mxu0 0.0
    %936 = vmatpush.xpose.msra.mxu0 0.0
    %937 = vmatpush.xpose.msra.mxu0 0.0
    %938 = vmatpush.xpose.msra.mxu0 %v381
    %939 = vmatpush.xpose.msra.mxu0 %v379
    %940 = vmatmul.f32.gmra.mxu0 %v919
    %v941 = vpop.f32.mrf.mxu0
    %v942 = vadd.f32 0.0, %v941
    %943 = vmatmul.f32.gmra.mxu0 %v922
    %v944 = vpop.f32.mrf.mxu0
    %v945 = vadd.f32 0.0, %v944
    %946 = vdwg.mxu0
    %v947 = vmul.f32 %v913, 0.35355338
    %v948 = vmul.f32 %v916, 0.35355338
    %v949 = vmul.f32 %v942, 0.35355338
    %v950 = vmul.f32 %v945, 0.35355338
    %v951 = vsel %vm410, %v947, -inf
    %952 = vmax.xlane.f32.xlu0 %v951
    %v953 = vpop.xlane.xlu0 %952
    %v954 = vsel %vm410, %v948, -inf
    %955 = vmax.xlane.f32.xlu0 %v954
    %v956 = vpop.xlane.xlu0 %955
    %v957 = vsel %vm410, %v949, -inf
    %958 = vmax.xlane.f32.xlu0 %v957
    %v959 = vpop.xlane.xlu0 %958
    %v960 = vsel %vm410, %v950, -inf
    %961 = vmax.xlane.f32.xlu0 %v960
    %v962 = vpop.xlane.xlu0 %961
    %v963 = vsub.f32 %v947, %v953
    %v964 = vsub.f32 %v948, %v956
    %v965 = vsub.f32 %v949, %v959
    %v966 = vsub.f32 %v950, %v962
    %v967 = vmul.f32 %v963, 1.442695
    %v968 = vpow.pop %v967
    %v969 = vmul.f32 %v964, 1.442695
    %v970 = vpow.pop %v969
    %v971 = vmul.f32 %v965, 1.442695
    %v972 = vpow.pop %v971
    %v973 = vmul.f32 %v966, 1.442695
    %v974 = vpow.pop %v973
    %v975 = vsel %vm410, %v968, 0.0
    %976 = vadd.xlane.f32.xlu0 %v975
    %v977 = vpop.xlane.xlu0 %976
    %v978 = vsel %vm410, %v970, 0.0
    %979 = vadd.xlane.f32.xlu0 %v978
    %v980 = vpop.xlane.xlu0 %979
    %v981 = vsel %vm410, %v972, 0.0
    %982 = vadd.xlane.f32.xlu0 %v981
    %v983 = vpop.xlane.xlu0 %982
    %v984 = vsel %vm410, %v974, 0.0
    %985 = vadd.xlane.f32.xlu0 %v984
    %v986 = vpop.xlane.xlu0 %985
    %v987 = vrcp.pop %v977
    %v988 = vrcp.pop %v980
    %v989 = vrcp.pop %v983
    %v990 = vrcp.pop %v986
    %v991 = vmul.f32 %v968, %v987
    %v992 = vmul.f32 %v970, %v988
    %v993 = vmul.f32 %v972, %v989
    %v994 = vmul.f32 %v974, %v990
    %v996 = vsel %vm410, %v991, 0
    %v999 = vsel %vm410, %v992, 0
    %1001 = vmatpush.msra.mxu0 0.0
    %1002 = vmatpush.msra.mxu0 0.0
    %1003 = vmatpush.msra.mxu0 0.0
    %1004 = vmatpush.msra.mxu0 0.0
    %1005 = vmatpush.msra.mxu0 0.0
    %1006 = vmatpush.msra.mxu0 0.0
    %1007 = vmatpush.msra.mxu0 0.0
    %1008 = vmatpush.msra.mxu0 0.0
    %1009 = vmatpush.msra.mxu0 0.0
    %1010 = vmatpush.msra.mxu0 0.0
    %1011 = vmatpush.msra.mxu0 0.0
    %1012 = vmatpush.msra.mxu0 0.0
    %1013 = vmatpush.msra.mxu0 0.0
    %1014 = vmatpush.msra.mxu0 0.0
    %1015 = vmatpush.msra.mxu0 %v458
    %1016 = vmatpush.msra.mxu0 %v456
    %1017 = vmatmul.f32.gmra.mxu0 %v996
    %v1018 = vpop.f32.mrf.mxu0
    %v1019 = vadd.f32 0.0, %v1018
    %1020 = vmatmul.f32.gmra.mxu0 %v999
    %v1021 = vpop.f32.mrf.mxu0
    %v1022 = vadd.f32 0.0, %v1021
    %1023 = vdwg.mxu0
    %v1025 = vsel %vm410, %v993, 0
    %v1028 = vsel %vm410, %v994, 0
    %1030 = vmatpush.msra.mxu0 0.0
    %1031 = vmatpush.msra.mxu0 0.0
    %1032 = vmatpush.msra.mxu0 0.0
    %1033 = vmatpush.msra.mxu0 0.0
    %1034 = vmatpush.msra.mxu0 0.0
    %1035 = vmatpush.msra.mxu0 0.0
    %1036 = vmatpush.msra.mxu0 0.0
    %1037 = vmatpush.msra.mxu0 0.0
    %1038 = vmatpush.msra.mxu0 0.0
    %1039 = vmatpush.msra.mxu0 0.0
    %1040 = vmatpush.msra.mxu0 0.0
    %1041 = vmatpush.msra.mxu0 0.0
    %1042 = vmatpush.msra.mxu0 0.0
    %1043 = vmatpush.msra.mxu0 0.0
    %1044 = vmatpush.msra.mxu0 %v493
    %1045 = vmatpush.msra.mxu0 %v491
    %1046 = vmatmul.f32.gmra.mxu0 %v1025
    %v1047 = vpop.f32.mrf.mxu0
    %v1048 = vadd.f32 0.0, %v1047
    %1049 = vmatmul.f32.gmra.mxu0 %v1028
    %v1050 = vpop.f32.mrf.mxu0
    %v1051 = vadd.f32 0.0, %v1050
    %1052 = vdwg.mxu0
    %v1053 = vmul.f32 %v166, %v1019
    %v1054 = vmul.f32 %v166, %v1022
    %v1055 = vmul.f32 %v166, %v1048
    %v1056 = vmul.f32 %v166, %v1051
    %v1057 = vadd.f32 %v881, %v1053
    %v1058 = vadd.f32 %v882, %v1054
    %v1059 = vadd.f32 %v883, %v1055
    %v1060 = vadd.f32 %v884, %v1056
    %v1061 = vld [vmem:[#allocation10] sm:$0xff]
    %v1062 = vld [vmem:[#allocation10 + $0x8] sm:$0xff]
    %v1063 = vld [vmem:[#allocation10 + $0x10] sm:$0xff]
    %v1064 = vld [vmem:[#allocation10 + $0x18] sm:$0xff]
    %v1066 = vsel %vm167, %v1057, 0
    %v1069 = vsel %vm167, %v1058, 0
    %v1072 = vsel %vm167, %v1059, 0
    %v1075 = vsel %vm167, %v1060, 0
    %1077 = vmatpush.msra.mxu0 0.0
    %1078 = vmatpush.msra.mxu0 0.0
    %1079 = vmatpush.msra.mxu0 0.0
    %1080 = vmatpush.msra.mxu0 0.0
    %1081 = vmatpush.msra.mxu0 0.0
    %1082 = vmatpush.msra.mxu0 0.0
    %1083 = vmatpush.msra.mxu0 0.0
    %1084 = vmatpush.msra.mxu0 0.0
    %1085 = vmatpush.msra.mxu0 0.0
    %1086 = vmatpush.msra.mxu0 0.0
    %1087 = vmatpush.msra.mxu0 0.0
    %1088 = vmatpush.msra.mxu0 0.0
    %1089 = vmatpush.msra.mxu0 %v1064
    %1090 = vmatpush.msra.mxu0 %v1063
    %1091 = vmatpush.msra.mxu0 %v1062
    %1092 = vmatpush.msra.mxu0 %v1061
    %1093 = vmatmul.f32.gmra.mxu0 %v1066
    %v1094 = vpop.f32.mrf.mxu0
    %v1095 = vadd.f32 0.0, %v1094
    %1096 = vmatmul.f32.gmra.mxu0 %v1069
    %v1097 = vpop.f32.mrf.mxu0
    %v1098 = vadd.f32 0.0, %v1097
    %1099 = vmatmul.f32.gmra.mxu0 %v1072
    %v1100 = vpop.f32.mrf.mxu0
    %v1101 = vadd.f32 0.0, %v1100
    %1102 = vmatmul.f32.gmra.mxu0 %v1075
    %v1103 = vpop.f32.mrf.mxu0
    %v1104 = vadd.f32 0.0, %v1103
    %1105 = vdwg.mxu0
    %v1106 = vsel %vm167, %v1095, 0.0
    %1107 = vadd.xlane.f32.xlu0 %v1106
    %v1108 = vpop.xlane.xlu0 %1107
    %v1109 = vsel %vm167, %v1098, 0.0
    %1110 = vadd.xlane.f32.xlu0 %v1109
    %v1111 = vpop.xlane.xlu0 %1110
    %v1112 = vsel %vm167, %v1101, 0.0
    %1113 = vadd.xlane.f32.xlu0 %v1112
    %v1114 = vpop.xlane.xlu0 %1113
    %v1115 = vsel %vm167, %v1104, 0.0
    %1116 = vadd.xlane.f32.xlu0 %v1115
    %v1117 = vpop.xlane.xlu0 %1116
    %v1119 = vsel %vm410, %v143, 0
    %v1122 = vsel %vm410, %v144, 0
    %1124 = vmatpush.msra.mxu0 0.0
    %1125 = vmatpush.msra.mxu0 0.0
    %1126 = vmatpush.msra.mxu0 0.0
    %1127 = vmatpush.msra.mxu0 0.0
    %1128 = vmatpush.msra.mxu0 0.0
    %1129 = vmatpush.msra.mxu0 0.0
    %1130 = vmatpush.msra.mxu0 0.0
    %1131 = vmatpush.msra.mxu0 0.0
    %1132 = vmatpush.msra.mxu0 0.0
    %1133 = vmatpush.msra.mxu0 0.0
    %1134 = vmatpush.msra.mxu0 0.0
    %1135 = vmatpush.msra.mxu0 0.0
    %1136 = vmatpush.msra.mxu0 0.0
    %1137 = vmatpush.msra.mxu0 0.0
    %1138 = vmatpush.msra.mxu0 %v1111
    %1139 = vmatpush.msra.mxu0 %v1108
    %1140 = vmatmul.f32.gmra.mxu0 %v1119
    %v1141 = vpop.f32.mrf.mxu0
    %v1142 = vadd.f32 0.0, %v1141
    %1143 = vmatmul.f32.gmra.mxu0 %v1122
    %v1144 = vpop.f32.mrf.mxu0
    %v1145 = vadd.f32 0.0, %v1144
    %1146 = vdwg.mxu0
    %1147 = vmatpush.msra.mxu0 0.0
    %1148 = vmatpush.msra.mxu0 0.0
    %1149 = vmatpush.msra.mxu0 0.0
    %1150 = vmatpush.msra.mxu0 0.0
    %1151 = vmatpush.msra.mxu0 0.0
    %1152 = vmatpush.msra.mxu0 0.0
    %1153 = vmatpush.msra.mxu0 0.0
    %1154 = vmatpush.msra.mxu0 0.0
    %1155 = vmatpush.msra.mxu0 0.0
    %1156 = vmatpush.msra.mxu0 0.0
    %1157 = vmatpush.msra.mxu0 0.0
    %1158 = vmatpush.msra.mxu0 0.0
    %1159 = vmatpush.msra.mxu0 0.0
    %1160 = vmatpush.msra.mxu0 0.0
    %1161 = vmatpush.msra.mxu0 %v1117
    %1162 = vmatpush.msra.mxu0 %v1114
    %1163 = vmatmul.f32.gmra.mxu0 %v1119
    %v1164 = vpop.f32.mrf.mxu0
    %v1165 = vadd.f32 0.0, %v1164
    %1166 = vmatmul.f32.gmra.mxu0 %v1122
    %v1167 = vpop.f32.mrf.mxu0
    %v1168 = vadd.f32 0.0, %v1167
    %1169 = vdwg.mxu0
    %v1170 = vmul.f32 %v1142, %v1142
    %v1171 = vmul.f32 %v1145, %v1145
    %v1172 = vmul.f32 %v1165, %v1165
    %v1173 = vmul.f32 %v1168, %v1168
    %v1174 = vsub.f32 0.0, %v1170
    %v1175 = vsub.f32 0.0, %v1171
    %v1176 = vsub.f32 0.0, %v1172
    %v1177 = vsub.f32 0.0, %v1173
    %v1178 = vmul.f32 %v1174, 1.442695
    %v1179 = vpow.pop %v1178
    %v1180 = vmul.f32 %v1175, 1.442695
    %v1181 = vpow.pop %v1180
    %v1182 = vmul.f32 %v1176, 1.442695
    %v1183 = vpow.pop %v1182
    %v1184 = vmul.f32 %v1177, 1.442695
    %v1185 = vpow.pop %v1184
    %v1186 = vmul.f32 %v1179, 0.5
    %v1187 = vmul.f32 %v1181, 0.5
    %v1188 = vmul.f32 %v1183, 0.5
    %v1189 = vmul.f32 %v1185, 0.5
    %1191 = vset.pattern.permute.xlu0 0
    %1192 = vperm.xlu0 %1191, %v1186
    %v1193 = vpop.permute.xlu0 %1192
    %1196 = vset.pattern.permute.xlu0 0
    %1197 = vperm.xlu0 %1196, %v1187
    %v1198 = vpop.permute.xlu0 %1197
    %1201 = vset.pattern.permute.xlu0 0
    %1202 = vperm.xlu0 %1201, %v1188
    %v1203 = vpop.permute.xlu0 %1202
    %1206 = vset.pattern.permute.xlu0 0
    %1207 = vperm.xlu0 %1206, %v1189
    %v1208 = vpop.permute.xlu0 %1207
    %v1210 = vmul.f32 %v1193, %v1095
    %v1211 = vmul.f32 %v1198, %v1098
    %v1212 = vmul.f32 %v1203, %v1101
    %v1213 = vmul.f32 %v1208, %v1104
    %v1214 = vadd.f32 %v1210, %v139
    %v1215 = vadd.f32 %v1211, %v140
    %v1216 = vadd.f32 %v1212, %v141
    %v1217 = vadd.f32 %v1213, %v142
    %v1218 = vld [vmem:[#allocation11] sm:$0xff]
    %v1219 = vld [vmem:[#allocation11 + $0x8] sm:$0xff]
    %v1220 = vld [vmem:[#allocation11 + $0x10] sm:$0xff]
    %v1221 = vld [vmem:[#allocation11 + $0x18] sm:$0xff]
    %v1222 = vld [vmem:[%s6] sm:$0x1]
    %v1224 = vperm.slane %v1222, 0
    %v1227 = vsel %vm167, %v1214, 0
    %v1230 = vsel %vm167, %v1215, 0
    %v1233 = vsel %vm167, %v1216, 0
    %v1236 = vsel %vm167, %v1217, 0
    %1238 = vmatpush.msra.mxu0 0.0
    %1239 = vmatpush.msra.mxu0 0.0
    %1240 = vmatpush.msra.mxu0 0.0
    %1241 = vmatpush.msra.mxu0 0.0
    %1242 = vmatpush.msra.mxu0 0.0
    %1243 = vmatpush.msra.mxu0 0.0
    %1244 = vmatpush.msra.mxu0 0.0
    %1245 = vmatpush.msra.mxu0 0.0
    %1246 = vmatpush.msra.mxu0 0.0
    %1247 = vmatpush.msra.mxu0 0.0
    %1248 = vmatpush.msra.mxu0 0.0
    %1249 = vmatpush.msra.mxu0 0.0
    %1250 = vmatpush.msra.mxu0 %v1221
    %1251 = vmatpush.msra.mxu0 %v1220
    %1252 = vmatpush.msra.mxu0 %v1219
    %1253 = vmatpush.msra.mxu0 %v1218
    %1254 = vmatmul.f32.gmra.mxu0 %v1227
    %v1255 = vpop.f32.mrf.mxu0
    %v1256 = vadd.f32 %v1224, %v1255
    %1257 = vmatmul.f32.gmra.mxu0 %v1230
    %v1258 = vpop.f32.mrf.mxu0
    %v1259 = vadd.f32 %v1224, %v1258
    %1260 = vmatmul.f32.gmra.mxu0 %v1233
    %v1261 = vpop.f32.mrf.mxu0
    %v1262 = vadd.f32 %v1224, %v1261
    %1263 = vmatmul.f32.gmra.mxu0 %v1236
    %v1264 = vpop.f32.mrf.mxu0
    %v1265 = vadd.f32 %v1224, %v1264
    %1266 = vdwg.mxu0
    %v1267 = vsel %vm167, %v1256, 0.0
    %1268 = vadd.xlane.f32.xlu0 %v1267
    %v1269 = vpop.xlane.xlu0 %1268
    %v1270 = vsel %vm167, %v1259, 0.0
    %1271 = vadd.xlane.f32.xlu0 %v1270
    %v1272 = vpop.xlane.xlu0 %1271
    %v1273 = vsel %vm167, %v1262, 0.0
    %1274 = vadd.xlane.f32.xlu0 %v1273
    %v1275 = vpop.xlane.xlu0 %1274
    %v1276 = vsel %vm167, %v1265, 0.0
    %1277 = vadd.xlane.f32.xlu0 %v1276
    %v1278 = vpop.xlane.xlu0 %1277
    %1279 = vmatpush.msra.mxu0 0.0
    %1280 = vmatpush.msra.mxu0 0.0
    %1281 = vmatpush.msra.mxu0 0.0
    %1282 = vmatpush.msra.mxu0 0.0
    %1283 = vmatpush.msra.mxu0 0.0
    %1284 = vmatpush.msra.mxu0 0.0
    %1285 = vmatpush.msra.mxu0 0.0
    %1286 = vmatpush.msra.mxu0 0.0
    %1287 = vmatpush.msra.mxu0 0.0
    %1288 = vmatpush.msra.mxu0 0.0
    %1289 = vmatpush.msra.mxu0 0.0
    %1290 = vmatpush.msra.mxu0 0.0
    %1291 = vmatpush.msra.mxu0 0.0
    %1292 = vmatpush.msra.mxu0 0.0
    %1293 = vmatpush.msra.mxu0 %v1272
    %1294 = vmatpush.msra.mxu0 %v1269
    %1295 = vmatmul.f32.gmra.mxu0 %v1119
    %v1296 = vpop.f32.mrf.mxu0
    %v1297 = vadd.f32 0.0, %v1296
    %1298 = vmatmul.f32.gmra.mxu0 %v1122
    %v1299 = vpop.f32.mrf.mxu0
    %v1300 = vadd.f32 0.0, %v1299
    %1301 = vdwg.mxu0
    %1302 = vmatpush.msra.mxu0 0.0
    %1303 = vmatpush.msra.mxu0 0.0
    %1304 = vmatpush.msra.mxu0 0.0
    %1305 = vmatpush.msra.mxu0 0.0
    %1306 = vmatpush.msra.mxu0 0.0
    %1307 = vmatpush.msra.mxu0 0.0
    %1308 = vmatpush.msra.mxu0 0.0
    %1309 = vmatpush.msra.mxu0 0.0
    %1310 = vmatpush.msra.mxu0 0.0
    %1311 = vmatpush.msra.mxu0 0.0
    %1312 = vmatpush.msra.mxu0 0.0
    %1313 = vmatpush.msra.mxu0 0.0
    %1314 = vmatpush.msra.mxu0 0.0
    %1315 = vmatpush.msra.mxu0 0.0
    %1316 = vmatpush.msra.mxu0 %v1278
    %1317 = vmatpush.msra.mxu0 %v1275
    %1318 = vmatmul.f32.gmra.mxu0 %v1119
    %v1319 = vpop.f32.mrf.mxu0
    %v1320 = vadd.f32 0.0, %v1319
    %1321 = vmatmul.f32.gmra.mxu0 %v1122
    %v1322 = vpop.f32.mrf.mxu0
    %v1323 = vadd.f32 0.0, %v1322
    %1324 = vdwg.mxu0
    %v1325 = vmul.f32 %v1297, %v1297
    %v1326 = vmul.f32 %v1300, %v1300
    %v1327 = vmul.f32 %v1320, %v1320
    %v1328 = vmul.f32 %v1323, %v1323
    %v1329 = vsub.f32 0.0, %v1325
    %v1330 = vsub.f32 0.0, %v1326
    %v1331 = vsub.f32 0.0, %v1327
    %v1332 = vsub.f32 0.0, %v1328
    %v1333 = vmul.f32 %v1329, 1.442695
    %v1334 = vpow.pop %v1333
    %v1335 = vmul.f32 %v1330, 1.442695
    %v1336 = vpow.pop %v1335
    %v1337 = vmul.f32 %v1331, 1.442695
    %v1338 = vpow.pop %v1337
    %v1339 = vmul.f32 %v1332, 1.442695
    %v1340 = vpow.pop %v1339
    %v1341 = vmul.f32 %v1334, 0.5
    %v1342 = vmul.f32 %v1336, 0.5
    %v1343 = vmul.f32 %v1338, 0.5
    %v1344 = vmul.f32 %v1340, 0.5
    %1346 = vset.pattern.permute.xlu0 0
    %1347 = vperm.xlu0 %1346, %v1341
    %v1348 = vpop.permute.xlu0 %1347
    %1351 = vset.pattern.permute.xlu0 0
    %1352 = vperm.xlu0 %1351, %v1342
    %v1353 = vpop.permute.xlu0 %1352
    %1356 = vset.pattern.permute.xlu0 0
    %1357 = vperm.xlu0 %1356, %v1343
    %v1358 = vpop.permute.xlu0 %1357
    %1361 = vset.pattern.permute.xlu0 0
    %1362 = vperm.xlu0 %1361, %v1344
    %v1363 = vpop.permute.xlu0 %1362
    %v1365 = vmul.f32 %v1348, %v1256
    %v1366 = vmul.f32 %v1353, %v1259
    %v1367 = vmul.f32 %v1358, %v1262
    %v1368 = vmul.f32 %v1363, %v1265
    %v1369 = vadd.f32 %v1365, %v1214
    %v1370 = vadd.f32 %v1366, %v1215
    %v1371 = vadd.f32 %v1367, %v1216
    %v1372 = vadd.f32 %v1368, %v1217
    %v1373 = vsel %vm167, %v1369, 0.0
    %1374 = vadd.xlane.f32.xlu0 %v1373
    %v1375 = vpop.xlane.xlu0 %1374
    %v1376 = vsel %vm167, %v1370, 0.0
    %1377 = vadd.xlane.f32.xlu0 %v1376
    %v1378 = vpop.xlane.xlu0 %1377
    %v1379 = vsel %vm167, %v1371, 0.0
    %1380 = vadd.xlane.f32.xlu0 %v1379
    %v1381 = vpop.xlane.xlu0 %1380
    %v1382 = vsel %vm167, %v1372, 0.0
    %1383 = vadd.xlane.f32.xlu0 %v1382
    %v1384 = vpop.xlane.xlu0 %1383
    %v1385 = vmul.f32 %v1375, %v186
    %v1386 = vmul.f32 %v1378, %v186
    %v1387 = vmul.f32 %v1381, %v186
    %v1388 = vmul.f32 %v1384, %v186
    %v1389 = vsub.f32 %v1369, %v1385
    %v1390 = vsub.f32 %v1370, %v1386
    %v1391 = vsub.f32 %v1371, %v1387
    %v1392 = vsub.f32 %v1372, %v1388
    %v1393 = vmul.f32 %v1389, %v1389
    %v1394 = vmul.f32 %v1390, %v1390
    %v1395 = vmul.f32 %v1391, %v1391
    %v1396 = vmul.f32 %v1392, %v1392
    %v1397 = vsel %vm167, %v1393, 0.0
    %1398 = vadd.xlane.f32.xlu0 %v1397
    %v1399 = vpop.xlane.xlu0 %1398
    %v1400 = vsel %vm167, %v1394, 0.0
    %1401 = vadd.xlane.f32.xlu0 %v1400
    %v1402 = vpop.xlane.xlu0 %1401
    %v1403 = vsel %vm167, %v1395, 0.0
    %1404 = vadd.xlane.f32.xlu0 %v1403
    %v1405 = vpop.xlane.xlu0 %1404
    %v1406 = vsel %vm167, %v1396, 0.0
    %1407 = vadd.xlane.f32.xlu0 %v1406
    %v1408 = vpop.xlane.xlu0 %1407
    %v1409 = vmul.f32 %v1399, %v186
    %v1410 = vmul.f32 %v1402, %v186
    %v1411 = vmul.f32 %v1405, %v186
    %v1412 = vmul.f32 %v1408, %v186
    %v1413 = vadd.f32 %v1409, 1e-05
    %v1414 = vadd.f32 %v1410, 1e-05
    %v1415 = vadd.f32 %v1411, 1e-05
    %v1416 = vadd.f32 %v1412, 1e-05
    %v1417 = vrsqrt.pop %v1413
    %v1418 = vmul.f32 %v1417, %v1413
    %v1419 = vmul.f32 %v1418, %v1417
    %v1420 = vmul.f32 0.5, %v1419
    %v1421 = vsub.f32 1.5, %v1420
    %v1422 = vmul.f32 %v1417, %v1421
    %vm1423 = vweird.f32 %v1413
    %vm1424 = vweird.f32 %v1417
    %vm1425 = vmor %vm1423, %vm1424
    %v1426 = vsel %vm1425, %v1417, %v1422
    %v1427 = vrsqrt.pop %v1414
    %v1428 = vmul.f32 %v1427, %v1414
    %v1429 = vmul.f32 %v1428, %v1427
    %v1430 = vmul.f32 0.5, %v1429
    %v1431 = vsub.f32 1.5, %v1430
    %v1432 = vmul.f32 %v1427, %v1431
    %vm1433 = vweird.f32 %v1414
    %vm1434 = vweird.f32 %v1427
    %vm1435 = vmor %vm1433, %vm1434
    %v1436 = vsel %vm1435, %v1427, %v1432
    %v1437 = vrsqrt.pop %v1415
    %v1438 = vmul.f32 %v1437, %v1415
    %v1439 = vmul.f32 %v1438, %v1437
    %v1440 = vmul.f32 0.5, %v1439
    %v1441 = vsub.f32 1.5, %v1440
    %v1442 = vmul.f32 %v1437, %v1441
    %vm1443 = vweird.f32 %v1415
    %vm1444 = vweird.f32 %v1437
    %vm1445 = vmor %vm1443, %vm1444
    %v1446 = vsel %vm1445, %v1437, %v1442
    %v1447 = vrsqrt.pop %v1416
    %v1448 = vmul.f32 %v1447, %v1416
    %v1449 = vmul.f32 %v1448, %v1447
    %v1450 = vmul.f32 0.5, %v1449
    %v1451 = vsub.f32 1.5, %v1450
    %v1452 = vmul.f32 %v1447, %v1451
    %vm1453 = vweird.f32 %v1416
    %vm1454 = vweird.f32 %v1447
    %vm1455 = vmor %vm1453, %vm1454
    %v1456 = vsel %vm1455, %v1447, %v1452
    %v1457 = vmul.f32 %v1389, %v1426
    %v1458 = vmul.f32 %v1390, %v1436
    %v1459 = vmul.f32 %v1391, %v1446
    %v1460 = vmul.f32 %v1392, %v1456
    %s1461 = scalar_lea.vmem [#allocation5], 1
    %v1462 = vld [vmem:[%s1461] sm:$0x1]
    %v1464 = vperm.slane %v1462, 0
    %v1466 = vmul.f32 %v1457, %v1464
    %v1467 = vmul.f32 %v1458, %v1464
    %v1468 = vmul.f32 %v1459, %v1464
    %v1469 = vmul.f32 %v1460, %v1464
    %s1470 = scalar_lea.vmem [#allocation7], 1
    %v1471 = vld [vmem:[%s1470] sm:$0x1]
    %v1473 = vperm.slane %v1471, 0
    %v1475 = vadd.f32 %v1466, %v1473
    %v1476 = vadd.f32 %v1467, %v1473
    %v1477 = vadd.f32 %v1468, %v1473
    %v1478 = vadd.f32 %v1469, %v1473
    %s1479 = scalar_lea.vmem [#allocation8], 32
    %v1480 = vld [vmem:[%s1479] sm:$0xff]
    %v1481 = vld [vmem:[%s1479 + $0x8] sm:$0xff]
    %v1482 = vld [vmem:[%s1479 + $0x10] sm:$0xff]
    %v1483 = vld [vmem:[%s1479 + $0x18] sm:$0xff]
    %v1485 = vsel %vm167, %v1475, 0
    %v1488 = vsel %vm167, %v1476, 0
    %v1491 = vsel %vm167, %v1477, 0
    %v1494 = vsel %vm167, %v1478, 0
    %1496 = vmatpush.msra.mxu0 0.0
    %1497 = vmatpush.msra.mxu0 0.0
    %1498 = vmatpush.msra.mxu0 0.0
    %1499 = vmatpush.msra.mxu0 0.0
    %1500 = vmatpush.msra.mxu0 0.0
    %1501 = vmatpush.msra.mxu0 0.0
    %1502 = vmatpush.msra.mxu0 0.0
    %1503 = vmatpush.msra.mxu0 0.0
    %1504 = vmatpush.msra.mxu0 0.0
    %1505 = vmatpush.msra.mxu0 0.0
    %1506 = vmatpush.msra.mxu0 0.0
    %1507 = vmatpush.msra.mxu0 0.0
    %1508 = vmatpush.msra.mxu0 %v1483
    %1509 = vmatpush.msra.mxu0 %v1482
    %1510 = vmatpush.msra.mxu0 %v1481
    %1511 = vmatpush.msra.mxu0 %v1480
    %1512 = vmatmul.f32.gmra.mxu0 %v1485
    %v1513 = vpop.f32.mrf.mxu0
    %v1514 = vadd.f32 0.0, %v1513
    %1515 = vmatmul.f32.gmra.mxu0 %v1488
    %v1516 = vpop.f32.mrf.mxu0
    %v1517 = vadd.f32 0.0, %v1516
    %1518 = vmatmul.f32.gmra.mxu0 %v1491
    %v1519 = vpop.f32.mrf.mxu0
    %v1520 = vadd.f32 0.0, %v1519
    %1521 = vmatmul.f32.gmra.mxu0 %v1494
    %v1522 = vpop.f32.mrf.mxu0
    %v1523 = vadd.f32 0.0, %v1522
    %1524 = vdwg.mxu0
    %v1525 = vmul.f32 %v1514, %v151
    %v1526 = vmul.f32 %v1517, %v151
    %v1527 = vmul.f32 %v1520, %v151
    %v1528 = vmul.f32 %v1523, %v151
    %1531 = vrot.lane.b32.xlu0 %v1514, 96
    %v1532 = vpop.permute.xlu0 %1531
    %1533 = vrot.lane.b32.xlu0 %v1517, 96
    %v1534 = vpop.permute.xlu0 %1533
    %v1536 = vsel %vm167, %v1525, 0
    %v1539 = vsel %vm167, %v1526, 0
    %v1541 = vsel %vm167, %v1532, 0
    %v1543 = vsel %vm167, %v1534, 0
    %1545 = vmatpush.xpose.msra.mxu0 0.0
    %1546 = vmatpush.xpose.msra.mxu0 0.0
    %1547 = vmatpush.xpose.msra.mxu0 0.0
    %1548 = vmatpush.xpose.msra.mxu0 0.0
    %1549 = vmatpush.xpose.msra.mxu0 0.0
    %1550 = vmatpush.xpose.msra.mxu0 0.0
    %1551 = vmatpush.xpose.msra.mxu0 0.0
    %1552 = vmatpush.xpose.msra.mxu0 0.0
    %1553 = vmatpush.xpose.msra.mxu0 0.0
    %1554 = vmatpush.xpose.msra.mxu0 0.0
    %1555 = vmatpush.xpose.msra.mxu0 0.0
    %1556 = vmatpush.xpose.msra.mxu0 0.0
    %1557 = vmatpush.xpose.msra.mxu0 0.0
    %1558 = vmatpush.xpose.msra.mxu0 0.0
    %1559 = vmatpush.xpose.msra.mxu0 %v1543
    %1560 = vmatpush.xpose.msra.mxu0 %v1541
    %1561 = vmatmul.f32.gmra.mxu0 %v1536
    %v1562 = vpop.f32.mrf.mxu0
    %v1563 = vadd.f32 0.0, %v1562
    %1564 = vmatmul.f32.gmra.mxu0 %v1539
    %v1565 = vpop.f32.mrf.mxu0
    %v1566 = vadd.f32 0.0, %v1565
    %1567 = vdwg.mxu0
    %1570 = vrot.lane.b32.xlu0 %v1520, 96
    %v1571 = vpop.permute.xlu0 %1570
    %1572 = vrot.lane.b32.xlu0 %v1523, 96
    %v1573 = vpop.permute.xlu0 %1572
    %v1575 = vsel %vm167, %v1527, 0
    %v1578 = vsel %vm167, %v1528, 0
    %v1580 = vsel %vm167, %v1571, 0
    %v1582 = vsel %vm167, %v1573, 0
    %1584 = vmatpush.xpose.msra.mxu0 0.0
    %1585 = vmatpush.xpose.msra.mxu0 0.0
    %1586 = vmatpush.xpose.msra.mxu0 0.0
    %1587 = vmatpush.xpose.msra.mxu0 0.0
    %1588 = vmatpush.xpose.msra.mxu0 0.0
    %1589 = vmatpush.xpose.msra.mxu0 0.0
    %1590 = vmatpush.xpose.msra.mxu0 0.0
    %1591 = vmatpush.xpose.msra.mxu0 0.0
    %1592 = vmatpush.xpose.msra.mxu0 0.0
    %1593 = vmatpush.xpose.msra.mxu0 0.0
    %1594 = vmatpush.xpose.msra.mxu0 0.0
    %1595 = vmatpush.xpose.msra.mxu0 0.0
    %1596 = vmatpush.xpose.msra.mxu0 0.0
    %1597 = vmatpush.xpose.msra.mxu0 0.0
    %1598 = vmatpush.xpose.msra.mxu0 %v1582
    %1599 = vmatpush.xpose.msra.mxu0 %v1580
    %1600 = vmatmul.f32.gmra.mxu0 %v1575
    %v1601 = vpop.f32.mrf.mxu0
    %v1602 = vadd.f32 0.0, %v1601
    %1603 = vmatmul.f32.gmra.mxu0 %v1578
    %v1604 = vpop.f32.mrf.mxu0
    %v1605 = vadd.f32 0.0, %v1604
    %1606 = vdwg.mxu0
    %v1607 = vmul.f32 %v1563, 0.35355338
    %v1608 = vmul.f32 %v1566, 0.35355338
    %v1609 = vmul.f32 %v1602, 0.35355338
    %v1610 = vmul.f32 %v1605, 0.35355338
    %v1611 = vsel %vm410, %v1607, -inf
    %1612 = vmax.xlane.f32.xlu0 %v1611
    %v1613 = vpop.xlane.xlu0 %1612
    %v1614 = vsel %vm410, %v1608, -inf
    %1615 = vmax.xlane.f32.xlu0 %v1614
    %v1616 = vpop.xlane.xlu0 %1615
    %v1617 = vsel %vm410, %v1609, -inf
    %1618 = vmax.xlane.f32.xlu0 %v1617
    %v1619 = vpop.xlane.xlu0 %1618
    %v1620 = vsel %vm410, %v1610, -inf
    %1621 = vmax.xlane.f32.xlu0 %v1620
    %v1622 = vpop.xlane.xlu0 %1621
    %v1623 = vsub.f32 %v1607, %v1613
    %v1624 = vsub.f32 %v1608, %v1616
    %v1625 = vsub.f32 %v1609, %v1619
    %v1626 = vsub.f32 %v1610, %v1622
    %v1627 = vmul.f32 %v1623, 1.442695
    %v1628 = vpow.pop %v1627
    %v1629 = vmul.f32 %v1624, 1.442695
    %v1630 = vpow.pop %v1629
    %v1631 = vmul.f32 %v1625, 1.442695
    %v1632 = vpow.pop %v1631
    %v1633 = vmul.f32 %v1626, 1.442695
    %v1634 = vpow.pop %v1633
    %v1635 = vsel %vm410, %v1628, 0.0
    %1636 = vadd.xlane.f32.xlu0 %v1635
    %v1637 = vpop.xlane.xlu0 %1636
    %v1638 = vsel %vm410, %v1630, 0.0
    %1639 = vadd.xlane.f32.xlu0 %v1638
    %v1640 = vpop.xlane.xlu0 %1639
    %v1641 = vsel %vm410, %v1632, 0.0
    %1642 = vadd.xlane.f32.xlu0 %v1641
    %v1643 = vpop.xlane.xlu0 %1642
    %v1644 = vsel %vm410, %v1634, 0.0
    %1645 = vadd.xlane.f32.xlu0 %v1644
    %v1646 = vpop.xlane.xlu0 %1645
    %v1647 = vrcp.pop %v1637
    %v1648 = vrcp.pop %v1640
    %v1649 = vrcp.pop %v1643
    %v1650 = vrcp.pop %v1646
    %v1651 = vmul.f32 %v1628, %v1647
    %v1652 = vmul.f32 %v1630, %v1648
    %v1653 = vmul.f32 %v1632, %v1649
    %v1654 = vmul.f32 %v1634, %v1650
    %1655 = vrot.lane.b32.xlu0 %v1514, 64
    %v1656 = vpop.permute.xlu0 %1655
    %1657 = vrot.lane.b32.xlu0 %v1517, 64
    %v1658 = vpop.permute.xlu0 %1657
    %v1662 = vsel %vm410, %v1651, 0
    %v1665 = vsel %vm410, %v1652, 0
    %1667 = vmatpush.msra.mxu0 0.0
    %1668 = vmatpush.msra.mxu0 0.0
    %1669 = vmatpush.msra.mxu0 0.0
    %1670 = vmatpush.msra.mxu0 0.0
    %1671 = vmatpush.msra.mxu0 0.0
    %1672 = vmatpush.msra.mxu0 0.0
    %1673 = vmatpush.msra.mxu0 0.0
    %1674 = vmatpush.msra.mxu0 0.0
    %1675 = vmatpush.msra.mxu0 0.0
    %1676 = vmatpush.msra.mxu0 0.0
    %1677 = vmatpush.msra.mxu0 0.0
    %1678 = vmatpush.msra.mxu0 0.0
    %1679 = vmatpush.msra.mxu0 0.0
    %1680 = vmatpush.msra.mxu0 0.0
    %1681 = vmatpush.msra.mxu0 %v1658
    %1682 = vmatpush.msra.mxu0 %v1656
    %1683 = vmatmul.f32.gmra.mxu0 %v1662
    %v1684 = vpop.f32.mrf.mxu0
    %v1685 = vadd.f32 0.0, %v1684
    %1686 = vmatmul.f32.gmra.mxu0 %v1665
    %v1687 = vpop.f32.mrf.mxu0
    %v1688 = vadd.f32 0.0, %v1687
    %1689 = vdwg.mxu0
    %1690 = vrot.lane.b32.xlu0 %v1520, 64
    %v1691 = vpop.permute.xlu0 %1690
    %1692 = vrot.lane.b32.xlu0 %v1523, 64
    %v1693 = vpop.permute.xlu0 %1692
    %v1697 = vsel %vm410, %v1653, 0
    %v1700 = vsel %vm410, %v1654, 0
    %1702 = vmatpush.msra.mxu0 0.0
    %1703 = vmatpush.msra.mxu0 0.0
    %1704 = vmatpush.msra.mxu0 0.0
    %1705 = vmatpush.msra.mxu0 0.0
    %1706 = vmatpush.msra.mxu0 0.0
    %1707 = vmatpush.msra.mxu0 0.0
    %1708 = vmatpush.msra.mxu0 0.0
    %1709 = vmatpush.msra.mxu0 0.0
    %1710 = vmatpush.msra.mxu0 0.0
    %1711 = vmatpush.msra.mxu0 0.0
    %1712 = vmatpush.msra.mxu0 0.0
    %1713 = vmatpush.msra.mxu0 0.0
    %1714 = vmatpush.msra.mxu0 0.0
    %1715 = vmatpush.msra.mxu0 0.0
    %1716 = vmatpush.msra.mxu0 %v1693
    %1717 = vmatpush.msra.mxu0 %v1691
    %1718 = vmatmul.f32.gmra.mxu0 %v1697
    %v1719 = vpop.f32.mrf.mxu0
    %v1720 = vadd.f32 0.0, %v1719
    %1721 = vmatmul.f32.gmra.mxu0 %v1700
    %v1722 = vpop.f32.mrf.mxu0
    %v1723 = vadd.f32 0.0, %v1722
    %1724 = vdwg.mxu0
    %v1725 = vmul.f32 %v151, %v1685
    %v1726 = vmul.f32 %v151, %v1688
    %v1727 = vmul.f32 %v151, %v1720
    %v1728 = vmul.f32 %v151, %v1723
    %v1729 = vadd.f32 %v1725, 0.0
    %v1730 = vadd.f32 %v1726, 0.0
    %v1731 = vadd.f32 %v1727, 0.0
    %v1732 = vadd.f32 %v1728, 0.0
    %v1733 = vmul.f32 %v1514, %v156
    %v1734 = vmul.f32 %v1517, %v156
    %v1735 = vmul.f32 %v1520, %v156
    %v1736 = vmul.f32 %v1523, %v156
    %v1738 = vsel %vm167, %v1733, 0
    %v1741 = vsel %vm167, %v1734, 0
    %1743 = vmatpush.xpose.msra.mxu0 0.0
    %1744 = vmatpush.xpose.msra.mxu0 0.0
    %1745 = vmatpush.xpose.msra.mxu0 0.0
    %1746 = vmatpush.xpose.msra.mxu0 0.0
    %1747 = vmatpush.xpose.msra.mxu0 0.0
    %1748 = vmatpush.xpose.msra.mxu0 0.0
    %1749 = vmatpush.xpose.msra.mxu0 0.0
    %1750 = vmatpush.xpose.msra.mxu0 0.0
    %1751 = vmatpush.xpose.msra.mxu0 0.0
    %1752 = vmatpush.xpose.msra.mxu0 0.0
    %1753 = vmatpush.xpose.msra.mxu0 0.0
    %1754 = vmatpush.xpose.msra.mxu0 0.0
    %1755 = vmatpush.xpose.msra.mxu0 0.0
    %1756 = vmatpush.xpose.msra.mxu0 0.0
    %1757 = vmatpush.xpose.msra.mxu0 %v1543
    %1758 = vmatpush.xpose.msra.mxu0 %v1541
    %1759 = vmatmul.f32.gmra.mxu0 %v1738
    %v1760 = vpop.f32.mrf.mxu0
    %v1761 = vadd.f32 0.0, %v1760
    %1762 = vmatmul.f32.gmra.mxu0 %v1741
    %v1763 = vpop.f32.mrf.mxu0
    %v1764 = vadd.f32 0.0, %v1763
    %1765 = vdwg.mxu0
    %v1767 = vsel %vm167, %v1735, 0
    %v1770 = vsel %vm167, %v1736, 0
    %1772 = vmatpush.xpose.msra.mxu0 0.0
    %1773 = vmatpush.xpose.msra.mxu0 0.0
    %1774 = vmatpush.xpose.msra.mxu0 0.0
    %1775 = vmatpush.xpose.msra.mxu0 0.0
    %1776 = vmatpush.xpose.msra.mxu0 0.0
    %1777 = vmatpush.xpose.msra.mxu0 0.0
    %1778 = vmatpush.xpose.msra.mxu0 0.0
    %1779 = vmatpush.xpose.msra.mxu0 0.0
    %1780 = vmatpush.xpose.msra.mxu0 0.0
    %1781 = vmatpush.xpose.msra.mxu0 0.0
    %1782 = vmatpush.xpose.msra.mxu0 0.0
    %1783 = vmatpush.xpose.msra.mxu0 0.0
    %1784 = vmatpush.xpose.msra.mxu0 0.0
    %1785 = vmatpush.xpose.msra.mxu0 0.0
    %1786 = vmatpush.xpose.msra.mxu0 %v1582
    %1787 = vmatpush.xpose.msra.mxu0 %v1580
    %1788 = vmatmul.f32.gmra.mxu0 %v1767
    %v1789 = vpop.f32.mrf.mxu0
    %v1790 = vadd.f32 0.0, %v1789
    %1791 = vmatmul.f32.gmra.mxu0 %v1770
    %v1792 = vpop.f32.mrf.mxu0
    %v1793 = vadd.f32 0.0, %v1792
    %1794 = vdwg.mxu0
    %v1795 = vmul.f32 %v1761, 0.35355338
    %v1796 = vmul.f32 %v1764, 0.35355338
    %v1797 = vmul.f32 %v1790, 0.35355338
    %v1798 = vmul.f32 %v1793, 0.35355338
    %v1799 = vsel %vm410, %v1795, -inf
    %1800 = vmax.xlane.f32.xlu0 %v1799
    %v1801 = vpop.xlane.xlu0 %1800
    %v1802 = vsel %vm410, %v1796, -inf
    %1803 = vmax.xlane.f32.xlu0 %v1802
    %v1804 = vpop.xlane.xlu0 %1803
    %v1805 = vsel %vm410, %v1797, -inf
    %1806 = vmax.xlane.f32.xlu0 %v1805
    %v1807 = vpop.xlane.xlu0 %1806
    %v1808 = vsel %vm410, %v1798, -inf
    %1809 = vmax.xlane.f32.xlu0 %v1808
    %v1810 = vpop.xlane.xlu0 %1809
    %v1811 = vsub.f32 %v1795, %v1801
    %v1812 = vsub.f32 %v1796, %v1804
    %v1813 = vsub.f32 %v1797, %v1807
    %v1814 = vsub.f32 %v1798, %v1810
    %v1815 = vmul.f32 %v1811, 1.442695
    %v1816 = vpow.pop %v1815
    %v1817 = vmul.f32 %v1812, 1.442695
    %v1818 = vpow.pop %v1817
    %v1819 = vmul.f32 %v1813, 1.442695
    %v1820 = vpow.pop %v1819
    %v1821 = vmul.f32 %v1814, 1.442695
    %v1822 = vpow.pop %v1821
    %v1823 = vsel %vm410, %v1816, 0.0
    %1824 = vadd.xlane.f32.xlu0 %v1823
    %v1825 = vpop.xlane.xlu0 %1824
    %v1826 = vsel %vm410, %v1818, 0.0
    %1827 = vadd.xlane.f32.xlu0 %v1826
    %v1828 = vpop.xlane.xlu0 %1827
    %v1829 = vsel %vm410, %v1820, 0.0
    %1830 = vadd.xlane.f32.xlu0 %v1829
    %v1831 = vpop.xlane.xlu0 %1830
    %v1832 = vsel %vm410, %v1822, 0.0
    %1833 = vadd.xlane.f32.xlu0 %v1832
    %v1834 = vpop.xlane.xlu0 %1833
    %v1835 = vrcp.pop %v1825
    %v1836 = vrcp.pop %v1828
    %v1837 = vrcp.pop %v1831
    %v1838 = vrcp.pop %v1834
    %v1839 = vmul.f32 %v1816, %v1835
    %v1840 = vmul.f32 %v1818, %v1836
    %v1841 = vmul.f32 %v1820, %v1837
    %v1842 = vmul.f32 %v1822, %v1838
    %v1844 = vsel %vm410, %v1839, 0
    %v1847 = vsel %vm410, %v1840, 0
    %1849 = vmatpush.msra.mxu0 0.0
    %1850 = vmatpush.msra.mxu0 0.0
    %1851 = vmatpush.msra.mxu0 0.0
    %1852 = vmatpush.msra.mxu0 0.0
    %1853 = vmatpush.msra.mxu0 0.0
    %1854 = vmatpush.msra.mxu0 0.0
    %1855 = vmatpush.msra.mxu0 0.0
    %1856 = vmatpush.msra.mxu0 0.0
    %1857 = vmatpush.msra.mxu0 0.0
    %1858 = vmatpush.msra.mxu0 0.0
    %1859 = vmatpush.msra.mxu0 0.0
    %1860 = vmatpush.msra.mxu0 0.0
    %1861 = vmatpush.msra.mxu0 0.0
    %1862 = vmatpush.msra.mxu0 0.0
    %1863 = vmatpush.msra.mxu0 %v1658
    %1864 = vmatpush.msra.mxu0 %v1656
    %1865 = vmatmul.f32.gmra.mxu0 %v1844
    %v1866 = vpop.f32.mrf.mxu0
    %v1867 = vadd.f32 0.0, %v1866
    %1868 = vmatmul.f32.gmra.mxu0 %v1847
    %v1869 = vpop.f32.mrf.mxu0
    %v1870 = vadd.f32 0.0, %v1869
    %1871 = vdwg.mxu0
    %v1873 = vsel %vm410, %v1841, 0
    %v1876 = vsel %vm410, %v1842, 0
    %1878 = vmatpush.msra.mxu0 0.0
    %1879 = vmatpush.msra.mxu0 0.0
    %1880 = vmatpush.msra.mxu0 0.0
    %1881 = vmatpush.msra.mxu0 0.0
    %1882 = vmatpush.msra.mxu0 0.0
    %1883 = vmatpush.msra.mxu0 0.0
    %1884 = vmatpush.msra.mxu0 0.0
    %1885 = vmatpush.msra.mxu0 0.0
    %1886 = vmatpush.msra.mxu0 0.0
    %1887 = vmatpush.msra.mxu0 0.0
    %1888 = vmatpush.msra.mxu0 0.0
    %1889 = vmatpush.msra.mxu0 0.0
    %1890 = vmatpush.msra.mxu0 0.0
    %1891 = vmatpush.msra.mxu0 0.0
    %1892 = vmatpush.msra.mxu0 %v1693
    %1893 = vmatpush.msra.mxu0 %v1691
    %1894 = vmatmul.f32.gmra.mxu0 %v1873
    %v1895 = vpop.f32.mrf.mxu0
    %v1896 = vadd.f32 0.0, %v1895
    %1897 = vmatmul.f32.gmra.mxu0 %v1876
    %v1898 = vpop.f32.mrf.mxu0
    %v1899 = vadd.f32 0.0, %v1898
    %1900 = vdwg.mxu0
    %v1901 = vmul.f32 %v156, %v1867
    %v1902 = vmul.f32 %v156, %v1870
    %v1903 = vmul.f32 %v156, %v1896
    %v1904 = vmul.f32 %v156, %v1899
    %v1905 = vadd.f32 %v1729, %v1901
    %v1906 = vadd.f32 %v1730, %v1902
    %v1907 = vadd.f32 %v1731, %v1903
    %v1908 = vadd.f32 %v1732, %v1904
    %v1909 = vmul.f32 %v1514, %v161
    %v1910 = vmul.f32 %v1517, %v161
    %v1911 = vmul.f32 %v1520, %v161
    %v1912 = vmul.f32 %v1523, %v161
    %v1914 = vsel %vm167, %v1909, 0
    %v1917 = vsel %vm167, %v1910, 0
    %1919 = vmatpush.xpose.msra.mxu0 0.0
    %1920 = vmatpush.xpose.msra.mxu0 0.0
    %1921 = vmatpush.xpose.msra.mxu0 0.0
    %1922 = vmatpush.xpose.msra.mxu0 0.0
    %1923 = vmatpush.xpose.msra.mxu0 0.0
    %1924 = vmatpush.xpose.msra.mxu0 0.0
    %1925 = vmatpush.xpose.msra.mxu0 0.0
    %1926 = vmatpush.xpose.msra.mxu0 0.0
    %1927 = vmatpush.xpose.msra.mxu0 0.0
    %1928 = vmatpush.xpose.msra.mxu0 0.0
    %1929 = vmatpush.xpose.msra.mxu0 0.0
    %1930 = vmatpush.xpose.msra.mxu0 0.0
    %1931 = vmatpush.xpose.msra.mxu0 0.0
    %1932 = vmatpush.xpose.msra.mxu0 0.0
    %1933 = vmatpush.xpose.msra.mxu0 %v1543
    %1934 = vmatpush.xpose.msra.mxu0 %v1541
    %1935 = vmatmul.f32.gmra.mxu0 %v1914
    %v1936 = vpop.f32.mrf.mxu0
    %v1937 = vadd.f32 0.0, %v1936
    %1938 = vmatmul.f32.gmra.mxu0 %v1917
    %v1939 = vpop.f32.mrf.mxu0
    %v1940 = vadd.f32 0.0, %v1939
    %1941 = vdwg.mxu0
    %v1943 = vsel %vm167, %v1911, 0
    %v1946 = vsel %vm167, %v1912, 0
    %1948 = vmatpush.xpose.msra.mxu0 0.0
    %1949 = vmatpush.xpose.msra.mxu0 0.0
    %1950 = vmatpush.xpose.msra.mxu0 0.0
    %1951 = vmatpush.xpose.msra.mxu0 0.0
    %1952 = vmatpush.xpose.msra.mxu0 0.0
    %1953 = vmatpush.xpose.msra.mxu0 0.0
    %1954 = vmatpush.xpose.msra.mxu0 0.0
    %1955 = vmatpush.xpose.msra.mxu0 0.0
    %1956 = vmatpush.xpose.msra.mxu0 0.0
    %1957 = vmatpush.xpose.msra.mxu0 0.0
    %1958 = vmatpush.xpose.msra.mxu0 0.0
    %1959 = vmatpush.xpose.msra.mxu0 0.0
    %1960 = vmatpush.xpose.msra.mxu0 0.0
    %1961 = vmatpush.xpose.msra.mxu0 0.0
    %1962 = vmatpush.xpose.msra.mxu0 %v1582
    %1963 = vmatpush.xpose.msra.mxu0 %v1580
    %1964 = vmatmul.f32.gmra.mxu0 %v1943
    %v1965 = vpop.f32.mrf.mxu0
    %v1966 = vadd.f32 0.0, %v1965
    %1967 = vmatmul.f32.gmra.mxu0 %v1946
    %v1968 = vpop.f32.mrf.mxu0
    %v1969 = vadd.f32 0.0, %v1968
    %1970 = vdwg.mxu0
    %v1971 = vmul.f32 %v1937, 0.35355338
    %v1972 = vmul.f32 %v1940, 0.35355338
    %v1973 = vmul.f32 %v1966, 0.35355338
    %v1974 = vmul.f32 %v1969, 0.35355338
    %v1975 = vsel %vm410, %v1971, -inf
    %1976 = vmax.xlane.f32.xlu0 %v1975
    %v1977 = vpop.xlane.xlu0 %1976
    %v1978 = vsel %vm410, %v1972, -inf
    %1979 = vmax.xlane.f32.xlu0 %v1978
    %v1980 = vpop.xlane.xlu0 %1979
    %v1981 = vsel %vm410, %v1973, -inf
    %1982 = vmax.xlane.f32.xlu0 %v1981
    %v1983 = vpop.xlane.xlu0 %1982
    %v1984 = vsel %vm410, %v1974, -inf
    %1985 = vmax.xlane.f32.xlu0 %v1984
    %v1986 = vpop.xlane.xlu0 %1985
    %v1987 = vsub.f32 %v1971, %v1977
    %v1988 = vsub.f32 %v1972, %v1980
    %v1989 = vsub.f32 %v1973, %v1983
    %v1990 = vsub.f32 %v1974, %v1986
    %v1991 = vmul.f32 %v1987, 1.442695
    %v1992 = vpow.pop %v1991
    %v1993 = vmul.f32 %v1988, 1.442695
    %v1994 = vpow.pop %v1993
    %v1995 = vmul.f32 %v1989, 1.442695
    %v1996 = vpow.pop %v1995
    %v1997 = vmul.f32 %v1990, 1.442695
    %v1998 = vpow.pop %v1997
    %v1999 = vsel %vm410, %v1992, 0.0
    %2000 = vadd.xlane.f32.xlu0 %v1999
    %v2001 = vpop.xlane.xlu0 %2000
    %v2002 = vsel %vm410, %v1994, 0.0
    %2003 = vadd.xlane.f32.xlu0 %v2002
    %v2004 = vpop.xlane.xlu0 %2003
    %v2005 = vsel %vm410, %v1996, 0.0
    %2006 = vadd.xlane.f32.xlu0 %v2005
    %v2007 = vpop.xlane.xlu0 %2006
    %v2008 = vsel %vm410, %v1998, 0.0
    %2009 = vadd.xlane.f32.xlu0 %v2008
    %v2010 = vpop.xlane.xlu0 %2009
    %v2011 = vrcp.pop %v2001
    %v2012 = vrcp.pop %v2004
    %v2013 = vrcp.pop %v2007
    %v2014 = vrcp.pop %v2010
    %v2015 = vmul.f32 %v1992, %v2011
    %v2016 = vmul.f32 %v1994, %v2012
    %v2017 = vmul.f32 %v1996, %v2013
    %v2018 = vmul.f32 %v1998, %v2014
    %v2020 = vsel %vm410, %v2015, 0
    %v2023 = vsel %vm410, %v2016, 0
    %2025 = vmatpush.msra.mxu0 0.0
    %2026 = vmatpush.msra.mxu0 0.0
    %2027 = vmatpush.msra.mxu0 0.0
    %2028 = vmatpush.msra.mxu0 0.0
    %2029 = vmatpush.msra.mxu0 0.0
    %2030 = vmatpush.msra.mxu0 0.0
    %2031 = vmatpush.msra.mxu0 0.0
    %2032 = vmatpush.msra.mxu0 0.0
    %2033 = vmatpush.msra.mxu0 0.0
    %2034 = vmatpush.msra.mxu0 0.0
    %2035 = vmatpush.msra.mxu0 0.0
    %2036 = vmatpush.msra.mxu0 0.0
    %2037 = vmatpush.msra.mxu0 0.0
    %2038 = vmatpush.msra.mxu0 0.0
    %2039 = vmatpush.msra.mxu0 %v1658
    %2040 = vmatpush.msra.mxu0 %v1656
    %2041 = vmatmul.f32.gmra.mxu0 %v2020
    %v2042 = vpop.f32.mrf.mxu0
    %v2043 = vadd.f32 0.0, %v2042
    %2044 = vmatmul.f32.gmra.mxu0 %v2023
    %v2045 = vpop.f32.mrf.mxu0
    %v2046 = vadd.f32 0.0, %v2045
    %2047 = vdwg.mxu0
    %v2049 = vsel %vm410, %v2017, 0
    %v2052 = vsel %vm410, %v2018, 0
    %2054 = vmatpush.msra.mxu0 0.0
    %2055 = vmatpush.msra.mxu0 0.0
    %2056 = vmatpush.msra.mxu0 0.0
    %2057 = vmatpush.msra.mxu0 0.0
    %2058 = vmatpush.msra.mxu0 0.0
    %2059 = vmatpush.msra.mxu0 0.0
    %2060 = vmatpush.msra.mxu0 0.0
    %2061 = vmatpush.msra.mxu0 0.0
    %2062 = vmatpush.msra.mxu0 0.0
    %2063 = vmatpush.msra.mxu0 0.0
    %2064 = vmatpush.msra.mxu0 0.0
    %2065 = vmatpush.msra.mxu0 0.0
    %2066 = vmatpush.msra.mxu0 0.0
    %2067 = vmatpush.msra.mxu0 0.0
    %2068 = vmatpush.msra.mxu0 %v1693
    %2069 = vmatpush.msra.mxu0 %v1691
    %2070 = vmatmul.f32.gmra.mxu0 %v2049
    %v2071 = vpop.f32.mrf.mxu0
    %v2072 = vadd.f32 0.0, %v2071
    %2073 = vmatmul.f32.gmra.mxu0 %v2052
    %v2074 = vpop.f32.mrf.mxu0
    %v2075 = vadd.f32 0.0, %v2074
    %2076 = vdwg.mxu0
    %v2077 = vmul.f32 %v161, %v2043
    %v2078 = vmul.f32 %v161, %v2046
    %v2079 = vmul.f32 %v161, %v2072
    %v2080 = vmul.f32 %v161, %v2075
    %v2081 = vadd.f32 %v1905, %v2077
    %v2082 = vadd.f32 %v1906, %v2078
    %v2083 = vadd.f32 %v1907, %v2079
    %v2084 = vadd.f32 %v1908, %v2080
    %v2085 = vmul.f32 %v1514, %v166
    %v2086 = vmul.f32 %v1517, %v166
    %v2087 = vmul.f32 %v1520, %v166
    %v2088 = vmul.f32 %v1523, %v166
    %v2090 = vsel %vm167, %v2085, 0
    %v2093 = vsel %vm167, %v2086, 0
    %2095 = vmatpush.xpose.msra.mxu0 0.0
    %2096 = vmatpush.xpose.msra.mxu0 0.0
    %2097 = vmatpush.xpose.msra.mxu0 0.0
    %2098 = vmatpush.xpose.msra.mxu0 0.0
    %2099 = vmatpush.xpose.msra.mxu0 0.0
    %2100 = vmatpush.xpose.msra.mxu0 0.0
    %2101 = vmatpush.xpose.msra.mxu0 0.0
    %2102 = vmatpush.xpose.msra.mxu0 0.0
    %2103 = vmatpush.xpose.msra.mxu0 0.0
    %2104 = vmatpush.xpose.msra.mxu0 0.0
    %2105 = vmatpush.xpose.msra.mxu0 0.0
    %2106 = vmatpush.xpose.msra.mxu0 0.0
    %2107 = vmatpush.xpose.msra.mxu0 0.0
    %2108 = vmatpush.xpose.msra.mxu0 0.0
    %2109 = vmatpush.xpose.msra.mxu0 %v1543
    %2110 = vmatpush.xpose.msra.mxu0 %v1541
    %2111 = vmatmul.f32.gmra.mxu0 %v2090
    %v2112 = vpop.f32.mrf.mxu0
    %v2113 = vadd.f32 0.0, %v2112
    %2114 = vmatmul.f32.gmra.mxu0 %v2093
    %v2115 = vpop.f32.mrf.mxu0
    %v2116 = vadd.f32 0.0, %v2115
    %2117 = vdwg.mxu0
    %v2119 = vsel %vm167, %v2087, 0
    %v2122 = vsel %vm167, %v2088, 0
    %2124 = vmatpush.xpose.msra.mxu0 0.0
    %2125 = vmatpush.xpose.msra.mxu0 0.0
    %2126 = vmatpush.xpose.msra.mxu0 0.0
    %2127 = vmatpush.xpose.msra.mxu0 0.0
    %2128 = vmatpush.xpose.msra.mxu0 0.0
    %2129 = vmatpush.xpose.msra.mxu0 0.0
    %2130 = vmatpush.xpose.msra.mxu0 0.0
    %2131 = vmatpush.xpose.msra.mxu0 0.0
    %2132 = vmatpush.xpose.msra.mxu0 0.0
    %2133 = vmatpush.xpose.msra.mxu0 0.0
    %2134 = vmatpush.xpose.msra.mxu0 0.0
    %2135 = vmatpush.xpose.msra.mxu0 0.0
    %2136 = vmatpush.xpose.msra.mxu0 0.0
    %2137 = vmatpush.xpose.msra.mxu0 0.0
    %2138 = vmatpush.xpose.msra.mxu0 %v1582
    %2139 = vmatpush.xpose.msra.mxu0 %v1580
    %2140 = vmatmul.f32.gmra.mxu0 %v2119
    %v2141 = vpop.f32.mrf.mxu0
    %v2142 = vadd.f32 0.0, %v2141
    %2143 = vmatmul.f32.gmra.mxu0 %v2122
    %v2144 = vpop.f32.mrf.mxu0
    %v2145 = vadd.f32 0.0, %v2144
    %2146 = vdwg.mxu0
    %v2147 = vmul.f32 %v2113, 0.35355338
    %v2148 = vmul.f32 %v2116, 0.35355338
    %v2149 = vmul.f32 %v2142, 0.35355338
    %v2150 = vmul.f32 %v2145, 0.35355338
    %v2151 = vsel %vm410, %v2147, -inf
    %2152 = vmax.xlane.f32.xlu0 %v2151
    %v2153 = vpop.xlane.xlu0 %2152
    %v2154 = vsel %vm410, %v2148, -inf
    %2155 = vmax.xlane.f32.xlu0 %v2154
    %v2156 = vpop.xlane.xlu0 %2155
    %v2157 = vsel %vm410, %v2149, -inf
    %2158 = vmax.xlane.f32.xlu0 %v2157
    %v2159 = vpop.xlane.xlu0 %2158
    %v2160 = vsel %vm410, %v2150, -inf
    %2161 = vmax.xlane.f32.xlu0 %v2160
    %v2162 = vpop.xlane.xlu0 %2161
    %v2163 = vsub.f32 %v2147, %v2153
    %v2164 = vsub.f32 %v2148, %v2156
    %v2165 = vsub.f32 %v2149, %v2159
    %v2166 = vsub.f32 %v2150, %v2162
    %v2167 = vmul.f32 %v2163, 1.442695
    %v2168 = vpow.pop %v2167
    %v2169 = vmul.f32 %v2164, 1.442695
    %v2170 = vpow.pop %v2169
    %v2171 = vmul.f32 %v2165, 1.442695
    %v2172 = vpow.pop %v2171
    %v2173 = vmul.f32 %v2166, 1.442695
    %v2174 = vpow.pop %v2173
    %v2175 = vsel %vm410, %v2168, 0.0
    %2176 = vadd.xlane.f32.xlu0 %v2175
    %v2177 = vpop.xlane.xlu0 %2176
    %v2178 = vsel %vm410, %v2170, 0.0
    %2179 = vadd.xlane.f32.xlu0 %v2178
    %v2180 = vpop.xlane.xlu0 %2179
    %v2181 = vsel %vm410, %v2172, 0.0
    %2182 = vadd.xlane.f32.xlu0 %v2181
    %v2183 = vpop.xlane.xlu0 %2182
    %v2184 = vsel %vm410, %v2174, 0.0
    %2185 = vadd.xlane.f32.xlu0 %v2184
    %v2186 = vpop.xlane.xlu0 %2185
    %v2187 = vrcp.pop %v2177
    %v2188 = vrcp.pop %v2180
    %v2189 = vrcp.pop %v2183
    %v2190 = vrcp.pop %v2186
    %v2191 = vmul.f32 %v2168, %v2187
    %v2192 = vmul.f32 %v2170, %v2188
    %v2193 = vmul.f32 %v2172, %v2189
    %v2194 = vmul.f32 %v2174, %v2190
    %v2196 = vsel %vm410, %v2191, 0
    %v2199 = vsel %vm410, %v2192, 0
    %2201 = vmatpush.msra.mxu0 0.0
    %2202 = vmatpush.msra.mxu0 0.0
    %2203 = vmatpush.msra.mxu0 0.0
    %2204 = vmatpush.msra.mxu0 0.0
    %2205 = vmatpush.msra.mxu0 0.0
    %2206 = vmatpush.msra.mxu0 0.0
    %2207 = vmatpush.msra.mxu0 0.0
    %2208 = vmatpush.msra.mxu0 0.0
    %2209 = vmatpush.msra.mxu0 0.0
    %2210 = vmatpush.msra.mxu0 0.0
    %2211 = vmatpush.msra.mxu0 0.0
    %2212 = vmatpush.msra.mxu0 0.0
    %2213 = vmatpush.msra.mxu0 0.0
    %2214 = vmatpush.msra.mxu0 0.0
    %2215 = vmatpush.msra.mxu0 %v1658
    %2216 = vmatpush.msra.mxu0 %v1656
    %2217 = vmatmul.f32.gmra.mxu0 %v2196
    %v2218 = vpop.f32.mrf.mxu0
    %v2219 = vadd.f32 0.0, %v2218
    %2220 = vmatmul.f32.gmra.mxu0 %v2199
    %v2221 = vpop.f32.mrf.mxu0
    %v2222 = vadd.f32 0.0, %v2221
    %2223 = vdwg.mxu0
    %v2225 = vsel %vm410, %v2193, 0
    %v2228 = vsel %vm410, %v2194, 0
    %2230 = vmatpush.msra.mxu0 0.0
    %2231 = vmatpush.msra.mxu0 0.0
    %2232 = vmatpush.msra.mxu0 0.0
    %2233 = vmatpush.msra.mxu0 0.0
    %2234 = vmatpush.msra.mxu0 0.0
    %2235 = vmatpush.msra.mxu0 0.0
    %2236 = vmatpush.msra.mxu0 0.0
    %2237 = vmatpush.msra.mxu0 0.0
    %2238 = vmatpush.msra.mxu0 0.0
    %2239 = vmatpush.msra.mxu0 0.0
    %2240 = vmatpush.msra.mxu0 0.0
    %2241 = vmatpush.msra.mxu0 0.0
    %2242 = vmatpush.msra.mxu0 0.0
    %2243 = vmatpush.msra.mxu0 0.0
    %2244 = vmatpush.msra.mxu0 %v1693
    %2245 = vmatpush.msra.mxu0 %v1691
    %2246 = vmatmul.f32.gmra.mxu0 %v2225
    %v2247 = vpop.f32.mrf.mxu0
    %v2248 = vadd.f32 0.0, %v2247
    %2249 = vmatmul.f32.gmra.mxu0 %v2228
    %v2250 = vpop.f32.mrf.mxu0
    %v2251 = vadd.f32 0.0, %v2250
    %2252 = vdwg.mxu0
    %v2253 = vmul.f32 %v166, %v2219
    %v2254 = vmul.f32 %v166, %v2222
    %v2255 = vmul.f32 %v166, %v2248
    %v2256 = vmul.f32 %v166, %v2251
    %v2257 = vadd.f32 %v2081, %v2253
    %v2258 = vadd.f32 %v2082, %v2254
    %v2259 = vadd.f32 %v2083, %v2255
    %v2260 = vadd.f32 %v2084, %v2256
    %s2261 = scalar_lea.vmem [#allocation10], 32
    %v2262 = vld [vmem:[%s2261] sm:$0xff]
    %v2263 = vld [vmem:[%s2261 + $0x8] sm:$0xff]
    %v2264 = vld [vmem:[%s2261 + $0x10] sm:$0xff]
    %v2265 = vld [vmem:[%s2261 + $0x18] sm:$0xff]
    %v2267 = vsel %vm167, %v2257, 0
    %v2270 = vsel %vm167, %v2258, 0
    %v2273 = vsel %vm167, %v2259, 0
    %v2276 = vsel %vm167, %v2260, 0
    %2278 = vmatpush.msra.mxu0 0.0
    %2279 = vmatpush.msra.mxu0 0.0
    %2280 = vmatpush.msra.mxu0 0.0
    %2281 = vmatpush.msra.mxu0 0.0
    %2282 = vmatpush.msra.mxu0 0.0
    %2283 = vmatpush.msra.mxu0 0.0
    %2284 = vmatpush.msra.mxu0 0.0
    %2285 = vmatpush.msra.mxu0 0.0
    %2286 = vmatpush.msra.mxu0 0.0
    %2287 = vmatpush.msra.mxu0 0.0
    %2288 = vmatpush.msra.mxu0 0.0
    %2289 = vmatpush.msra.mxu0 0.0
    %2290 = vmatpush.msra.mxu0 %v2265
    %2291 = vmatpush.msra.mxu0 %v2264
    %2292 = vmatpush.msra.mxu0 %v2263
    %2293 = vmatpush.msra.mxu0 %v2262
    %2294 = vmatmul.f32.gmra.mxu0 %v2267
    %v2295 = vpop.f32.mrf.mxu0
    %v2296 = vadd.f32 0.0, %v2295
    %2297 = vmatmul.f32.gmra.mxu0 %v2270
    %v2298 = vpop.f32.mrf.mxu0
    %v2299 = vadd.f32 0.0, %v2298
    %2300 = vmatmul.f32.gmra.mxu0 %v2273
    %v2301 = vpop.f32.mrf.mxu0
    %v2302 = vadd.f32 0.0, %v2301
    %2303 = vmatmul.f32.gmra.mxu0 %v2276
    %v2304 = vpop.f32.mrf.mxu0
    %v2305 = vadd.f32 0.0, %v2304
    %2306 = vdwg.mxu0
    %v2307 = vsel %vm167, %v2296, 0.0
    %2308 = vadd.xlane.f32.xlu0 %v2307
    %v2309 = vpop.xlane.xlu0 %2308
    %v2310 = vsel %vm167, %v2299, 0.0
    %2311 = vadd.xlane.f32.xlu0 %v2310
    %v2312 = vpop.xlane.xlu0 %2311
    %v2313 = vsel %vm167, %v2302, 0.0
    %2314 = vadd.xlane.f32.xlu0 %v2313
    %v2315 = vpop.xlane.xlu0 %2314
    %v2316 = vsel %vm167, %v2305, 0.0
    %2317 = vadd.xlane.f32.xlu0 %v2316
    %v2318 = vpop.xlane.xlu0 %2317
    %2319 = vmatpush.msra.mxu0 0.0
    %2320 = vmatpush.msra.mxu0 0.0
    %2321 = vmatpush.msra.mxu0 0.0
    %2322 = vmatpush.msra.mxu0 0.0
    %2323 = vmatpush.msra.mxu0 0.0
    %2324 = vmatpush.msra.mxu0 0.0
    %2325 = vmatpush.msra.mxu0 0.0
    %2326 = vmatpush.msra.mxu0 0.0
    %2327 = vmatpush.msra.mxu0 0.0
    %2328 = vmatpush.msra.mxu0 0.0
    %2329 = vmatpush.msra.mxu0 0.0
    %2330 = vmatpush.msra.mxu0 0.0
    %2331 = vmatpush.msra.mxu0 0.0
    %2332 = vmatpush.msra.mxu0 0.0
    %2333 = vmatpush.msra.mxu0 %v2312
    %2334 = vmatpush.msra.mxu0 %v2309
    %2335 = vmatmul.f32.gmra.mxu0 %v1119
    %v2336 = vpop.f32.mrf.mxu0
    %v2337 = vadd.f32 0.0, %v2336
    %2338 = vmatmul.f32.gmra.mxu0 %v1122
    %v2339 = vpop.f32.mrf.mxu0
    %v2340 = vadd.f32 0.0, %v2339
    %2341 = vdwg.mxu0
    %2342 = vmatpush.msra.mxu0 0.0
    %2343 = vmatpush.msra.mxu0 0.0
    %2344 = vmatpush.msra.mxu0 0.0
    %2345 = vmatpush.msra.mxu0 0.0
    %2346 = vmatpush.msra.mxu0 0.0
    %2347 = vmatpush.msra.mxu0 0.0
    %2348 = vmatpush.msra.mxu0 0.0
    %2349 = vmatpush.msra.mxu0 0.0
    %2350 = vmatpush.msra.mxu0 0.0
    %2351 = vmatpush.msra.mxu0 0.0
    %2352 = vmatpush.msra.mxu0 0.0
    %2353 = vmatpush.msra.mxu0 0.0
    %2354 = vmatpush.msra.mxu0 0.0
    %2355 = vmatpush.msra.mxu0 0.0
    %2356 = vmatpush.msra.mxu0 %v2318
    %2357 = vmatpush.msra.mxu0 %v2315
    %2358 = vmatmul.f32.gmra.mxu0 %v1119
    %v2359 = vpop.f32.mrf.mxu0
    %v2360 = vadd.f32 0.0, %v2359
    %2361 = vmatmul.f32.gmra.mxu0 %v1122
    %v2362 = vpop.f32.mrf.mxu0
    %v2363 = vadd.f32 0.0, %v2362
    %2364 = vdwg.mxu0
    %v2365 = vmul.f32 %v2337, %v2337
    %v2366 = vmul.f32 %v2340, %v2340
    %v2367 = vmul.f32 %v2360, %v2360
    %v2368 = vmul.f32 %v2363, %v2363
    %v2369 = vsub.f32 0.0, %v2365
    %v2370 = vsub.f32 0.0, %v2366
    %v2371 = vsub.f32 0.0, %v2367
    %v2372 = vsub.f32 0.0, %v2368
    %v2373 = vmul.f32 %v2369, 1.442695
    %v2374 = vpow.pop %v2373
    %v2375 = vmul.f32 %v2370, 1.442695
    %v2376 = vpow.pop %v2375
    %v2377 = vmul.f32 %v2371, 1.442695
    %v2378 = vpow.pop %v2377
    %v2379 = vmul.f32 %v2372, 1.442695
    %v2380 = vpow.pop %v2379
    %v2381 = vmul.f32 %v2374, 0.5
    %v2382 = vmul.f32 %v2376, 0.5
    %v2383 = vmul.f32 %v2378, 0.5
    %v2384 = vmul.f32 %v2380, 0.5
    %2386 = vset.pattern.permute.xlu0 0
    %2387 = vperm.xlu0 %2386, %v2381
    %v2388 = vpop.permute.xlu0 %2387
    %2391 = vset.pattern.permute.xlu0 0
    %2392 = vperm.xlu0 %2391, %v2382
    %v2393 = vpop.permute.xlu0 %2392
    %2396 = vset.pattern.permute.xlu0 0
    %2397 = vperm.xlu0 %2396, %v2383
    %v2398 = vpop.permute.xlu0 %2397
    %2401 = vset.pattern.permute.xlu0 0
    %2402 = vperm.xlu0 %2401, %v2384
    %v2403 = vpop.permute.xlu0 %2402
    %v2405 = vmul.f32 %v2388, %v2296
    %v2406 = vmul.f32 %v2393, %v2299
    %v2407 = vmul.f32 %v2398, %v2302
    %v2408 = vmul.f32 %v2403, %v2305
    %v2409 = vadd.f32 %v2405, %v1369
    %v2410 = vadd.f32 %v2406, %v1370
    %v2411 = vadd.f32 %v2407, %v1371
    %v2412 = vadd.f32 %v2408, %v1372
    %s2413 = scalar_lea.vmem [#allocation11], 32
    %v2414 = vld [vmem:[%s2413] sm:$0xff]
    %v2415 = vld [vmem:[%s2413 + $0x8] sm:$0xff]
    %v2416 = vld [vmem:[%s2413 + $0x10] sm:$0xff]
    %v2417 = vld [vmem:[%s2413 + $0x18] sm:$0xff]
    %s2418 = scalar_lea.vmem %s6, 1
    %v2419 = vld [vmem:[%s2418] sm:$0x1]
    %v2421 = vperm.slane %v2419, 0
    %v2424 = vsel %vm167, %v2409, 0
    %v2427 = vsel %vm167, %v2410, 0
    %v2430 = vsel %vm167, %v2411, 0
    %v2433 = vsel %vm167, %v2412, 0
    %2435 = vmatpush.msra.mxu0 0.0
    %2436 = vmatpush.msra.mxu0 0.0
    %2437 = vmatpush.msra.mxu0 0.0
    %2438 = vmatpush.msra.mxu0 0.0
    %2439 = vmatpush.msra.mxu0 0.0
    %2440 = vmatpush.msra.mxu0 0.0
    %2441 = vmatpush.msra.mxu0 0.0
    %2442 = vmatpush.msra.mxu0 0.0
    %2443 = vmatpush.msra.mxu0 0.0
    %2444 = vmatpush.msra.mxu0 0.0
    %2445 = vmatpush.msra.mxu0 0.0
    %2446 = vmatpush.msra.mxu0 0.0
    %2447 = vmatpush.msra.mxu0 %v2417
    %2448 = vmatpush.msra.mxu0 %v2416
    %2449 = vmatpush.msra.mxu0 %v2415
    %2450 = vmatpush.msra.mxu0 %v2414
    %2451 = vmatmul.f32.gmra.mxu0 %v2424
    %v2452 = vpop.f32.mrf.mxu0
    %v2453 = vadd.f32 %v2421, %v2452
    %2454 = vmatmul.f32.gmra.mxu0 %v2427
    %v2455 = vpop.f32.mrf.mxu0
    %v2456 = vadd.f32 %v2421, %v2455
    %2457 = vmatmul.f32.gmra.mxu0 %v2430
    %v2458 = vpop.f32.mrf.mxu0
    %v2459 = vadd.f32 %v2421, %v2458
    %2460 = vmatmul.f32.gmra.mxu0 %v2433
    %v2461 = vpop.f32.mrf.mxu0
    %v2462 = vadd.f32 %v2421, %v2461
    %2463 = vdwg.mxu0
    %v2464 = vsel %vm167, %v2453, 0.0
    %2465 = vadd.xlane.f32.xlu0 %v2464
    %v2466 = vpop.xlane.xlu0 %2465
    %v2467 = vsel %vm167, %v2456, 0.0
    %2468 = vadd.xlane.f32.xlu0 %v2467
    %v2469 = vpop.xlane.xlu0 %2468
    %v2470 = vsel %vm167, %v2459, 0.0
    %2471 = vadd.xlane.f32.xlu0 %v2470
    %v2472 = vpop.xlane.xlu0 %2471
    %v2473 = vsel %vm167, %v2462, 0.0
    %2474 = vadd.xlane.f32.xlu0 %v2473
    %v2475 = vpop.xlane.xlu0 %2474
    %2476 = vmatpush.msra.mxu0 0.0
    %2477 = vmatpush.msra.mxu0 0.0
    %2478 = vmatpush.msra.mxu0 0.0
    %2479 = vmatpush.msra.mxu0 0.0
    %2480 = vmatpush.msra.mxu0 0.0
    %2481 = vmatpush.msra.mxu0 0.0
    %2482 = vmatpush.msra.mxu0 0.0
    %2483 = vmatpush.msra.mxu0 0.0
    %2484 = vmatpush.msra.mxu0 0.0
    %2485 = vmatpush.msra.mxu0 0.0
    %2486 = vmatpush.msra.mxu0 0.0
    %2487 = vmatpush.msra.mxu0 0.0
    %2488 = vmatpush.msra.mxu0 0.0
    %2489 = vmatpush.msra.mxu0 0.0
    %2490 = vmatpush.msra.mxu0 %v2469
    %2491 = vmatpush.msra.mxu0 %v2466
    %2492 = vmatmul.f32.gmra.mxu0 %v1119
    %v2493 = vpop.f32.mrf.mxu0
    %v2494 = vadd.f32 0.0, %v2493
    %2495 = vmatmul.f32.gmra.mxu0 %v1122
    %v2496 = vpop.f32.mrf.mxu0
    %v2497 = vadd.f32 0.0, %v2496
    %2498 = vdwg.mxu0
    %2499 = vmatpush.msra.mxu0 0.0
    %2500 = vmatpush.msra.mxu0 0.0
    %2501 = vmatpush.msra.mxu0 0.0
    %2502 = vmatpush.msra.mxu0 0.0
    %2503 = vmatpush.msra.mxu0 0.0
    %2504 = vmatpush.msra.mxu0 0.0
    %2505 = vmatpush.msra.mxu0 0.0
    %2506 = vmatpush.msra.mxu0 0.0
    %2507 = vmatpush.msra.mxu0 0.0
    %2508 = vmatpush.msra.mxu0 0.0
    %2509 = vmatpush.msra.mxu0 0.0
    %2510 = vmatpush.msra.mxu0 0.0
    %2511 = vmatpush.msra.mxu0 0.0
    %2512 = vmatpush.msra.mxu0 0.0
    %2513 = vmatpush.msra.mxu0 %v2475
    %2514 = vmatpush.msra.mxu0 %v2472
    %2515 = vmatmul.f32.gmra.mxu0 %v1119
    %v2516 = vpop.f32.mrf.mxu0
    %v2517 = vadd.f32 0.0, %v2516
    %2518 = vmatmul.f32.gmra.mxu0 %v1122
    %v2519 = vpop.f32.mrf.mxu0
    %v2520 = vadd.f32 0.0, %v2519
    %2521 = vdwg.mxu0
    %v2522 = vmul.f32 %v2494, %v2494
    %v2523 = vmul.f32 %v2497, %v2497
    %v2524 = vmul.f32 %v2517, %v2517
    %v2525 = vmul.f32 %v2520, %v2520
    %v2526 = vsub.f32 0.0, %v2522
    %v2527 = vsub.f32 0.0, %v2523
    %v2528 = vsub.f32 0.0, %v2524
    %v2529 = vsub.f32 0.0, %v2525
    %v2530 = vmul.f32 %v2526, 1.442695
    %v2531 = vpow.pop %v2530
    %v2532 = vmul.f32 %v2527, 1.442695
    %v2533 = vpow.pop %v2532
    %v2534 = vmul.f32 %v2528, 1.442695
    %v2535 = vpow.pop %v2534
    %v2536 = vmul.f32 %v2529, 1.442695
    %v2537 = vpow.pop %v2536
    %v2538 = vmul.f32 %v2531, 0.5
    %v2539 = vmul.f32 %v2533, 0.5
    %v2540 = vmul.f32 %v2535, 0.5
    %v2541 = vmul.f32 %v2537, 0.5
    %2543 = vset.pattern.permute.xlu0 0
    %2544 = vperm.xlu0 %2543, %v2538
    %v2545 = vpop.permute.xlu0 %2544
    %2548 = vset.pattern.permute.xlu0 0
    %2549 = vperm.xlu0 %2548, %v2539
    %v2550 = vpop.permute.xlu0 %2549
    %2553 = vset.pattern.permute.xlu0 0
    %2554 = vperm.xlu0 %2553, %v2540
    %v2555 = vpop.permute.xlu0 %2554
    %2558 = vset.pattern.permute.xlu0 0
    %2559 = vperm.xlu0 %2558, %v2541
    %v2560 = vpop.permute.xlu0 %2559
    %v2562 = vmul.f32 %v2545, %v2453
    %v2563 = vmul.f32 %v2550, %v2456
    %v2564 = vmul.f32 %v2555, %v2459
    %v2565 = vmul.f32 %v2560, %v2462
    %v2566 = vadd.f32 %v2562, %v2409
    %v2567 = vadd.f32 %v2563, %v2410
    %v2568 = vadd.f32 %v2564, %v2411
    %v2569 = vadd.f32 %v2565, %v2412
    %2570 = vst.msk [vmem:[#allocation14] sm:$0xff] %vm167, %v2566
    %2571 = vst.msk [vmem:[#allocation14 + $0x8] sm:$0xff] %vm167, %v2567
    %2572 = vst.msk [vmem:[#allocation14 + $0x10] sm:$0xff] %vm167, %v2568
    %2573 = vst.msk [vmem:[#allocation14 + $0x18] sm:$0xff] %vm167, %v2569
    // Predicated region
    $region62: #{tpu_custom_call.1} parent=1 // pred_check
      _
    $region63: #{tpu_custom_call.1} parent=1 // pred_check_branch
      %2575 = sbr.rel (0) target = $region65
    $region64: #{tpu_custom_call.1} parent=1 // pred_region
      %2577 = vsyncadd [#allocation4], 0
      %s2578 = sshll.u32 [#allocation14], 4
      %s2579 = int_to_ptr.vmem [resolvable:$true] %s2578
      %s2580 = sshll.u32 %s8, 4
      %s2581 = int_to_ptr.hbm [resolvable:$true] %s2580
      %2586 = dma.vmem_to_hbm [thread:$0]  %s2579, 512, %s2581, [#allocation4], 128, 128, 8
    $region65: #{tpu_custom_call.1} parent=1 // pred_fallthru
      _
    // Predicated region
    $region66: #{tpu_custom_call.1} parent=1 // pred_check
      _
    $region67: #{tpu_custom_call.1} parent=1 // pred_check_branch
      %2588 = sbr.rel (0) target = $region69
    $region68: #{tpu_custom_call.1} parent=1 // pred_region
      %2590 = dma.done [#allocation4], 512
    $region69: #{tpu_custom_call.1} parent=1 // pred_fallthru
      _
    %2591 = vsyncpa [#allocation3], 1
    %2592 = vsyncpa [#allocation6], 1
    %2593 = vsyncpa [#allocation9], 1
    %2594 = vsyncpa [#allocation12], 1
    %2595 = vsyncpa [#allocation4], 1

</llo_original>
